<compile_context>
chip_gen: v7x
topology: tpu7x:2x2x1
jax: 0.10.0
libtpu: 0.0.40
codegen_flags: <defaults>
</compile_context>

<pallas_src>
import functools

import jax
import jax.numpy as jnp
import numpy as np
from jax.experimental import pallas as pl
from jax.experimental.pallas import tpu as pltpu


# ----------------------------- kernels --------------------------------------


def _unpool3d_dot_kernel(x_ref, m_ref, o_ref):
    """x_ref: (1, CB, T_in); m_ref: (T_in, T_out) 0/1 block-diag; o_ref: (1, CB, T_out).

    One MXU dot realizes zero-fill + strided scatter as a single lane-dense
    block store.  The 0/1 matrix has at most one nonzero per column and the
    contraction runs at full-f32 precision, so the result is bit-exact.
    """
    x = x_ref[0].astype(jnp.float32)                       # (CB, T_in)
    out = jnp.dot(x, m_ref[...],
                  precision=jax.lax.Precision.HIGHEST,
                  preferred_element_type=jnp.float32)       # (CB, T_out)
    o_ref[0] = out.astype(o_ref.dtype)                      # unmasked block store


def _unpool3d_mac_kernel(x_ref, m_ref, o_ref, *, t_in):
    """Fallback for tiny / unaligned contraction dims: exact VPU MAC (t_in is small)."""
    x = x_ref[0].astype(jnp.float32)                        # (CB, T_in)
    m = m_ref[...]                                          # (T_in, T_out)
    acc = x[:, 0:1] * m[0:1, :]
    for i in range(1, t_in):                                # static, small
        acc = acc + x[:, i:i + 1] * m[i:i + 1, :]
    o_ref[0] = acc.astype(o_ref.dtype)


# ----------------------------- helpers ---------------------------------------


def _slice_len(start, stop, step, dim):
    stop = min(stop, dim)
    start = min(start, dim)
    if stop <= start:
        return 0
    return -(-(stop - start) // step)


def _round_up(x, m):
    return -(-x // m) * m


def _padded_block_bytes(rows, cols, itemsize):
    """Padded VMEM bytes of a 2-D (rows, cols) tile: sublane x lane tiling."""
    sub = 8 if itemsize >= 4 else 8 * (4 // itemsize)   # f32->8, bf16->16, i8->32
    return _round_up(max(rows, 1), sub) * _round_up(max(cols, 1), 128) * itemsize


def _pick_group(c, s_in, s_out, max_matrix_bytes=4 << 20):
    """Channel fold G (a divisor of C), folded into the trailing axis with free
    row-major reshapes so the output block's last dim is a large multiple of 128
    (unmasked lane-dense stores) and, when possible, the MXU contraction dim
    (G*s_in) is a multiple of 128.  The smallest qualifying G is preferred to
    keep C//G large (sublane density + more parallel grid steps)."""
    divs = [g for g in range(1, c + 1)
            if c % g == 0 and (g * s_in) * (g * s_out) * 4 <= max_matrix_bytes]
    preds = (
        lambda g: (g * s_in) % 128 == 0,      # clean MXU contraction (=> t_out % 128 == 0)
        lambda g: (g * s_out) % 128 == 0,     # lane-dense output stores
        lambda g: g * s_out >= 128,           # at least one full lane row
    )
    for pred in preds:
        for g in divs:                        # ascending -> smallest qualifying
            if pred(g):
                return g
    return divs[-1] if divs else 1


def _pick_c_block(cg, n_batch, t_in, t_out, in_isize, out_isize, mat_bytes,
                  limit_bytes=20 << 20, min_steps=4):
    """Largest channel-group block whose padded, double-buffered VMEM footprint
    (input + output blocks + scatter matrix) stays under limit_bytes, preferring
    blocks small enough that the grid has >= min_steps steps (keeps both v7x
    TensorCores busy and overlaps the HBM writeback)."""
    cands = [d for d in range(1, cg + 1)
             if cg % d == 0 and (d % 8 == 0 or d == cg)]

    def footprint(d):
        return (2 * _padded_block_bytes(d, t_in, in_isize)
                + 2 * _padded_block_bytes(d, t_out, out_isize)
                + 2 * mat_bytes)

    fitting = [d for d in cands if footprint(d) <= limit_bytes]
    if not fitting:
        return min(cands)          # correctness first; vmem limit raised upstream
    for d in sorted(fitting, reverse=True):
        if n_batch * (cg // d) >= min_steps:
            return d
    return max(fitting)


# ----------------------------- wrapper ----------------------------------------


def pool3d(x, kernel_size, padding, out_dtype=jnp.float32):
    """Pallas implementation of Pool3D.forward.  x: (N, C, D, H, W)."""
    N, C, D, H, W = x.shape
    K, p = int(kernel_size), int(padding)

    if p < 0:
        raise ValueError("padding must be non-negative")
    # Mirror the PyTorch slice-assignment shape requirement exactly: the strided
    # slice [p : p+dim+1 : K] over the (K*dim)-sized output axis must contain
    # exactly `dim` indices, otherwise the torch assignment itself would fail.
    for dim in (D, H, W):
        n_idx = _slice_len(p, p + dim + 1, K, dim * K)
        if n_idx != dim:
            raise ValueError(
                f"Pool3D slice assignment invalid for dim={dim}, K={K}, p={p} "
                f"(slice has {n_idx} indices, expected {dim})")
    # The check above implies every scattered index p + K*t is in range (p < K).

    out_dtype = jnp.dtype(out_dtype)
    if K == 1:
        # Validation forces p == 0 here: the scatter is the identity.
        return x.astype(out_dtype)

    OD, OH, OW = K * D, K * H, K * W
    s_in = D * H * W
    s_out = OD * OH * OW
    in_dtype = jnp.dtype(x.dtype)

    # Channel fold -> lane-dense trailing axes (free row-major reshapes).
    G = _pick_group(C, s_in, s_out)
    CG = C // G
    t_in, t_out = G * s_in, G * s_out

    # Constant block-diagonal 0/1 scatter matrix: folded input position
    # (g, i, j, l) -> folded flat output position of (g, p+K*i, p+K*j, p+K*l).
    m_np = np.zeros((t_in, t_out), np.float32)
    for g in range(G):
        for i in range(D):
            for j in range(H):
                for l in range(W):
                    src = g * s_in + (i * H + j) * W + l
                    dst = g * s_out + ((p + K * i) * OH + (p + K * j)) * OW + (p + K * l)
                    m_np[src, dst] = 1.0
    scatter_m = jnp.asarray(m_np)
    mat_bytes = _padded_block_bytes(t_in, t_out, 4)

    cb = _pick_c_block(CG, N, t_in, t_out, in_dtype.itemsize, out_dtype.itemsize,
                       mat_bytes)
    need = (2 * _padded_block_bytes(cb, t_in, in_dtype.itemsize)
            + 2 * _padded_block_bytes(cb, t_out, out_dtype.itemsize)
            + 2 * mat_bytes)
    vmem_limit = int(min(max(32 << 20, need + (4 << 20)), 96 << 20))

    grid = (N, CG // cb)
    x_flat = x.reshape(N, CG, t_in)   # free row-major (NCDHW-preserving) reshape

    if t_in % 128 == 0:
        kernel = _unpool3d_dot_kernel                      # MXU path
    else:
        kernel = functools.partial(_unpool3d_mac_kernel, t_in=t_in)  # tiny exact MAC

    out_flat = pl.pallas_call(
        kernel,
        out_shape=jax.ShapeDtypeStruct((N, CG, t_out), out_dtype),
        grid_spec=pltpu.PrefetchScalarGridSpec(
            num_scalar_prefetch=0,
            grid=grid,
            in_specs=[
                pl.BlockSpec((1, cb, t_in), lambda n, c: (n, c, 0)),
                pl.BlockSpec((t_in, t_out), lambda n, c: (0, 0)),
            ],
            out_specs=pl.BlockSpec((1, cb, t_out), lambda n, c: (n, c, 0)),
        ),
        compiler_params=pltpu.CompilerParams(
            # Both axes independent -> v7x's two TensorCores split the writeback.
            dimension_semantics=("parallel", "parallel"),
            vmem_limit_bytes=vmem_limit),
    )(x_flat, scatter_m)

    # Free (row-major) reshape back to the PyTorch NCDHW 5-D output shape.
    return out_flat.reshape(N, C, OD, OH, OW)


# ----------------------------- test -------------------------------------------


if __name__ == "__main__":
    def reference(x, K, p):
        N, C, D, H, W = x.shape
        ref = jnp.zeros((N, C, D * K, H * K, W * K), jnp.float32)
        return ref.at[:, :, p:p + D + 1:K, p:p + H + 1:K, p:p + W + 1:K].set(x)

    # NOTE: the PyTorch slice assignment is only shape-valid for tiny spatial
    # extents (<= 2 when kernel_size == 2), so spatial dims are 2 here.
    cases = [
        dict(N=2, C=64, D=2, H=2, W=2, K=2, p=1),   # G=16 fold -> (128)x(1024) MXU dot
        dict(N=1, C=24, D=2, H=2, W=2, K=2, p=0),   # non-pow2 channels -> MAC fallback
        dict(N=2, C=1,  D=2, H=2, W=2, K=2, p=1),   # no fold possible -> MAC fallback
    ]

    key = jax.random.PRNGKey(0)
    for cfg in cases:
        key, sub = jax.random.split(key)
        x = jax.random.normal(
            sub, (cfg["N"], cfg["C"], cfg["D"], cfg["H"], cfg["W"]),
            dtype=jnp.float32)
        fn = jax.jit(functools.partial(pool3d, kernel_size=cfg["K"],
                                       padding=cfg["p"]))
        out = jax.block_until_ready(fn(x))
        ref = reference(x, cfg["K"], cfg["p"])
        np.testing.assert_allclose(np.asarray(out), np.asarray(ref),
                                   atol=0, rtol=0)

    print("KERNEL_OK")
</pallas_src>

<mosaic_0001>
module attributes {stable_mosaic.version = 11 : i64} {
  func.func @_unpool3d_dot_kernel(%arg0: i32, %arg1: i32, %arg2: memref<1x4x128xf32, #tpu.memory_space<vmem>>, %arg3: memref<128x1024xf32, #tpu.memory_space<vmem>>, %arg4: memref<1x4x1024xf32, #tpu.memory_space<vmem>>) attributes {dimension_semantics = [#tpu.dimension_semantics<parallel>, #tpu.dimension_semantics<parallel>], iteration_bounds = array<i64: 2, 1>, scalar_prefetch = 0 : i64, scratch_operands = 0 : i64, tpu.core_type = #tpu.core_type<tc>, window_params = [{transform_indices = @transform_0, window_bounds = array<i64: 1, 4, 128>}, {pipeline_mode = #tpu.pipeline_mode<synchronous>, transform_indices = @transform_1, window_bounds = array<i64: 128, 1024>}, {transform_indices = @transform_2, window_bounds = array<i64: 1, 4, 1024>}]} {
    %c0 = arith.constant 0 : index
    %c0_0 = arith.constant 0 : index
    %c0_1 = arith.constant 0 : index
    %0 = vector.load %arg2[%c0, %c0_0, %c0_1] : memref<1x4x128xf32, #tpu.memory_space<vmem>>, vector<1x4x128xf32>
    %1 = vector.shape_cast %0 : vector<1x4x128xf32> to vector<4x128xf32>
    %c0_2 = arith.constant 0 : index
    %c0_3 = arith.constant 0 : index
    %2 = vector.load %arg3[%c0_2, %c0_3] : memref<128x1024xf32, #tpu.memory_space<vmem>>, vector<128x1024xf32>
    %cst = arith.constant dense<0.000000e+00> : vector<4x1024xf32>
    %3 = tpu.matmul %1, %2, %cst {dimension_numbers = #tpu.dot_dimension_numbers<[1], [0], [0], [1], [0, 0, 1, 1], [], []>, precision = #tpu.contract_precision<fp32>} : vector<4x128xf32>, vector<128x1024xf32>, vector<4x1024xf32> -> vector<4x1024xf32>
    %c0_4 = arith.constant 0 : index
    %c0_5 = arith.constant 0 : index
    %c0_6 = arith.constant 0 : index
    %4 = vector.load %arg4[%c0_4, %c0_5, %c0_6] : memref<1x4x1024xf32, #tpu.memory_space<vmem>>, vector<1x4x1024xf32>
    %5 = vector.shape_cast %4 : vector<1x4x1024xf32> to vector<4x1024xf32>
    %6 = vector.shape_cast %3 : vector<4x1024xf32> to vector<1x4x1024xf32>
    tpu.vector_store %arg4[%c0_4, %c0_5, %c0_6], %6 {strides = array<i32>} : memref<1x4x1024xf32, #tpu.memory_space<vmem>>, vector<1x4x1024xf32>,
    return
  }
  func.func @transform_0(%arg0: i32, %arg1: i32) -> (i32, i32, i32) {
    %c0_i32 = arith.constant 0 : i32
    %c0_i32_0 = arith.constant 0 : i32
    return %arg0, %arg1, %c0_i32 : i32, i32, i32
  }
  func.func @transform_1(%arg0: i32, %arg1: i32) -> (i32, i32) {
    %c0_i32 = arith.constant 0 : i32
    %c0_i32_0 = arith.constant 0 : i32
    %c0_i32_1 = arith.constant 0 : i32
    return %c0_i32, %c0_i32_0 : i32, i32
  }
  func.func @transform_2(%arg0: i32, %arg1: i32) -> (i32, i32, i32) {
    %c0_i32 = arith.constant 0 : i32
    %c0_i32_0 = arith.constant 0 : i32
    return %arg0, %arg1, %c0_i32 : i32, i32, i32
  }
}

</mosaic_0001>

<llo_original>
// kernel: pool3d.1
$region0: #{pool3d.1}
  #allocation0 [shape = 'u32[]', space=smem, size = 0x4, offset = 0x4, fixed_abs, tag = 'smem constant byte address 0x4 - core index']
  #allocation1 [shape = 'u32[144,128]{1,0:T(1,128)}', space=vmem, size = 0x12000, scoped, tag = 'internal scratch']
  %s0 = inlined_call_operand.vmem [shape: f32[2,4,128], index: 0, kind: input, shape index: {}]
  %s1 = inlined_call_operand.vmem [shape: f32[128,1024], index: 1, kind: input, shape index: {}]
  %s2 = inlined_call_operand.vmem [shape: f32[2,4,1024], index: 2, kind: output, shape index: {}]
  %s3 = sld [smem:[#allocation0]]
  $region41: #{pool3d.1} parent=0
    _
  %s5 = ssub.s32 1, %s3
  %s6 = scalar_select 0, %s5, %s3
  loop: start=0, step=1, limit=4
  $region2: #{pool3d.1} parent=0 // loop_pre_header
    _
  $region3: #{pool3d.1} parent=0 // loop_header
    %s8 = sphi 0, %s12
    %p9 = scmp.ge.s32.totalorder %s8, 4
    %s15 = sphi 0, %s27
    %s16 = sphi 0, %s23
    %s17 = sphi 0, %s15
    %s18 = sphi 0, %s16
    %s19 = sphi 0, %s17
    %s20 = sphi 0, %s18
    %s32 = sphi 0, %s34
    %s35 = sphi 0, %s32
    %s36 = sphi 0, %s35
    %s52 = sphi 0, %s36
    %s56 = sphi 0, %s56
    %s58 = sphi 0, %s56
    %s59 = sphi 0, %s58
    %s73 = sphi 0, %s59
    %s81 = sphi 0, %s83
    %s84 = sphi 0, %s81
    %s85 = sphi 0, %s84
    %s101 = sphi 0, %s85
  $region4: #{pool3d.1} parent=0 // loop_header_branch
    %11 = sbr.rel (%p9) target = $region8
  $region5: #{pool3d.1} parent=0 // loop_body
    %s13 = ssub.s32 %s8, 1
    %s14 = ssub.s32 %s8, 2
    %s21 = sadd.s32 1, %s16
    %p22 = scmp.ge.s32.totalorder %s21, 1
    %s23 = scalar_select %p22, 0, %s21
    %s24 = sadd.s32 1, %s15
    %s25 = scalar_select %p22, %s24, %s15
    %p26 = scmp.ge.s32.totalorder %s25, 2
    %s27 = scalar_select %p26, 0, %s25
    %s28 = ssub.s32 %s15, %s27
    %s29 = ssub.s32 %s16, %s23
    %s30 = sor.u32 %s28, %s29
    %p31 = scmp.eq.s32.totalorder %s30, 0
    %s33 = sadd.s32 %s32, 1
    %s34 = scalar_select %p31, %s32, %s33
    %p37 = pneg %p31
    %p38 = scmp.eq.s32.totalorder %s8, 1
    %p39 = por %p37, %p38
    %p40 = scmp.ne.s32.totalorder %s32, %s35
    %p41 = scmp.eq.s32.totalorder %s8, 0
    %p42 = por %p40, %p41
    %p43 = scmp.ne.s32.totalorder %s32, %s35
    %p44 = scmp.eq.s32.totalorder %s13, 1
    %p45 = por %p43, %p44
    %p46 = scmp.ne.s32.totalorder %s35, %s36
    %p47 = scmp.eq.s32.totalorder %s13, 0
    %p48 = por %p46, %p47
    %p49 = scmp.ne.s32.totalorder %s35, %s36
    %p50 = scmp.eq.s32.totalorder %s14, 1
    %p51 = por %p49, %p50
    %p53 = scmp.ne.s32.totalorder %s36, %s52
    %p54 = scmp.eq.s32.totalorder %s14, 0
    %p55 = por %p53, %p54
    %s57 = sadd.s32 %s56, 1
    %p60 = scmp.eq.s32.totalorder %s8, 1
    %p61 = scmp.ne.s32.totalorder %s56, %s58
    %p62 = scmp.eq.s32.totalorder %s8, 0
    %p63 = por %p61, %p62
    %p64 = scmp.ne.s32.totalorder %s56, %s58
    %p65 = scmp.eq.s32.totalorder %s13, 1
    %p66 = por %p64, %p65
    %p67 = scmp.ne.s32.totalorder %s58, %s59
    %p68 = scmp.eq.s32.totalorder %s13, 0
    %p69 = por %p67, %p68
    %p70 = scmp.ne.s32.totalorder %s58, %s59
    %p71 = scmp.eq.s32.totalorder %s14, 1
    %p72 = por %p70, %p71
    %p74 = scmp.ne.s32.totalorder %s59, %s73
    %p75 = scmp.eq.s32.totalorder %s14, 0
    %p76 = por %p74, %p75
    %s77 = ssub.s32 %s15, %s27
    %s78 = ssub.s32 %s16, %s23
    %s79 = sor.u32 %s77, %s78
    %p80 = scmp.eq.s32.totalorder %s79, 0
    %s82 = sadd.s32 %s81, 1
    %s83 = scalar_select %p80, %s81, %s82
    %p86 = pneg %p80
    %p87 = scmp.eq.s32.totalorder %s8, 1
    %p88 = por %p86, %p87
    %p89 = scmp.ne.s32.totalorder %s81, %s84
    %p90 = scmp.eq.s32.totalorder %s8, 0
    %p91 = por %p89, %p90
    %p92 = scmp.ne.s32.totalorder %s81, %s84
    %p93 = scmp.eq.s32.totalorder %s13, 1
    %p94 = por %p92, %p93
    %p95 = scmp.ne.s32.totalorder %s84, %s85
    %p96 = scmp.eq.s32.totalorder %s13, 0
    %p97 = por %p95, %p96
    %p98 = scmp.ne.s32.totalorder %s84, %s85
    %p99 = scmp.eq.s32.totalorder %s14, 1
    %p100 = por %p98, %p99
    %p102 = scmp.ne.s32.totalorder %s85, %s101
    %p103 = scmp.eq.s32.totalorder %s14, 0
    %p104 = por %p102, %p103
    %p105 = scmp.le.s32.totalorder 1, %s8
    %p106 = scmp.lt.s32.totalorder %s8, 3
    %p107 = pnand %p105, %p106
    %p108 = pneg %p107
    // Predicated region
    $region9: #{pool3d.1} parent=5 // pred_check
      _
    $region10: #{pool3d.1} parent=5 // pred_check_branch
      %110 = sbr.rel (%p107) target = $region12
    $region11: #{pool3d.1} parent=5 // pred_region
      %s111 = ssub.s32 %s8, 1
      // Predicated region
      $region13: #{pool3d.1} parent=11 // pred_check
        %p112 = pneg %p69
      $region14: #{pool3d.1} parent=11 // pred_check_branch
        %114 = sbr.rel (%p112) target = $region16
      $region15: #{pool3d.1} parent=11 // pred_region
        _
      $region16: #{pool3d.1} parent=11 // pred_fallthru
        _
    $region12: #{pool3d.1} parent=5 // pred_fallthru
      _
    %p115 = scmp.lt.s32.totalorder %s8, 2
    // Predicated region
    $region17: #{pool3d.1} parent=5 // pred_check
      %p116 = pneg %p115
    $region18: #{pool3d.1} parent=5 // pred_check_branch
      %118 = sbr.rel (%p116) target = $region20
    $region19: #{pool3d.1} parent=5 // pred_region
      // Predicated region
      $region21: #{pool3d.1} parent=19 // pred_check
        %p119 = pneg %p42
      $region22: #{pool3d.1} parent=19 // pred_check_branch
        %121 = sbr.rel (%p119) target = $region24
      $region23: #{pool3d.1} parent=19 // pred_region
        %p122 = scmp.lt.s32.totalorder %s15, 1
        %s123 = scalar_select %p122, %s15, 1
        %p124 = scmp.lt.s32.totalorder %s16, 0
        %s125 = scalar_select %p124, %s16, 0
        %s126 = sadd.s32 %s125, %s123
        %s127 = smul.addr %s126, 4
        %s128 = scalar_lea.vmem %s0, %s127
      $region24: #{pool3d.1} parent=19 // pred_fallthru
        _
    $region20: #{pool3d.1} parent=5 // pred_fallthru
      _
    %p129 = scmp.le.s32.totalorder 1, %s8
    %p130 = scmp.lt.s32.totalorder %s8, 3
    %p131 = pnand %p129, %p130
    %p132 = pneg %p131
    // Predicated region
    $region25: #{pool3d.1} parent=5 // pred_check
      _
    $region26: #{pool3d.1} parent=5 // pred_check_branch
      %134 = sbr.rel (%p131) target = $region28
    $region27: #{pool3d.1} parent=5 // pred_region
      %s135 = ssub.s32 %s8, 1
      %p136 = scmp.lt.s32.totalorder %s17, 1
      %s137 = scalar_select %p136, %s17, 1
      %p138 = scmp.lt.s32.totalorder %s18, 0
      %s139 = scalar_select %p138, %s18, 0
      %s140 = sadd.s32 %s139, %s137
      %s141 = smul.addr %s140, 4
      %s142 = scalar_lea.vmem %s0, %s141
      %p143 = pneg %p48
      %p144 = pneg %p45
      %p145 = pneg %p69
      %p146 = pneg %p66
      %p147 = pneg %p97
      %p148 = pneg %p94
      %p149 = scmp.lt.s32.totalorder %s17, 1
      %s150 = scalar_select %p149, %s17, 1
      %p151 = scmp.lt.s32.totalorder %s18, 0
      %s152 = scalar_select %p151, %s18, 0
      %s153 = smul.addr %s152, 8
      %s154 = smul.addr %s150, 8
      %s155 = sadd.s32 %s153, %s154
      %s156 = smul.addr %s155, 4
      %s157 = scalar_lea.vmem %s2, %s156
      %p158 = scmp.lt.s32.totalorder %s17, 1
      %s159 = scalar_select %p158, %s17, 1
      %p160 = scmp.lt.s32.totalorder %s18, 0
      %s161 = scalar_select %p160, %s18, 0
      %s162 = sadd.s32 %s161, %s159
      %s163 = smul.addr %s162, 4
      %s164 = scalar_lea.vmem %s0, %s163
      %p165 = scmp.lt.s32.totalorder %s17, 1
      %s166 = scalar_select %p165, %s17, 1
      %p167 = scmp.lt.s32.totalorder %s18, 0
      %s168 = scalar_select %p167, %s18, 0
      %s169 = smul.addr %s168, 8
      %s170 = smul.addr %s166, 8
      %s171 = sadd.s32 %s169, %s170
      %s172 = smul.addr %s171, 4
      %s173 = scalar_lea.vmem %s2, %s172
      %v174 = vld [vmem:[%s164] sm:$0xf]
      %v175 = vld [vmem:[%s1] sm:$0xff]
      %v176 = vld [vmem:[%s1 + $0x8] sm:$0xff]
      %v177 = vld [vmem:[%s1 + $0x10] sm:$0xff]
      %v178 = vld [vmem:[%s1 + $0x18] sm:$0xff]
      %v179 = vld [vmem:[%s1 + $0x20] sm:$0xff]
      %v180 = vld [vmem:[%s1 + $0x28] sm:$0xff]
      %v181 = vld [vmem:[%s1 + $0x30] sm:$0xff]
      %v182 = vld [vmem:[%s1 + $0x38] sm:$0xff]
      %v183 = vld [vmem:[%s1 + $0x40] sm:$0xff]
      %v184 = vld [vmem:[%s1 + $0x48] sm:$0xff]
      %v185 = vld [vmem:[%s1 + $0x50] sm:$0xff]
      %v186 = vld [vmem:[%s1 + $0x58] sm:$0xff]
      %v187 = vld [vmem:[%s1 + $0x60] sm:$0xff]
      %v188 = vld [vmem:[%s1 + $0x68] sm:$0xff]
      %v189 = vld [vmem:[%s1 + $0x70] sm:$0xff]
      %v190 = vld [vmem:[%s1 + $0x78] sm:$0xff]
      %v191 = vld [vmem:[%s1 + $0x80] sm:$0xff]
      %v192 = vld [vmem:[%s1 + $0x88] sm:$0xff]
      %v193 = vld [vmem:[%s1 + $0x90] sm:$0xff]
      %v194 = vld [vmem:[%s1 + $0x98] sm:$0xff]
      %v195 = vld [vmem:[%s1 + $0xa0] sm:$0xff]
      %v196 = vld [vmem:[%s1 + $0xa8] sm:$0xff]
      %v197 = vld [vmem:[%s1 + $0xb0] sm:$0xff]
      %v198 = vld [vmem:[%s1 + $0xb8] sm:$0xff]
      %v199 = vld [vmem:[%s1 + $0xc0] sm:$0xff]
      %v200 = vld [vmem:[%s1 + $0xc8] sm:$0xff]
      %v201 = vld [vmem:[%s1 + $0xd0] sm:$0xff]
      %v202 = vld [vmem:[%s1 + $0xd8] sm:$0xff]
      %v203 = vld [vmem:[%s1 + $0xe0] sm:$0xff]
      %v204 = vld [vmem:[%s1 + $0xe8] sm:$0xff]
      %v205 = vld [vmem:[%s1 + $0xf0] sm:$0xff]
      %v206 = vld [vmem:[%s1 + $0xf8] sm:$0xff]
      %v207 = vld [vmem:[%s1 + $0x100] sm:$0xff]
      %v208 = vld [vmem:[%s1 + $0x108] sm:$0xff]
      %v209 = vld [vmem:[%s1 + $0x110] sm:$0xff]
      %v210 = vld [vmem:[%s1 + $0x118] sm:$0xff]
      %v211 = vld [vmem:[%s1 + $0x120] sm:$0xff]
      %v212 = vld [vmem:[%s1 + $0x128] sm:$0xff]
      %v213 = vld [vmem:[%s1 + $0x130] sm:$0xff]
      %v214 = vld [vmem:[%s1 + $0x138] sm:$0xff]
      %v215 = vld [vmem:[%s1 + $0x140] sm:$0xff]
      %v216 = vld [vmem:[%s1 + $0x148] sm:$0xff]
      %v217 = vld [vmem:[%s1 + $0x150] sm:$0xff]
      %v218 = vld [vmem:[%s1 + $0x158] sm:$0xff]
      %v219 = vld [vmem:[%s1 + $0x160] sm:$0xff]
      %v220 = vld [vmem:[%s1 + $0x168] sm:$0xff]
      %v221 = vld [vmem:[%s1 + $0x170] sm:$0xff]
      %v222 = vld [vmem:[%s1 + $0x178] sm:$0xff]
      %v223 = vld [vmem:[%s1 + $0x180] sm:$0xff]
      %v224 = vld [vmem:[%s1 + $0x188] sm:$0xff]
      %v225 = vld [vmem:[%s1 + $0x190] sm:$0xff]
      %v226 = vld [vmem:[%s1 + $0x198] sm:$0xff]
      %v227 = vld [vmem:[%s1 + $0x1a0] sm:$0xff]
      %v228 = vld [vmem:[%s1 + $0x1a8] sm:$0xff]
      %v229 = vld [vmem:[%s1 + $0x1b0] sm:$0xff]
      %v230 = vld [vmem:[%s1 + $0x1b8] sm:$0xff]
      %v231 = vld [vmem:[%s1 + $0x1c0] sm:$0xff]
      %v232 = vld [vmem:[%s1 + $0x1c8] sm:$0xff]
      %v233 = vld [vmem:[%s1 + $0x1d0] sm:$0xff]
      %v234 = vld [vmem:[%s1 + $0x1d8] sm:$0xff]
      %v235 = vld [vmem:[%s1 + $0x1e0] sm:$0xff]
      %v236 = vld [vmem:[%s1 + $0x1e8] sm:$0xff]
      %v237 = vld [vmem:[%s1 + $0x1f0] sm:$0xff]
      %v238 = vld [vmem:[%s1 + $0x1f8] sm:$0xff]
      %v239 = vld [vmem:[%s1 + $0x200] sm:$0xff]
      %v240 = vld [vmem:[%s1 + $0x208] sm:$0xff]
      %v241 = vld [vmem:[%s1 + $0x210] sm:$0xff]
      %v242 = vld [vmem:[%s1 + $0x218] sm:$0xff]
      %v243 = vld [vmem:[%s1 + $0x220] sm:$0xff]
      %v244 = vld [vmem:[%s1 + $0x228] sm:$0xff]
      %v245 = vld [vmem:[%s1 + $0x230] sm:$0xff]
      %v246 = vld [vmem:[%s1 + $0x238] sm:$0xff]
      %v247 = vld [vmem:[%s1 + $0x240] sm:$0xff]
      %v248 = vld [vmem:[%s1 + $0x248] sm:$0xff]
      %v249 = vld [vmem:[%s1 + $0x250] sm:$0xff]
      %v250 = vld [vmem:[%s1 + $0x258] sm:$0xff]
      %v251 = vld [vmem:[%s1 + $0x260] sm:$0xff]
      %v252 = vld [vmem:[%s1 + $0x268] sm:$0xff]
      %v253 = vld [vmem:[%s1 + $0x270] sm:$0xff]
      %v254 = vld [vmem:[%s1 + $0x278] sm:$0xff]
      %v255 = vld [vmem:[%s1 + $0x280] sm:$0xff]
      %v256 = vld [vmem:[%s1 + $0x288] sm:$0xff]
      %v257 = vld [vmem:[%s1 + $0x290] sm:$0xff]
      %v258 = vld [vmem:[%s1 + $0x298] sm:$0xff]
      %v259 = vld [vmem:[%s1 + $0x2a0] sm:$0xff]
      %v260 = vld [vmem:[%s1 + $0x2a8] sm:$0xff]
      %v261 = vld [vmem:[%s1 + $0x2b0] sm:$0xff]
      %v262 = vld [vmem:[%s1 + $0x2b8] sm:$0xff]
      %v263 = vld [vmem:[%s1 + $0x2c0] sm:$0xff]
      %v264 = vld [vmem:[%s1 + $0x2c8] sm:$0xff]
      %v265 = vld [vmem:[%s1 + $0x2d0] sm:$0xff]
      %v266 = vld [vmem:[%s1 + $0x2d8] sm:$0xff]
      %v267 = vld [vmem:[%s1 + $0x2e0] sm:$0xff]
      %v268 = vld [vmem:[%s1 + $0x2e8] sm:$0xff]
      %v269 = vld [vmem:[%s1 + $0x2f0] sm:$0xff]
      %v270 = vld [vmem:[%s1 + $0x2f8] sm:$0xff]
      %v271 = vld [vmem:[%s1 + $0x300] sm:$0xff]
      %v272 = vld [vmem:[%s1 + $0x308] sm:$0xff]
      %v273 = vld [vmem:[%s1 + $0x310] sm:$0xff]
      %v274 = vld [vmem:[%s1 + $0x318] sm:$0xff]
      %v275 = vld [vmem:[%s1 + $0x320] sm:$0xff]
      %v276 = vld [vmem:[%s1 + $0x328] sm:$0xff]
      %v277 = vld [vmem:[%s1 + $0x330] sm:$0xff]
      %v278 = vld [vmem:[%s1 + $0x338] sm:$0xff]
      %v279 = vld [vmem:[%s1 + $0x340] sm:$0xff]
      %v280 = vld [vmem:[%s1 + $0x348] sm:$0xff]
      %v281 = vld [vmem:[%s1 + $0x350] sm:$0xff]
      %v282 = vld [vmem:[%s1 + $0x358] sm:$0xff]
      %v283 = vld [vmem:[%s1 + $0x360] sm:$0xff]
      %v284 = vld [vmem:[%s1 + $0x368] sm:$0xff]
      %v285 = vld [vmem:[%s1 + $0x370] sm:$0xff]
      %v286 = vld [vmem:[%s1 + $0x378] sm:$0xff]
      %v287 = vld [vmem:[%s1 + $0x380] sm:$0xff]
      %v288 = vld [vmem:[%s1 + $0x388] sm:$0xff]
      %v289 = vld [vmem:[%s1 + $0x390] sm:$0xff]
      %v290 = vld [vmem:[%s1 + $0x398] sm:$0xff]
      %v291 = vld [vmem:[%s1 + $0x3a0] sm:$0xff]
      %v292 = vld [vmem:[%s1 + $0x3a8] sm:$0xff]
      %v293 = vld [vmem:[%s1 + $0x3b0] sm:$0xff]
      %v294 = vld [vmem:[%s1 + $0x3b8] sm:$0xff]
      %v295 = vld [vmem:[%s1 + $0x3c0] sm:$0xff]
      %v296 = vld [vmem:[%s1 + $0x3c8] sm:$0xff]
      %v297 = vld [vmem:[%s1 + $0x3d0] sm:$0xff]
      %v298 = vld [vmem:[%s1 + $0x3d8] sm:$0xff]
      %v299 = vld [vmem:[%s1 + $0x3e0] sm:$0xff]
      %v300 = vld [vmem:[%s1 + $0x3e8] sm:$0xff]
      %v301 = vld [vmem:[%s1 + $0x3f0] sm:$0xff]
      %v302 = vld [vmem:[%s1 + $0x3f8] sm:$0xff]
      %v303 = vand.u32 %v176, 4294901760
      %304 = vmatprep.subr.mxu0 %v303
      %v305 = vand.u32 %v175, 4294901760
      %306 = vmatpush1.msra.mxu0 %v305
      %v307 = vand.u32 %v184, 4294901760
      %308 = vmatprep.subr.mxu0 %v307
      %v309 = vand.u32 %v183, 4294901760
      %310 = vmatpush1.msra.mxu0 %v309
      %v311 = vand.u32 %v192, 4294901760
      %312 = vmatprep.subr.mxu0 %v311
      %v313 = vand.u32 %v191, 4294901760
      %314 = vmatpush1.msra.mxu0 %v313
      %v315 = vand.u32 %v200, 4294901760
      %316 = vmatprep.subr.mxu0 %v315
      %v317 = vand.u32 %v199, 4294901760
      %318 = vmatpush1.msra.mxu0 %v317
      %v319 = vand.u32 %v208, 4294901760
      %320 = vmatprep.subr.mxu0 %v319
      %v321 = vand.u32 %v207, 4294901760
      %322 = vmatpush1.msra.mxu0 %v321
      %v323 = vand.u32 %v216, 4294901760
      %324 = vmatprep.subr.mxu0 %v323
      %v325 = vand.u32 %v215, 4294901760
      %326 = vmatpush1.msra.mxu0 %v325
      %v327 = vand.u32 %v224, 4294901760
      %328 = vmatprep.subr.mxu0 %v327
      %v329 = vand.u32 %v223, 4294901760
      %330 = vmatpush1.msra.mxu0 %v329
      %v331 = vand.u32 %v232, 4294901760
      %332 = vmatprep.subr.mxu0 %v331
      %v333 = vand.u32 %v231, 4294901760
      %334 = vmatpush1.msra.mxu0 %v333
      %v335 = vand.u32 %v240, 4294901760
      %336 = vmatprep.subr.mxu0 %v335
      %v337 = vand.u32 %v239, 4294901760
      %338 = vmatpush1.msra.mxu0 %v337
      %v339 = vand.u32 %v248, 4294901760
      %340 = vmatprep.subr.mxu0 %v339
      %v341 = vand.u32 %v247, 4294901760
      %342 = vmatpush1.msra.mxu0 %v341
      %v343 = vand.u32 %v256, 4294901760
      %344 = vmatprep.subr.mxu0 %v343
      %v345 = vand.u32 %v255, 4294901760
      %346 = vmatpush1.msra.mxu0 %v345
      %v347 = vand.u32 %v264, 4294901760
      %348 = vmatprep.subr.mxu0 %v347
      %v349 = vand.u32 %v263, 4294901760
      %350 = vmatpush1.msra.mxu0 %v349
      %v351 = vand.u32 %v272, 4294901760
      %352 = vmatprep.subr.mxu0 %v351
      %v353 = vand.u32 %v271, 4294901760
      %354 = vmatpush1.msra.mxu0 %v353
      %v355 = vand.u32 %v280, 4294901760
      %356 = vmatprep.subr.mxu0 %v355
      %v357 = vand.u32 %v279, 4294901760
      %358 = vmatpush1.msra.mxu0 %v357
      %v359 = vand.u32 %v288, 4294901760
      %360 = vmatprep.subr.mxu0 %v359
      %v361 = vand.u32 %v287, 4294901760
      %362 = vmatpush1.msra.mxu0 %v361
      %v363 = vand.u32 %v296, 4294901760
      %364 = vmatprep.subr.mxu0 %v363
      %v365 = vand.u32 %v295, 4294901760
      %366 = vmatpush1.msra.mxu0 %v365
      %367 = vmatprep.subr.mxu0 0.0
      %368 = vmatpush1.msra.mxu0 0.0
      %369 = vmatprep.subr.mxu0 0.0
      %370 = vmatpush1.msra.mxu0 0.0
      %371 = vmatprep.subr.mxu0 0.0
      %372 = vmatpush1.msra.mxu0 0.0
      %373 = vmatprep.subr.mxu0 0.0
      %374 = vmatpush1.msra.mxu0 0.0
      %375 = vmatprep.subr.mxu0 0.0
      %376 = vmatpush1.msra.mxu0 0.0
      %377 = vmatprep.subr.mxu0 0.0
      %378 = vmatpush1.msra.mxu0 0.0
      %379 = vmatprep.subr.mxu0 0.0
      %380 = vmatpush1.msra.mxu0 0.0
      %381 = vmatprep.subr.mxu0 0.0
      %382 = vmatpush1.msra.mxu0 0.0
      %383 = vmatprep.subr.mxu0 0.0
      %384 = vmatpush1.msra.mxu0 0.0
      %385 = vmatprep.subr.mxu0 0.0
      %386 = vmatpush1.msra.mxu0 0.0
      %387 = vmatprep.subr.mxu0 0.0
      %388 = vmatpush1.msra.mxu0 0.0
      %389 = vmatprep.subr.mxu0 0.0
      %390 = vmatpush1.msra.mxu0 0.0
      %391 = vmatprep.subr.mxu0 0.0
      %392 = vmatpush1.msra.mxu0 0.0
      %393 = vmatprep.subr.mxu0 0.0
      %394 = vmatpush1.msra.mxu0 0.0
      %395 = vmatprep.subr.mxu0 0.0
      %396 = vmatpush1.msra.mxu0 0.0
      %397 = vmatprep.subr.mxu0 0.0
      %398 = vmatpush1.msra.mxu0 0.0
      %399 = vmatprep.mubr.f32.mxu0 0.0
      %v400 = vand.u32 %v174, 4294901760
      %v401 = vsub.f32 %v174, %v400
      %v402 = vand.u32 %v401, 4294901760
      %v403 = vsub.f32 %v401, %v402
      %v404 = vand.u32 %v403, 4294901760
      %405 = vmatmul.mubr.f32.gmra.mrb[0].mxu0 %v404
      %v406 = vpop.f32.mrb[0].mxu0
      %v407 = vadd.f32 0.0, %v406
      %v408 = vpop.f32.mrb[0].mxu0
      %v409 = vadd.f32 0.0, %v408
      %410 = vdwg.mxu0
      %v411 = vand.u32 %v176, 4294901760
      %v412 = vsub.f32 %v176, %v411
      %v413 = vand.u32 %v412, 4294901760
      %v414 = vsub.f32 %v412, %v413
      %v415 = vand.u32 %v414, 4294901760
      %416 = vmatprep.subr.mxu0 %v415
      %v417 = vand.u32 %v175, 4294901760
      %v418 = vsub.f32 %v175, %v417
      %v419 = vand.u32 %v418, 4294901760
      %v420 = vsub.f32 %v418, %v419
      %v421 = vand.u32 %v420, 4294901760
      %422 = vmatpush1.msra.mxu0 %v421
      %v423 = vand.u32 %v184, 4294901760
      %v424 = vsub.f32 %v184, %v423
      %v425 = vand.u32 %v424, 4294901760
      %v426 = vsub.f32 %v424, %v425
      %v427 = vand.u32 %v426, 4294901760
      %428 = vmatprep.subr.mxu0 %v427
      %v429 = vand.u32 %v183, 4294901760
      %v430 = vsub.f32 %v183, %v429
      %v431 = vand.u32 %v430, 4294901760
      %v432 = vsub.f32 %v430, %v431
      %v433 = vand.u32 %v432, 4294901760
      %434 = vmatpush1.msra.mxu0 %v433
      %v435 = vand.u32 %v192, 4294901760
      %v436 = vsub.f32 %v192, %v435
      %v437 = vand.u32 %v436, 4294901760
      %v438 = vsub.f32 %v436, %v437
      %v439 = vand.u32 %v438, 4294901760
      %440 = vmatprep.subr.mxu0 %v439
      %v441 = vand.u32 %v191, 4294901760
      %v442 = vsub.f32 %v191, %v441
      %v443 = vand.u32 %v442, 4294901760
      %v444 = vsub.f32 %v442, %v443
      %v445 = vand.u32 %v444, 4294901760
      %446 = vmatpush1.msra.mxu0 %v445
      %v447 = vand.u32 %v200, 4294901760
      %v448 = vsub.f32 %v200, %v447
      %v449 = vand.u32 %v448, 4294901760
      %v450 = vsub.f32 %v448, %v449
      %v451 = vand.u32 %v450, 4294901760
      %452 = vmatprep.subr.mxu0 %v451
      %v453 = vand.u32 %v199, 4294901760
      %v454 = vsub.f32 %v199, %v453
      %v455 = vand.u32 %v454, 4294901760
      %v456 = vsub.f32 %v454, %v455
      %v457 = vand.u32 %v456, 4294901760
      %458 = vmatpush1.msra.mxu0 %v457
      %v459 = vand.u32 %v208, 4294901760
      %v460 = vsub.f32 %v208, %v459
      %v461 = vand.u32 %v460, 4294901760
      %v462 = vsub.f32 %v460, %v461
      %v463 = vand.u32 %v462, 4294901760
      %464 = vmatprep.subr.mxu0 %v463
      %v465 = vand.u32 %v207, 4294901760
      %v466 = vsub.f32 %v207, %v465
      %v467 = vand.u32 %v466, 4294901760
      %v468 = vsub.f32 %v466, %v467
      %v469 = vand.u32 %v468, 4294901760
      %470 = vmatpush1.msra.mxu0 %v469
      %v471 = vand.u32 %v216, 4294901760
      %v472 = vsub.f32 %v216, %v471
      %v473 = vand.u32 %v472, 4294901760
      %v474 = vsub.f32 %v472, %v473
      %v475 = vand.u32 %v474, 4294901760
      %476 = vmatprep.subr.mxu0 %v475
      %v477 = vand.u32 %v215, 4294901760
      %v478 = vsub.f32 %v215, %v477
      %v479 = vand.u32 %v478, 4294901760
      %v480 = vsub.f32 %v478, %v479
      %v481 = vand.u32 %v480, 4294901760
      %482 = vmatpush1.msra.mxu0 %v481
      %v483 = vand.u32 %v224, 4294901760
      %v484 = vsub.f32 %v224, %v483
      %v485 = vand.u32 %v484, 4294901760
      %v486 = vsub.f32 %v484, %v485
      %v487 = vand.u32 %v486, 4294901760
      %488 = vmatprep.subr.mxu0 %v487
      %v489 = vand.u32 %v223, 4294901760
      %v490 = vsub.f32 %v223, %v489
      %v491 = vand.u32 %v490, 4294901760
      %v492 = vsub.f32 %v490, %v491
      %v493 = vand.u32 %v492, 4294901760
      %494 = vmatpush1.msra.mxu0 %v493
      %v495 = vand.u32 %v232, 4294901760
      %v496 = vsub.f32 %v232, %v495
      %v497 = vand.u32 %v496, 4294901760
      %v498 = vsub.f32 %v496, %v497
      %v499 = vand.u32 %v498, 4294901760
      %500 = vmatprep.subr.mxu0 %v499
      %v501 = vand.u32 %v231, 4294901760
      %v502 = vsub.f32 %v231, %v501
      %v503 = vand.u32 %v502, 4294901760
      %v504 = vsub.f32 %v502, %v503
      %v505 = vand.u32 %v504, 4294901760
      %506 = vmatpush1.msra.mxu0 %v505
      %v507 = vand.u32 %v240, 4294901760
      %v508 = vsub.f32 %v240, %v507
      %v509 = vand.u32 %v508, 4294901760
      %v510 = vsub.f32 %v508, %v509
      %v511 = vand.u32 %v510, 4294901760
      %512 = vmatprep.subr.mxu0 %v511
      %v513 = vand.u32 %v239, 4294901760
      %v514 = vsub.f32 %v239, %v513
      %v515 = vand.u32 %v514, 4294901760
      %v516 = vsub.f32 %v514, %v515
      %v517 = vand.u32 %v516, 4294901760
      %518 = vmatpush1.msra.mxu0 %v517
      %v519 = vand.u32 %v248, 4294901760
      %v520 = vsub.f32 %v248, %v519
      %v521 = vand.u32 %v520, 4294901760
      %v522 = vsub.f32 %v520, %v521
      %v523 = vand.u32 %v522, 4294901760
      %524 = vmatprep.subr.mxu0 %v523
      %v525 = vand.u32 %v247, 4294901760
      %v526 = vsub.f32 %v247, %v525
      %v527 = vand.u32 %v526, 4294901760
      %v528 = vsub.f32 %v526, %v527
      %v529 = vand.u32 %v528, 4294901760
      %530 = vmatpush1.msra.mxu0 %v529
      %v531 = vand.u32 %v256, 4294901760
      %v532 = vsub.f32 %v256, %v531
      %v533 = vand.u32 %v532, 4294901760
      %v534 = vsub.f32 %v532, %v533
      %v535 = vand.u32 %v534, 4294901760
      %536 = vmatprep.subr.mxu0 %v535
      %v537 = vand.u32 %v255, 4294901760
      %v538 = vsub.f32 %v255, %v537
      %v539 = vand.u32 %v538, 4294901760
      %v540 = vsub.f32 %v538, %v539
      %v541 = vand.u32 %v540, 4294901760
      %542 = vmatpush1.msra.mxu0 %v541
      %v543 = vand.u32 %v264, 4294901760
      %v544 = vsub.f32 %v264, %v543
      %v545 = vand.u32 %v544, 4294901760
      %v546 = vsub.f32 %v544, %v545
      %v547 = vand.u32 %v546, 4294901760
      %548 = vmatprep.subr.mxu0 %v547
      %v549 = vand.u32 %v263, 4294901760
      %v550 = vsub.f32 %v263, %v549
      %v551 = vand.u32 %v550, 4294901760
      %v552 = vsub.f32 %v550, %v551
      %v553 = vand.u32 %v552, 4294901760
      %554 = vmatpush1.msra.mxu0 %v553
      %v555 = vand.u32 %v272, 4294901760
      %v556 = vsub.f32 %v272, %v555
      %v557 = vand.u32 %v556, 4294901760
      %v558 = vsub.f32 %v556, %v557
      %v559 = vand.u32 %v558, 4294901760
      %560 = vmatprep.subr.mxu0 %v559
      %v561 = vand.u32 %v271, 4294901760
      %v562 = vsub.f32 %v271, %v561
      %v563 = vand.u32 %v562, 4294901760
      %v564 = vsub.f32 %v562, %v563
      %v565 = vand.u32 %v564, 4294901760
      %566 = vmatpush1.msra.mxu0 %v565
      %v567 = vand.u32 %v280, 4294901760
      %v568 = vsub.f32 %v280, %v567
      %v569 = vand.u32 %v568, 4294901760
      %v570 = vsub.f32 %v568, %v569
      %v571 = vand.u32 %v570, 4294901760
      %572 = vmatprep.subr.mxu0 %v571
      %v573 = vand.u32 %v279, 4294901760
      %v574 = vsub.f32 %v279, %v573
      %v575 = vand.u32 %v574, 4294901760
      %v576 = vsub.f32 %v574, %v575
      %v577 = vand.u32 %v576, 4294901760
      %578 = vmatpush1.msra.mxu0 %v577
      %v579 = vand.u32 %v288, 4294901760
      %v580 = vsub.f32 %v288, %v579
      %v581 = vand.u32 %v580, 4294901760
      %v582 = vsub.f32 %v580, %v581
      %v583 = vand.u32 %v582, 4294901760
      %584 = vmatprep.subr.mxu0 %v583
      %v585 = vand.u32 %v287, 4294901760
      %v586 = vsub.f32 %v287, %v585
      %v587 = vand.u32 %v586, 4294901760
      %v588 = vsub.f32 %v586, %v587
      %v589 = vand.u32 %v588, 4294901760
      %590 = vmatpush1.msra.mxu0 %v589
      %v591 = vand.u32 %v296, 4294901760
      %v592 = vsub.f32 %v296, %v591
      %v593 = vand.u32 %v592, 4294901760
      %v594 = vsub.f32 %v592, %v593
      %v595 = vand.u32 %v594, 4294901760
      %596 = vmatprep.subr.mxu0 %v595
      %v597 = vand.u32 %v295, 4294901760
      %v598 = vsub.f32 %v295, %v597
      %v599 = vand.u32 %v598, 4294901760
      %v600 = vsub.f32 %v598, %v599
      %v601 = vand.u32 %v600, 4294901760
      %602 = vmatpush1.msra.mxu0 %v601
      %603 = vmatprep.subr.mxu0 0.0
      %604 = vmatpush1.msra.mxu0 0.0
      %605 = vmatprep.subr.mxu0 0.0
      %606 = vmatpush1.msra.mxu0 0.0
      %607 = vmatprep.subr.mxu0 0.0
      %608 = vmatpush1.msra.mxu0 0.0
      %609 = vmatprep.subr.mxu0 0.0
      %610 = vmatpush1.msra.mxu0 0.0
      %611 = vmatprep.subr.mxu0 0.0
      %612 = vmatpush1.msra.mxu0 0.0
      %613 = vmatprep.subr.mxu0 0.0
      %614 = vmatpush1.msra.mxu0 0.0
      %615 = vmatprep.subr.mxu0 0.0
      %616 = vmatpush1.msra.mxu0 0.0
      %617 = vmatprep.subr.mxu0 0.0
      %618 = vmatpush1.msra.mxu0 0.0
      %619 = vmatprep.subr.mxu0 0.0
      %620 = vmatpush1.msra.mxu0 0.0
      %621 = vmatprep.subr.mxu0 0.0
      %622 = vmatpush1.msra.mxu0 0.0
      %623 = vmatprep.subr.mxu0 0.0
      %624 = vmatpush1.msra.mxu0 0.0
      %625 = vmatprep.subr.mxu0 0.0
      %626 = vmatpush1.msra.mxu0 0.0
      %627 = vmatprep.subr.mxu0 0.0
      %628 = vmatpush1.msra.mxu0 0.0
      %629 = vmatprep.subr.mxu0 0.0
      %630 = vmatpush1.msra.mxu0 0.0
      %631 = vmatprep.subr.mxu0 0.0
      %632 = vmatpush1.msra.mxu0 0.0
      %633 = vmatprep.subr.mxu0 0.0
      %634 = vmatpush1.msra.mxu0 0.0
      %635 = vmatprep.mubr.f32.mxu0 0.0
      %v636 = vand.u32 %v174, 4294901760
      %637 = vmatmul.mubr.f32.gmra.mrb[0].mxu0 %v636
      %v638 = vpop.f32.mrb[0].mxu0
      %v639 = vadd.f32 %v407, %v638
      %v640 = vpop.f32.mrb[0].mxu0
      %v641 = vadd.f32 %v409, %v640
      %642 = vdwg.mxu0
      %v643 = vand.u32 %v176, 4294901760
      %v644 = vsub.f32 %v176, %v643
      %645 = vmatprep.subr.mxu0 %v644
      %v646 = vand.u32 %v175, 4294901760
      %v647 = vsub.f32 %v175, %v646
      %648 = vmatpush1.msra.mxu0 %v647
      %v649 = vand.u32 %v184, 4294901760
      %v650 = vsub.f32 %v184, %v649
      %651 = vmatprep.subr.mxu0 %v650
      %v652 = vand.u32 %v183, 4294901760
      %v653 = vsub.f32 %v183, %v652
      %654 = vmatpush1.msra.mxu0 %v653
      %v655 = vand.u32 %v192, 4294901760
      %v656 = vsub.f32 %v192, %v655
      %657 = vmatprep.subr.mxu0 %v656
      %v658 = vand.u32 %v191, 4294901760
      %v659 = vsub.f32 %v191, %v658
      %660 = vmatpush1.msra.mxu0 %v659
      %v661 = vand.u32 %v200, 4294901760
      %v662 = vsub.f32 %v200, %v661
      %663 = vmatprep.subr.mxu0 %v662
      %v664 = vand.u32 %v199, 4294901760
      %v665 = vsub.f32 %v199, %v664
      %666 = vmatpush1.msra.mxu0 %v665
      %v667 = vand.u32 %v208, 4294901760
      %v668 = vsub.f32 %v208, %v667
      %669 = vmatprep.subr.mxu0 %v668
      %v670 = vand.u32 %v207, 4294901760
      %v671 = vsub.f32 %v207, %v670
      %672 = vmatpush1.msra.mxu0 %v671
      %v673 = vand.u32 %v216, 4294901760
      %v674 = vsub.f32 %v216, %v673
      %675 = vmatprep.subr.mxu0 %v674
      %v676 = vand.u32 %v215, 4294901760
      %v677 = vsub.f32 %v215, %v676
      %678 = vmatpush1.msra.mxu0 %v677
      %v679 = vand.u32 %v224, 4294901760
      %v680 = vsub.f32 %v224, %v679
      %681 = vmatprep.subr.mxu0 %v680
      %v682 = vand.u32 %v223, 4294901760
      %v683 = vsub.f32 %v223, %v682
      %684 = vmatpush1.msra.mxu0 %v683
      %v685 = vand.u32 %v232, 4294901760
      %v686 = vsub.f32 %v232, %v685
      %687 = vmatprep.subr.mxu0 %v686
      %v688 = vand.u32 %v231, 4294901760
      %v689 = vsub.f32 %v231, %v688
      %690 = vmatpush1.msra.mxu0 %v689
      %v691 = vand.u32 %v240, 4294901760
      %v692 = vsub.f32 %v240, %v691
      %693 = vmatprep.subr.mxu0 %v692
      %v694 = vand.u32 %v239, 4294901760
      %v695 = vsub.f32 %v239, %v694
      %696 = vmatpush1.msra.mxu0 %v695
      %v697 = vand.u32 %v248, 4294901760
      %v698 = vsub.f32 %v248, %v697
      %699 = vmatprep.subr.mxu0 %v698
      %v700 = vand.u32 %v247, 4294901760
      %v701 = vsub.f32 %v247, %v700
      %702 = vmatpush1.msra.mxu0 %v701
      %v703 = vand.u32 %v256, 4294901760
      %v704 = vsub.f32 %v256, %v703
      %705 = vmatprep.subr.mxu0 %v704
      %v706 = vand.u32 %v255, 4294901760
      %v707 = vsub.f32 %v255, %v706
      %708 = vmatpush1.msra.mxu0 %v707
      %v709 = vand.u32 %v264, 4294901760
      %v710 = vsub.f32 %v264, %v709
      %711 = vmatprep.subr.mxu0 %v710
      %v712 = vand.u32 %v263, 4294901760
      %v713 = vsub.f32 %v263, %v712
      %714 = vmatpush1.msra.mxu0 %v713
      %v715 = vand.u32 %v272, 4294901760
      %v716 = vsub.f32 %v272, %v715
      %717 = vmatprep.subr.mxu0 %v716
      %v718 = vand.u32 %v271, 4294901760
      %v719 = vsub.f32 %v271, %v718
      %720 = vmatpush1.msra.mxu0 %v719
      %v721 = vand.u32 %v280, 4294901760
      %v722 = vsub.f32 %v280, %v721
      %723 = vmatprep.subr.mxu0 %v722
      %v724 = vand.u32 %v279, 4294901760
      %v725 = vsub.f32 %v279, %v724
      %726 = vmatpush1.msra.mxu0 %v725
      %v727 = vand.u32 %v288, 4294901760
      %v728 = vsub.f32 %v288, %v727
      %729 = vmatprep.subr.mxu0 %v728
      %v730 = vand.u32 %v287, 4294901760
      %v731 = vsub.f32 %v287, %v730
      %732 = vmatpush1.msra.mxu0 %v731
      %v733 = vand.u32 %v296, 4294901760
      %v734 = vsub.f32 %v296, %v733
      %735 = vmatprep.subr.mxu0 %v734
      %v736 = vand.u32 %v295, 4294901760
      %v737 = vsub.f32 %v295, %v736
      %738 = vmatpush1.msra.mxu0 %v737
      %739 = vmatprep.subr.mxu0 0.0
      %740 = vmatpush1.msra.mxu0 0.0
      %741 = vmatprep.subr.mxu0 0.0
      %742 = vmatpush1.msra.mxu0 0.0
      %743 = vmatprep.subr.mxu0 0.0
      %744 = vmatpush1.msra.mxu0 0.0
      %745 = vmatprep.subr.mxu0 0.0
      %746 = vmatpush1.msra.mxu0 0.0
      %747 = vmatprep.subr.mxu0 0.0
      %748 = vmatpush1.msra.mxu0 0.0
      %749 = vmatprep.subr.mxu0 0.0
      %750 = vmatpush1.msra.mxu0 0.0
      %751 = vmatprep.subr.mxu0 0.0
      %752 = vmatpush1.msra.mxu0 0.0
      %753 = vmatprep.subr.mxu0 0.0
      %754 = vmatpush1.msra.mxu0 0.0
      %755 = vmatprep.subr.mxu0 0.0
      %756 = vmatpush1.msra.mxu0 0.0
      %757 = vmatprep.subr.mxu0 0.0
      %758 = vmatpush1.msra.mxu0 0.0
      %759 = vmatprep.subr.mxu0 0.0
      %760 = vmatpush1.msra.mxu0 0.0
      %761 = vmatprep.subr.mxu0 0.0
      %762 = vmatpush1.msra.mxu0 0.0
      %763 = vmatprep.subr.mxu0 0.0
      %764 = vmatpush1.msra.mxu0 0.0
      %765 = vmatprep.subr.mxu0 0.0
      %766 = vmatpush1.msra.mxu0 0.0
      %767 = vmatprep.subr.mxu0 0.0
      %768 = vmatpush1.msra.mxu0 0.0
      %769 = vmatprep.subr.mxu0 0.0
      %770 = vmatpush1.msra.mxu0 0.0
      %771 = vmatprep.mubr.f32.mxu0 0.0
      %v772 = vand.u32 %v174, 4294901760
      %v773 = vsub.f32 %v174, %v772
      %774 = vmatmul.mubr.f32.gmra.mrb[0].mxu0 %v773
      %v775 = vpop.f32.mrb[0].mxu0
      %v776 = vadd.f32 %v639, %v775
      %v777 = vpop.f32.mrb[0].mxu0
      %v778 = vadd.f32 %v641, %v777
      %779 = vdwg.mxu0
      %v780 = vand.u32 %v176, 4294901760
      %781 = vmatprep.subr.mxu0 %v780
      %v782 = vand.u32 %v175, 4294901760
      %783 = vmatpush1.msra.mxu0 %v782
      %v784 = vand.u32 %v184, 4294901760
      %785 = vmatprep.subr.mxu0 %v784
      %v786 = vand.u32 %v183, 4294901760
      %787 = vmatpush1.msra.mxu0 %v786
      %v788 = vand.u32 %v192, 4294901760
      %789 = vmatprep.subr.mxu0 %v788
      %v790 = vand.u32 %v191, 4294901760
      %791 = vmatpush1.msra.mxu0 %v790
      %v792 = vand.u32 %v200, 4294901760
      %793 = vmatprep.subr.mxu0 %v792
      %v794 = vand.u32 %v199, 4294901760
      %795 = vmatpush1.msra.mxu0 %v794
      %v796 = vand.u32 %v208, 4294901760
      %797 = vmatprep.subr.mxu0 %v796
      %v798 = vand.u32 %v207, 4294901760
      %799 = vmatpush1.msra.mxu0 %v798
      %v800 = vand.u32 %v216, 4294901760
      %801 = vmatprep.subr.mxu0 %v800
      %v802 = vand.u32 %v215, 4294901760
      %803 = vmatpush1.msra.mxu0 %v802
      %v804 = vand.u32 %v224, 4294901760
      %805 = vmatprep.subr.mxu0 %v804
      %v806 = vand.u32 %v223, 4294901760
      %807 = vmatpush1.msra.mxu0 %v806
      %v808 = vand.u32 %v232, 4294901760
      %809 = vmatprep.subr.mxu0 %v808
      %v810 = vand.u32 %v231, 4294901760
      %811 = vmatpush1.msra.mxu0 %v810
      %v812 = vand.u32 %v240, 4294901760
      %813 = vmatprep.subr.mxu0 %v812
      %v814 = vand.u32 %v239, 4294901760
      %815 = vmatpush1.msra.mxu0 %v814
      %v816 = vand.u32 %v248, 4294901760
      %817 = vmatprep.subr.mxu0 %v816
      %v818 = vand.u32 %v247, 4294901760
      %819 = vmatpush1.msra.mxu0 %v818
      %v820 = vand.u32 %v256, 4294901760
      %821 = vmatprep.subr.mxu0 %v820
      %v822 = vand.u32 %v255, 4294901760
      %823 = vmatpush1.msra.mxu0 %v822
      %v824 = vand.u32 %v264, 4294901760
      %825 = vmatprep.subr.mxu0 %v824
      %v826 = vand.u32 %v263, 4294901760
      %827 = vmatpush1.msra.mxu0 %v826
      %v828 = vand.u32 %v272, 4294901760
      %829 = vmatprep.subr.mxu0 %v828
      %v830 = vand.u32 %v271, 4294901760
      %831 = vmatpush1.msra.mxu0 %v830
      %v832 = vand.u32 %v280, 4294901760
      %833 = vmatprep.subr.mxu0 %v832
      %v834 = vand.u32 %v279, 4294901760
      %835 = vmatpush1.msra.mxu0 %v834
      %v836 = vand.u32 %v288, 4294901760
      %837 = vmatprep.subr.mxu0 %v836
      %v838 = vand.u32 %v287, 4294901760
      %839 = vmatpush1.msra.mxu0 %v838
      %v840 = vand.u32 %v296, 4294901760
      %841 = vmatprep.subr.mxu0 %v840
      %v842 = vand.u32 %v295, 4294901760
      %843 = vmatpush1.msra.mxu0 %v842
      %844 = vmatprep.subr.mxu0 0.0
      %845 = vmatpush1.msra.mxu0 0.0
      %846 = vmatprep.subr.mxu0 0.0
      %847 = vmatpush1.msra.mxu0 0.0
      %848 = vmatprep.subr.mxu0 0.0
      %849 = vmatpush1.msra.mxu0 0.0
      %850 = vmatprep.subr.mxu0 0.0
      %851 = vmatpush1.msra.mxu0 0.0
      %852 = vmatprep.subr.mxu0 0.0
      %853 = vmatpush1.msra.mxu0 0.0
      %854 = vmatprep.subr.mxu0 0.0
      %855 = vmatpush1.msra.mxu0 0.0
      %856 = vmatprep.subr.mxu0 0.0
      %857 = vmatpush1.msra.mxu0 0.0
      %858 = vmatprep.subr.mxu0 0.0
      %859 = vmatpush1.msra.mxu0 0.0
      %860 = vmatprep.subr.mxu0 0.0
      %861 = vmatpush1.msra.mxu0 0.0
      %862 = vmatprep.subr.mxu0 0.0
      %863 = vmatpush1.msra.mxu0 0.0
      %864 = vmatprep.subr.mxu0 0.0
      %865 = vmatpush1.msra.mxu0 0.0
      %866 = vmatprep.subr.mxu0 0.0
      %867 = vmatpush1.msra.mxu0 0.0
      %868 = vmatprep.subr.mxu0 0.0
      %869 = vmatpush1.msra.mxu0 0.0
      %870 = vmatprep.subr.mxu0 0.0
      %871 = vmatpush1.msra.mxu0 0.0
      %872 = vmatprep.subr.mxu0 0.0
      %873 = vmatpush1.msra.mxu0 0.0
      %874 = vmatprep.subr.mxu0 0.0
      %875 = vmatpush1.msra.mxu0 0.0
      %876 = vmatprep.mubr.f32.mxu0 0.0
      %v877 = vand.u32 %v174, 4294901760
      %v878 = vsub.f32 %v174, %v877
      %v879 = vand.u32 %v878, 4294901760
      %880 = vmatmul.mubr.f32.gmra.mrb[0].mxu0 %v879
      %v881 = vpop.f32.mrb[0].mxu0
      %v882 = vadd.f32 %v776, %v881
      %v883 = vpop.f32.mrb[0].mxu0
      %v884 = vadd.f32 %v778, %v883
      %885 = vdwg.mxu0
      %v886 = vand.u32 %v176, 4294901760
      %v887 = vsub.f32 %v176, %v886
      %v888 = vand.u32 %v887, 4294901760
      %889 = vmatprep.subr.mxu0 %v888
      %v890 = vand.u32 %v175, 4294901760
      %v891 = vsub.f32 %v175, %v890
      %v892 = vand.u32 %v891, 4294901760
      %893 = vmatpush1.msra.mxu0 %v892
      %v894 = vand.u32 %v184, 4294901760
      %v895 = vsub.f32 %v184, %v894
      %v896 = vand.u32 %v895, 4294901760
      %897 = vmatprep.subr.mxu0 %v896
      %v898 = vand.u32 %v183, 4294901760
      %v899 = vsub.f32 %v183, %v898
      %v900 = vand.u32 %v899, 4294901760
      %901 = vmatpush1.msra.mxu0 %v900
      %v902 = vand.u32 %v192, 4294901760
      %v903 = vsub.f32 %v192, %v902
      %v904 = vand.u32 %v903, 4294901760
      %905 = vmatprep.subr.mxu0 %v904
      %v906 = vand.u32 %v191, 4294901760
      %v907 = vsub.f32 %v191, %v906
      %v908 = vand.u32 %v907, 4294901760
      %909 = vmatpush1.msra.mxu0 %v908
      %v910 = vand.u32 %v200, 4294901760
      %v911 = vsub.f32 %v200, %v910
      %v912 = vand.u32 %v911, 4294901760
      %913 = vmatprep.subr.mxu0 %v912
      %v914 = vand.u32 %v199, 4294901760
      %v915 = vsub.f32 %v199, %v914
      %v916 = vand.u32 %v915, 4294901760
      %917 = vmatpush1.msra.mxu0 %v916
      %v918 = vand.u32 %v208, 4294901760
      %v919 = vsub.f32 %v208, %v918
      %v920 = vand.u32 %v919, 4294901760
      %921 = vmatprep.subr.mxu0 %v920
      %v922 = vand.u32 %v207, 4294901760
      %v923 = vsub.f32 %v207, %v922
      %v924 = vand.u32 %v923, 4294901760
      %925 = vmatpush1.msra.mxu0 %v924
      %v926 = vand.u32 %v216, 4294901760
      %v927 = vsub.f32 %v216, %v926
      %v928 = vand.u32 %v927, 4294901760
      %929 = vmatprep.subr.mxu0 %v928
      %v930 = vand.u32 %v215, 4294901760
      %v931 = vsub.f32 %v215, %v930
      %v932 = vand.u32 %v931, 4294901760
      %933 = vmatpush1.msra.mxu0 %v932
      %v934 = vand.u32 %v224, 4294901760
      %v935 = vsub.f32 %v224, %v934
      %v936 = vand.u32 %v935, 4294901760
      %937 = vmatprep.subr.mxu0 %v936
      %v938 = vand.u32 %v223, 4294901760
      %v939 = vsub.f32 %v223, %v938
      %v940 = vand.u32 %v939, 4294901760
      %941 = vmatpush1.msra.mxu0 %v940
      %v942 = vand.u32 %v232, 4294901760
      %v943 = vsub.f32 %v232, %v942
      %v944 = vand.u32 %v943, 4294901760
      %945 = vmatprep.subr.mxu0 %v944
      %v946 = vand.u32 %v231, 4294901760
      %v947 = vsub.f32 %v231, %v946
      %v948 = vand.u32 %v947, 4294901760
      %949 = vmatpush1.msra.mxu0 %v948
      %v950 = vand.u32 %v240, 4294901760
      %v951 = vsub.f32 %v240, %v950
      %v952 = vand.u32 %v951, 4294901760
      %953 = vmatprep.subr.mxu0 %v952
      %v954 = vand.u32 %v239, 4294901760
      %v955 = vsub.f32 %v239, %v954
      %v956 = vand.u32 %v955, 4294901760
      %957 = vmatpush1.msra.mxu0 %v956
      %v958 = vand.u32 %v248, 4294901760
      %v959 = vsub.f32 %v248, %v958
      %v960 = vand.u32 %v959, 4294901760
      %961 = vmatprep.subr.mxu0 %v960
      %v962 = vand.u32 %v247, 4294901760
      %v963 = vsub.f32 %v247, %v962
      %v964 = vand.u32 %v963, 4294901760
      %965 = vmatpush1.msra.mxu0 %v964
      %v966 = vand.u32 %v256, 4294901760
      %v967 = vsub.f32 %v256, %v966
      %v968 = vand.u32 %v967, 4294901760
      %969 = vmatprep.subr.mxu0 %v968
      %v970 = vand.u32 %v255, 4294901760
      %v971 = vsub.f32 %v255, %v970
      %v972 = vand.u32 %v971, 4294901760
      %973 = vmatpush1.msra.mxu0 %v972
      %v974 = vand.u32 %v264, 4294901760
      %v975 = vsub.f32 %v264, %v974
      %v976 = vand.u32 %v975, 4294901760
      %977 = vmatprep.subr.mxu0 %v976
      %v978 = vand.u32 %v263, 4294901760
      %v979 = vsub.f32 %v263, %v978
      %v980 = vand.u32 %v979, 4294901760
      %981 = vmatpush1.msra.mxu0 %v980
      %v982 = vand.u32 %v272, 4294901760
      %v983 = vsub.f32 %v272, %v982
      %v984 = vand.u32 %v983, 4294901760
      %985 = vmatprep.subr.mxu0 %v984
      %v986 = vand.u32 %v271, 4294901760
      %v987 = vsub.f32 %v271, %v986
      %v988 = vand.u32 %v987, 4294901760
      %989 = vmatpush1.msra.mxu0 %v988
      %v990 = vand.u32 %v280, 4294901760
      %v991 = vsub.f32 %v280, %v990
      %v992 = vand.u32 %v991, 4294901760
      %993 = vmatprep.subr.mxu0 %v992
      %v994 = vand.u32 %v279, 4294901760
      %v995 = vsub.f32 %v279, %v994
      %v996 = vand.u32 %v995, 4294901760
      %997 = vmatpush1.msra.mxu0 %v996
      %v998 = vand.u32 %v288, 4294901760
      %v999 = vsub.f32 %v288, %v998
      %v1000 = vand.u32 %v999, 4294901760
      %1001 = vmatprep.subr.mxu0 %v1000
      %v1002 = vand.u32 %v287, 4294901760
      %v1003 = vsub.f32 %v287, %v1002
      %v1004 = vand.u32 %v1003, 4294901760
      %1005 = vmatpush1.msra.mxu0 %v1004
      %v1006 = vand.u32 %v296, 4294901760
      %v1007 = vsub.f32 %v296, %v1006
      %v1008 = vand.u32 %v1007, 4294901760
      %1009 = vmatprep.subr.mxu0 %v1008
      %v1010 = vand.u32 %v295, 4294901760
      %v1011 = vsub.f32 %v295, %v1010
      %v1012 = vand.u32 %v1011, 4294901760
      %1013 = vmatpush1.msra.mxu0 %v1012
      %1014 = vmatprep.subr.mxu0 0.0
      %1015 = vmatpush1.msra.mxu0 0.0
      %1016 = vmatprep.subr.mxu0 0.0
      %1017 = vmatpush1.msra.mxu0 0.0
      %1018 = vmatprep.subr.mxu0 0.0
      %1019 = vmatpush1.msra.mxu0 0.0
      %1020 = vmatprep.subr.mxu0 0.0
      %1021 = vmatpush1.msra.mxu0 0.0
      %1022 = vmatprep.subr.mxu0 0.0
      %1023 = vmatpush1.msra.mxu0 0.0
      %1024 = vmatprep.subr.mxu0 0.0
      %1025 = vmatpush1.msra.mxu0 0.0
      %1026 = vmatprep.subr.mxu0 0.0
      %1027 = vmatpush1.msra.mxu0 0.0
      %1028 = vmatprep.subr.mxu0 0.0
      %1029 = vmatpush1.msra.mxu0 0.0
      %1030 = vmatprep.subr.mxu0 0.0
      %1031 = vmatpush1.msra.mxu0 0.0
      %1032 = vmatprep.subr.mxu0 0.0
      %1033 = vmatpush1.msra.mxu0 0.0
      %1034 = vmatprep.subr.mxu0 0.0
      %1035 = vmatpush1.msra.mxu0 0.0
      %1036 = vmatprep.subr.mxu0 0.0
      %1037 = vmatpush1.msra.mxu0 0.0
      %1038 = vmatprep.subr.mxu0 0.0
      %1039 = vmatpush1.msra.mxu0 0.0
      %1040 = vmatprep.subr.mxu0 0.0
      %1041 = vmatpush1.msra.mxu0 0.0
      %1042 = vmatprep.subr.mxu0 0.0
      %1043 = vmatpush1.msra.mxu0 0.0
      %1044 = vmatprep.subr.mxu0 0.0
      %1045 = vmatpush1.msra.mxu0 0.0
      %1046 = vmatprep.mubr.f32.mxu0 0.0
      %v1047 = vand.u32 %v174, 4294901760
      %1048 = vmatmul.mubr.f32.gmra.mrb[0].mxu0 %v1047
      %v1049 = vpop.f32.mrb[0].mxu0
      %v1050 = vadd.f32 %v882, %v1049
      %v1051 = vpop.f32.mrb[0].mxu0
      %v1052 = vadd.f32 %v884, %v1051
      %1053 = vdwg.mxu0
      %v1054 = vand.u32 %v176, 4294901760
      %1055 = vmatprep.subr.mxu0 %v1054
      %v1056 = vand.u32 %v175, 4294901760
      %1057 = vmatpush1.msra.mxu0 %v1056
      %v1058 = vand.u32 %v184, 4294901760
      %1059 = vmatprep.subr.mxu0 %v1058
      %v1060 = vand.u32 %v183, 4294901760
      %1061 = vmatpush1.msra.mxu0 %v1060
      %v1062 = vand.u32 %v192, 4294901760
      %1063 = vmatprep.subr.mxu0 %v1062
      %v1064 = vand.u32 %v191, 4294901760
      %1065 = vmatpush1.msra.mxu0 %v1064
      %v1066 = vand.u32 %v200, 4294901760
      %1067 = vmatprep.subr.mxu0 %v1066
      %v1068 = vand.u32 %v199, 4294901760
      %1069 = vmatpush1.msra.mxu0 %v1068
      %v1070 = vand.u32 %v208, 4294901760
      %1071 = vmatprep.subr.mxu0 %v1070
      %v1072 = vand.u32 %v207, 4294901760
      %1073 = vmatpush1.msra.mxu0 %v1072
      %v1074 = vand.u32 %v216, 4294901760
      %1075 = vmatprep.subr.mxu0 %v1074
      %v1076 = vand.u32 %v215, 4294901760
      %1077 = vmatpush1.msra.mxu0 %v1076
      %v1078 = vand.u32 %v224, 4294901760
      %1079 = vmatprep.subr.mxu0 %v1078
      %v1080 = vand.u32 %v223, 4294901760
      %1081 = vmatpush1.msra.mxu0 %v1080
      %v1082 = vand.u32 %v232, 4294901760
      %1083 = vmatprep.subr.mxu0 %v1082
      %v1084 = vand.u32 %v231, 4294901760
      %1085 = vmatpush1.msra.mxu0 %v1084
      %v1086 = vand.u32 %v240, 4294901760
      %1087 = vmatprep.subr.mxu0 %v1086
      %v1088 = vand.u32 %v239, 4294901760
      %1089 = vmatpush1.msra.mxu0 %v1088
      %v1090 = vand.u32 %v248, 4294901760
      %1091 = vmatprep.subr.mxu0 %v1090
      %v1092 = vand.u32 %v247, 4294901760
      %1093 = vmatpush1.msra.mxu0 %v1092
      %v1094 = vand.u32 %v256, 4294901760
      %1095 = vmatprep.subr.mxu0 %v1094
      %v1096 = vand.u32 %v255, 4294901760
      %1097 = vmatpush1.msra.mxu0 %v1096
      %v1098 = vand.u32 %v264, 4294901760
      %1099 = vmatprep.subr.mxu0 %v1098
      %v1100 = vand.u32 %v263, 4294901760
      %1101 = vmatpush1.msra.mxu0 %v1100
      %v1102 = vand.u32 %v272, 4294901760
      %1103 = vmatprep.subr.mxu0 %v1102
      %v1104 = vand.u32 %v271, 4294901760
      %1105 = vmatpush1.msra.mxu0 %v1104
      %v1106 = vand.u32 %v280, 4294901760
      %1107 = vmatprep.subr.mxu0 %v1106
      %v1108 = vand.u32 %v279, 4294901760
      %1109 = vmatpush1.msra.mxu0 %v1108
      %v1110 = vand.u32 %v288, 4294901760
      %1111 = vmatprep.subr.mxu0 %v1110
      %v1112 = vand.u32 %v287, 4294901760
      %1113 = vmatpush1.msra.mxu0 %v1112
      %v1114 = vand.u32 %v296, 4294901760
      %1115 = vmatprep.subr.mxu0 %v1114
      %v1116 = vand.u32 %v295, 4294901760
      %1117 = vmatpush1.msra.mxu0 %v1116
      %1118 = vmatprep.subr.mxu0 0.0
      %1119 = vmatpush1.msra.mxu0 0.0
      %1120 = vmatprep.subr.mxu0 0.0
      %1121 = vmatpush1.msra.mxu0 0.0
      %1122 = vmatprep.subr.mxu0 0.0
      %1123 = vmatpush1.msra.mxu0 0.0
      %1124 = vmatprep.subr.mxu0 0.0
      %1125 = vmatpush1.msra.mxu0 0.0
      %1126 = vmatprep.subr.mxu0 0.0
      %1127 = vmatpush1.msra.mxu0 0.0
      %1128 = vmatprep.subr.mxu0 0.0
      %1129 = vmatpush1.msra.mxu0 0.0
      %1130 = vmatprep.subr.mxu0 0.0
      %1131 = vmatpush1.msra.mxu0 0.0
      %1132 = vmatprep.subr.mxu0 0.0
      %1133 = vmatpush1.msra.mxu0 0.0
      %1134 = vmatprep.subr.mxu0 0.0
      %1135 = vmatpush1.msra.mxu0 0.0
      %1136 = vmatprep.subr.mxu0 0.0
      %1137 = vmatpush1.msra.mxu0 0.0
      %1138 = vmatprep.subr.mxu0 0.0
      %1139 = vmatpush1.msra.mxu0 0.0
      %1140 = vmatprep.subr.mxu0 0.0
      %1141 = vmatpush1.msra.mxu0 0.0
      %1142 = vmatprep.subr.mxu0 0.0
      %1143 = vmatpush1.msra.mxu0 0.0
      %1144 = vmatprep.subr.mxu0 0.0
      %1145 = vmatpush1.msra.mxu0 0.0
      %1146 = vmatprep.subr.mxu0 0.0
      %1147 = vmatpush1.msra.mxu0 0.0
      %1148 = vmatprep.subr.mxu0 0.0
      %1149 = vmatpush1.msra.mxu0 0.0
      %1150 = vmatprep.mubr.f32.mxu0 0.0
      %v1151 = vand.u32 %v174, 4294901760
      %1152 = vmatmul.mubr.f32.gmra.mrb[0].mxu0 %v1151
      %v1153 = vpop.f32.mrb[0].mxu0
      %v1154 = vadd.f32 %v1050, %v1153
      %v1155 = vpop.f32.mrb[0].mxu0
      %v1156 = vadd.f32 %v1052, %v1155
      %1157 = vdwg.mxu0
      %v1158 = vand.u32 %v178, 4294901760
      %1159 = vmatprep.subr.mxu0 %v1158
      %v1160 = vand.u32 %v177, 4294901760
      %1161 = vmatpush1.msra.mxu0 %v1160
      %v1162 = vand.u32 %v186, 4294901760
      %1163 = vmatprep.subr.mxu0 %v1162
      %v1164 = vand.u32 %v185, 4294901760
      %1165 = vmatpush1.msra.mxu0 %v1164
      %v1166 = vand.u32 %v194, 4294901760
      %1167 = vmatprep.subr.mxu0 %v1166
      %v1168 = vand.u32 %v193, 4294901760
      %1169 = vmatpush1.msra.mxu0 %v1168
      %v1170 = vand.u32 %v202, 4294901760
      %1171 = vmatprep.subr.mxu0 %v1170
      %v1172 = vand.u32 %v201, 4294901760
      %1173 = vmatpush1.msra.mxu0 %v1172
      %v1174 = vand.u32 %v210, 4294901760
      %1175 = vmatprep.subr.mxu0 %v1174
      %v1176 = vand.u32 %v209, 4294901760
      %1177 = vmatpush1.msra.mxu0 %v1176
      %v1178 = vand.u32 %v218, 4294901760
      %1179 = vmatprep.subr.mxu0 %v1178
      %v1180 = vand.u32 %v217, 4294901760
      %1181 = vmatpush1.msra.mxu0 %v1180
      %v1182 = vand.u32 %v226, 4294901760
      %1183 = vmatprep.subr.mxu0 %v1182
      %v1184 = vand.u32 %v225, 4294901760
      %1185 = vmatpush1.msra.mxu0 %v1184
      %v1186 = vand.u32 %v234, 4294901760
      %1187 = vmatprep.subr.mxu0 %v1186
      %v1188 = vand.u32 %v233, 4294901760
      %1189 = vmatpush1.msra.mxu0 %v1188
      %v1190 = vand.u32 %v242, 4294901760
      %1191 = vmatprep.subr.mxu0 %v1190
      %v1192 = vand.u32 %v241, 4294901760
      %1193 = vmatpush1.msra.mxu0 %v1192
      %v1194 = vand.u32 %v250, 4294901760
      %1195 = vmatprep.subr.mxu0 %v1194
      %v1196 = vand.u32 %v249, 4294901760
      %1197 = vmatpush1.msra.mxu0 %v1196
      %v1198 = vand.u32 %v258, 4294901760
      %1199 = vmatprep.subr.mxu0 %v1198
      %v1200 = vand.u32 %v257, 4294901760
      %1201 = vmatpush1.msra.mxu0 %v1200
      %v1202 = vand.u32 %v266, 4294901760
      %1203 = vmatprep.subr.mxu0 %v1202
      %v1204 = vand.u32 %v265, 4294901760
      %1205 = vmatpush1.msra.mxu0 %v1204
      %v1206 = vand.u32 %v274, 4294901760
      %1207 = vmatprep.subr.mxu0 %v1206
      %v1208 = vand.u32 %v273, 4294901760
      %1209 = vmatpush1.msra.mxu0 %v1208
      %v1210 = vand.u32 %v282, 4294901760
      %1211 = vmatprep.subr.mxu0 %v1210
      %v1212 = vand.u32 %v281, 4294901760
      %1213 = vmatpush1.msra.mxu0 %v1212
      %v1214 = vand.u32 %v290, 4294901760
      %1215 = vmatprep.subr.mxu0 %v1214
      %v1216 = vand.u32 %v289, 4294901760
      %1217 = vmatpush1.msra.mxu0 %v1216
      %v1218 = vand.u32 %v298, 4294901760
      %1219 = vmatprep.subr.mxu0 %v1218
      %v1220 = vand.u32 %v297, 4294901760
      %1221 = vmatpush1.msra.mxu0 %v1220
      %1222 = vmatprep.subr.mxu0 0.0
      %1223 = vmatpush1.msra.mxu0 0.0
      %1224 = vmatprep.subr.mxu0 0.0
      %1225 = vmatpush1.msra.mxu0 0.0
      %1226 = vmatprep.subr.mxu0 0.0
      %1227 = vmatpush1.msra.mxu0 0.0
      %1228 = vmatprep.subr.mxu0 0.0
      %1229 = vmatpush1.msra.mxu0 0.0
      %1230 = vmatprep.subr.mxu0 0.0
      %1231 = vmatpush1.msra.mxu0 0.0
      %1232 = vmatprep.subr.mxu0 0.0
      %1233 = vmatpush1.msra.mxu0 0.0
      %1234 = vmatprep.subr.mxu0 0.0
      %1235 = vmatpush1.msra.mxu0 0.0
      %1236 = vmatprep.subr.mxu0 0.0
      %1237 = vmatpush1.msra.mxu0 0.0
      %1238 = vmatprep.subr.mxu0 0.0
      %1239 = vmatpush1.msra.mxu0 0.0
      %1240 = vmatprep.subr.mxu0 0.0
      %1241 = vmatpush1.msra.mxu0 0.0
      %1242 = vmatprep.subr.mxu0 0.0
      %1243 = vmatpush1.msra.mxu0 0.0
      %1244 = vmatprep.subr.mxu0 0.0
      %1245 = vmatpush1.msra.mxu0 0.0
      %1246 = vmatprep.subr.mxu0 0.0
      %1247 = vmatpush1.msra.mxu0 0.0
      %1248 = vmatprep.subr.mxu0 0.0
      %1249 = vmatpush1.msra.mxu0 0.0
      %1250 = vmatprep.subr.mxu0 0.0
      %1251 = vmatpush1.msra.mxu0 0.0
      %1252 = vmatprep.subr.mxu0 0.0
      %1253 = vmatpush1.msra.mxu0 0.0
      %1254 = vmatprep.mubr.f32.mxu0 0.0
      %v1255 = vand.u32 %v174, 4294901760
      %v1256 = vsub.f32 %v174, %v1255
      %v1257 = vand.u32 %v1256, 4294901760
      %v1258 = vsub.f32 %v1256, %v1257
      %v1259 = vand.u32 %v1258, 4294901760
      %1260 = vmatmul.mubr.f32.gmra.mrb[0].mxu0 %v1259
      %v1261 = vpop.f32.mrb[0].mxu0
      %v1262 = vadd.f32 0.0, %v1261
      %v1263 = vpop.f32.mrb[0].mxu0
      %v1264 = vadd.f32 0.0, %v1263
      %1265 = vdwg.mxu0
      %v1266 = vand.u32 %v178, 4294901760
      %v1267 = vsub.f32 %v178, %v1266
      %v1268 = vand.u32 %v1267, 4294901760
      %v1269 = vsub.f32 %v1267, %v1268
      %v1270 = vand.u32 %v1269, 4294901760
      %1271 = vmatprep.subr.mxu0 %v1270
      %v1272 = vand.u32 %v177, 4294901760
      %v1273 = vsub.f32 %v177, %v1272
      %v1274 = vand.u32 %v1273, 4294901760
      %v1275 = vsub.f32 %v1273, %v1274
      %v1276 = vand.u32 %v1275, 4294901760
      %1277 = vmatpush1.msra.mxu0 %v1276
      %v1278 = vand.u32 %v186, 4294901760
      %v1279 = vsub.f32 %v186, %v1278
      %v1280 = vand.u32 %v1279, 4294901760
      %v1281 = vsub.f32 %v1279, %v1280
      %v1282 = vand.u32 %v1281, 4294901760
      %1283 = vmatprep.subr.mxu0 %v1282
      %v1284 = vand.u32 %v185, 4294901760
      %v1285 = vsub.f32 %v185, %v1284
      %v1286 = vand.u32 %v1285, 4294901760
      %v1287 = vsub.f32 %v1285, %v1286
      %v1288 = vand.u32 %v1287, 4294901760
      %1289 = vmatpush1.msra.mxu0 %v1288
      %v1290 = vand.u32 %v194, 4294901760
      %v1291 = vsub.f32 %v194, %v1290
      %v1292 = vand.u32 %v1291, 4294901760
      %v1293 = vsub.f32 %v1291, %v1292
      %v1294 = vand.u32 %v1293, 4294901760
      %1295 = vmatprep.subr.mxu0 %v1294
      %v1296 = vand.u32 %v193, 4294901760
      %v1297 = vsub.f32 %v193, %v1296
      %v1298 = vand.u32 %v1297, 4294901760
      %v1299 = vsub.f32 %v1297, %v1298
      %v1300 = vand.u32 %v1299, 4294901760
      %1301 = vmatpush1.msra.mxu0 %v1300
      %v1302 = vand.u32 %v202, 4294901760
      %v1303 = vsub.f32 %v202, %v1302
      %v1304 = vand.u32 %v1303, 4294901760
      %v1305 = vsub.f32 %v1303, %v1304
      %v1306 = vand.u32 %v1305, 4294901760
      %1307 = vmatprep.subr.mxu0 %v1306
      %v1308 = vand.u32 %v201, 4294901760
      %v1309 = vsub.f32 %v201, %v1308
      %v1310 = vand.u32 %v1309, 4294901760
      %v1311 = vsub.f32 %v1309, %v1310
      %v1312 = vand.u32 %v1311, 4294901760
      %1313 = vmatpush1.msra.mxu0 %v1312
      %v1314 = vand.u32 %v210, 4294901760
      %v1315 = vsub.f32 %v210, %v1314
      %v1316 = vand.u32 %v1315, 4294901760
      %v1317 = vsub.f32 %v1315, %v1316
      %v1318 = vand.u32 %v1317, 4294901760
      %1319 = vmatprep.subr.mxu0 %v1318
      %v1320 = vand.u32 %v209, 4294901760
      %v1321 = vsub.f32 %v209, %v1320
      %v1322 = vand.u32 %v1321, 4294901760
      %v1323 = vsub.f32 %v1321, %v1322
      %v1324 = vand.u32 %v1323, 4294901760
      %1325 = vmatpush1.msra.mxu0 %v1324
      %v1326 = vand.u32 %v218, 4294901760
      %v1327 = vsub.f32 %v218, %v1326
      %v1328 = vand.u32 %v1327, 4294901760
      %v1329 = vsub.f32 %v1327, %v1328
      %v1330 = vand.u32 %v1329, 4294901760
      %1331 = vmatprep.subr.mxu0 %v1330
      %v1332 = vand.u32 %v217, 4294901760
      %v1333 = vsub.f32 %v217, %v1332
      %v1334 = vand.u32 %v1333, 4294901760
      %v1335 = vsub.f32 %v1333, %v1334
      %v1336 = vand.u32 %v1335, 4294901760
      %1337 = vmatpush1.msra.mxu0 %v1336
      %v1338 = vand.u32 %v226, 4294901760
      %v1339 = vsub.f32 %v226, %v1338
      %v1340 = vand.u32 %v1339, 4294901760
      %v1341 = vsub.f32 %v1339, %v1340
      %v1342 = vand.u32 %v1341, 4294901760
      %1343 = vmatprep.subr.mxu0 %v1342
      %v1344 = vand.u32 %v225, 4294901760
      %v1345 = vsub.f32 %v225, %v1344
      %v1346 = vand.u32 %v1345, 4294901760
      %v1347 = vsub.f32 %v1345, %v1346
      %v1348 = vand.u32 %v1347, 4294901760
      %1349 = vmatpush1.msra.mxu0 %v1348
      %v1350 = vand.u32 %v234, 4294901760
      %v1351 = vsub.f32 %v234, %v1350
      %v1352 = vand.u32 %v1351, 4294901760
      %v1353 = vsub.f32 %v1351, %v1352
      %v1354 = vand.u32 %v1353, 4294901760
      %1355 = vmatprep.subr.mxu0 %v1354
      %v1356 = vand.u32 %v233, 4294901760
      %v1357 = vsub.f32 %v233, %v1356
      %v1358 = vand.u32 %v1357, 4294901760
      %v1359 = vsub.f32 %v1357, %v1358
      %v1360 = vand.u32 %v1359, 4294901760
      %1361 = vmatpush1.msra.mxu0 %v1360
      %v1362 = vand.u32 %v242, 4294901760
      %v1363 = vsub.f32 %v242, %v1362
      %v1364 = vand.u32 %v1363, 4294901760
      %v1365 = vsub.f32 %v1363, %v1364
      %v1366 = vand.u32 %v1365, 4294901760
      %1367 = vmatprep.subr.mxu0 %v1366
      %v1368 = vand.u32 %v241, 4294901760
      %v1369 = vsub.f32 %v241, %v1368
      %v1370 = vand.u32 %v1369, 4294901760
      %v1371 = vsub.f32 %v1369, %v1370
      %v1372 = vand.u32 %v1371, 4294901760
      %1373 = vmatpush1.msra.mxu0 %v1372
      %v1374 = vand.u32 %v250, 4294901760
      %v1375 = vsub.f32 %v250, %v1374
      %v1376 = vand.u32 %v1375, 4294901760
      %v1377 = vsub.f32 %v1375, %v1376
      %v1378 = vand.u32 %v1377, 4294901760
      %1379 = vmatprep.subr.mxu0 %v1378
      %v1380 = vand.u32 %v249, 4294901760
      %v1381 = vsub.f32 %v249, %v1380
      %v1382 = vand.u32 %v1381, 4294901760
      %v1383 = vsub.f32 %v1381, %v1382
      %v1384 = vand.u32 %v1383, 4294901760
      %1385 = vmatpush1.msra.mxu0 %v1384
      %v1386 = vand.u32 %v258, 4294901760
      %v1387 = vsub.f32 %v258, %v1386
      %v1388 = vand.u32 %v1387, 4294901760
      %v1389 = vsub.f32 %v1387, %v1388
      %v1390 = vand.u32 %v1389, 4294901760
      %1391 = vmatprep.subr.mxu0 %v1390
      %v1392 = vand.u32 %v257, 4294901760
      %v1393 = vsub.f32 %v257, %v1392
      %v1394 = vand.u32 %v1393, 4294901760
      %v1395 = vsub.f32 %v1393, %v1394
      %v1396 = vand.u32 %v1395, 4294901760
      %1397 = vmatpush1.msra.mxu0 %v1396
      %v1398 = vand.u32 %v266, 4294901760
      %v1399 = vsub.f32 %v266, %v1398
      %v1400 = vand.u32 %v1399, 4294901760
      %v1401 = vsub.f32 %v1399, %v1400
      %v1402 = vand.u32 %v1401, 4294901760
      %1403 = vmatprep.subr.mxu0 %v1402
      %v1404 = vand.u32 %v265, 4294901760
      %v1405 = vsub.f32 %v265, %v1404
      %v1406 = vand.u32 %v1405, 4294901760
      %v1407 = vsub.f32 %v1405, %v1406
      %v1408 = vand.u32 %v1407, 4294901760
      %1409 = vmatpush1.msra.mxu0 %v1408
      %v1410 = vand.u32 %v274, 4294901760
      %v1411 = vsub.f32 %v274, %v1410
      %v1412 = vand.u32 %v1411, 4294901760
      %v1413 = vsub.f32 %v1411, %v1412
      %v1414 = vand.u32 %v1413, 4294901760
      %1415 = vmatprep.subr.mxu0 %v1414
      %v1416 = vand.u32 %v273, 4294901760
      %v1417 = vsub.f32 %v273, %v1416
      %v1418 = vand.u32 %v1417, 4294901760
      %v1419 = vsub.f32 %v1417, %v1418
      %v1420 = vand.u32 %v1419, 4294901760
      %1421 = vmatpush1.msra.mxu0 %v1420
      %v1422 = vand.u32 %v282, 4294901760
      %v1423 = vsub.f32 %v282, %v1422
      %v1424 = vand.u32 %v1423, 4294901760
      %v1425 = vsub.f32 %v1423, %v1424
      %v1426 = vand.u32 %v1425, 4294901760
      %1427 = vmatprep.subr.mxu0 %v1426
      %v1428 = vand.u32 %v281, 4294901760
      %v1429 = vsub.f32 %v281, %v1428
      %v1430 = vand.u32 %v1429, 4294901760
      %v1431 = vsub.f32 %v1429, %v1430
      %v1432 = vand.u32 %v1431, 4294901760
      %1433 = vmatpush1.msra.mxu0 %v1432
      %v1434 = vand.u32 %v290, 4294901760
      %v1435 = vsub.f32 %v290, %v1434
      %v1436 = vand.u32 %v1435, 4294901760
      %v1437 = vsub.f32 %v1435, %v1436
      %v1438 = vand.u32 %v1437, 4294901760
      %1439 = vmatprep.subr.mxu0 %v1438
      %v1440 = vand.u32 %v289, 4294901760
      %v1441 = vsub.f32 %v289, %v1440
      %v1442 = vand.u32 %v1441, 4294901760
      %v1443 = vsub.f32 %v1441, %v1442
      %v1444 = vand.u32 %v1443, 4294901760
      %1445 = vmatpush1.msra.mxu0 %v1444
      %v1446 = vand.u32 %v298, 4294901760
      %v1447 = vsub.f32 %v298, %v1446
      %v1448 = vand.u32 %v1447, 4294901760
      %v1449 = vsub.f32 %v1447, %v1448
      %v1450 = vand.u32 %v1449, 4294901760
      %1451 = vmatprep.subr.mxu0 %v1450
      %v1452 = vand.u32 %v297, 4294901760
      %v1453 = vsub.f32 %v297, %v1452
      %v1454 = vand.u32 %v1453, 4294901760
      %v1455 = vsub.f32 %v1453, %v1454
      %v1456 = vand.u32 %v1455, 4294901760
      %1457 = vmatpush1.msra.mxu0 %v1456
      %1458 = vmatprep.subr.mxu0 0.0
      %1459 = vmatpush1.msra.mxu0 0.0
      %1460 = vmatprep.subr.mxu0 0.0
      %1461 = vmatpush1.msra.mxu0 0.0
      %1462 = vmatprep.subr.mxu0 0.0
      %1463 = vmatpush1.msra.mxu0 0.0
      %1464 = vmatprep.subr.mxu0 0.0
      %1465 = vmatpush1.msra.mxu0 0.0
      %1466 = vmatprep.subr.mxu0 0.0
      %1467 = vmatpush1.msra.mxu0 0.0
      %1468 = vmatprep.subr.mxu0 0.0
      %1469 = vmatpush1.msra.mxu0 0.0
      %1470 = vmatprep.subr.mxu0 0.0
      %1471 = vmatpush1.msra.mxu0 0.0
      %1472 = vmatprep.subr.mxu0 0.0
      %1473 = vmatpush1.msra.mxu0 0.0
      %1474 = vmatprep.subr.mxu0 0.0
      %1475 = vmatpush1.msra.mxu0 0.0
      %1476 = vmatprep.subr.mxu0 0.0
      %1477 = vmatpush1.msra.mxu0 0.0
      %1478 = vmatprep.subr.mxu0 0.0
      %1479 = vmatpush1.msra.mxu0 0.0
      %1480 = vmatprep.subr.mxu0 0.0
      %1481 = vmatpush1.msra.mxu0 0.0
      %1482 = vmatprep.subr.mxu0 0.0
      %1483 = vmatpush1.msra.mxu0 0.0
      %1484 = vmatprep.subr.mxu0 0.0
      %1485 = vmatpush1.msra.mxu0 0.0
      %1486 = vmatprep.subr.mxu0 0.0
      %1487 = vmatpush1.msra.mxu0 0.0
      %1488 = vmatprep.subr.mxu0 0.0
      %1489 = vmatpush1.msra.mxu0 0.0
      %1490 = vmatprep.mubr.f32.mxu0 0.0
      %v1491 = vand.u32 %v174, 4294901760
      %1492 = vmatmul.mubr.f32.gmra.mrb[0].mxu0 %v1491
      %v1493 = vpop.f32.mrb[0].mxu0
      %v1494 = vadd.f32 %v1262, %v1493
      %v1495 = vpop.f32.mrb[0].mxu0
      %v1496 = vadd.f32 %v1264, %v1495
      %1497 = vdwg.mxu0
      %v1498 = vand.u32 %v178, 4294901760
      %v1499 = vsub.f32 %v178, %v1498
      %1500 = vmatprep.subr.mxu0 %v1499
      %v1501 = vand.u32 %v177, 4294901760
      %v1502 = vsub.f32 %v177, %v1501
      %1503 = vmatpush1.msra.mxu0 %v1502
      %v1504 = vand.u32 %v186, 4294901760
      %v1505 = vsub.f32 %v186, %v1504
      %1506 = vmatprep.subr.mxu0 %v1505
      %v1507 = vand.u32 %v185, 4294901760
      %v1508 = vsub.f32 %v185, %v1507
      %1509 = vmatpush1.msra.mxu0 %v1508
      %v1510 = vand.u32 %v194, 4294901760
      %v1511 = vsub.f32 %v194, %v1510
      %1512 = vmatprep.subr.mxu0 %v1511
      %v1513 = vand.u32 %v193, 4294901760
      %v1514 = vsub.f32 %v193, %v1513
      %1515 = vmatpush1.msra.mxu0 %v1514
      %v1516 = vand.u32 %v202, 4294901760
      %v1517 = vsub.f32 %v202, %v1516
      %1518 = vmatprep.subr.mxu0 %v1517
      %v1519 = vand.u32 %v201, 4294901760
      %v1520 = vsub.f32 %v201, %v1519
      %1521 = vmatpush1.msra.mxu0 %v1520
      %v1522 = vand.u32 %v210, 4294901760
      %v1523 = vsub.f32 %v210, %v1522
      %1524 = vmatprep.subr.mxu0 %v1523
      %v1525 = vand.u32 %v209, 4294901760
      %v1526 = vsub.f32 %v209, %v1525
      %1527 = vmatpush1.msra.mxu0 %v1526
      %v1528 = vand.u32 %v218, 4294901760
      %v1529 = vsub.f32 %v218, %v1528
      %1530 = vmatprep.subr.mxu0 %v1529
      %v1531 = vand.u32 %v217, 4294901760
      %v1532 = vsub.f32 %v217, %v1531
      %1533 = vmatpush1.msra.mxu0 %v1532
      %v1534 = vand.u32 %v226, 4294901760
      %v1535 = vsub.f32 %v226, %v1534
      %1536 = vmatprep.subr.mxu0 %v1535
      %v1537 = vand.u32 %v225, 4294901760
      %v1538 = vsub.f32 %v225, %v1537
      %1539 = vmatpush1.msra.mxu0 %v1538
      %v1540 = vand.u32 %v234, 4294901760
      %v1541 = vsub.f32 %v234, %v1540
      %1542 = vmatprep.subr.mxu0 %v1541
      %v1543 = vand.u32 %v233, 4294901760
      %v1544 = vsub.f32 %v233, %v1543
      %1545 = vmatpush1.msra.mxu0 %v1544
      %v1546 = vand.u32 %v242, 4294901760
      %v1547 = vsub.f32 %v242, %v1546
      %1548 = vmatprep.subr.mxu0 %v1547
      %v1549 = vand.u32 %v241, 4294901760
      %v1550 = vsub.f32 %v241, %v1549
      %1551 = vmatpush1.msra.mxu0 %v1550
      %v1552 = vand.u32 %v250, 4294901760
      %v1553 = vsub.f32 %v250, %v1552
      %1554 = vmatprep.subr.mxu0 %v1553
      %v1555 = vand.u32 %v249, 4294901760
      %v1556 = vsub.f32 %v249, %v1555
      %1557 = vmatpush1.msra.mxu0 %v1556
      %v1558 = vand.u32 %v258, 4294901760
      %v1559 = vsub.f32 %v258, %v1558
      %1560 = vmatprep.subr.mxu0 %v1559
      %v1561 = vand.u32 %v257, 4294901760
      %v1562 = vsub.f32 %v257, %v1561
      %1563 = vmatpush1.msra.mxu0 %v1562
      %v1564 = vand.u32 %v266, 4294901760
      %v1565 = vsub.f32 %v266, %v1564
      %1566 = vmatprep.subr.mxu0 %v1565
      %v1567 = vand.u32 %v265, 4294901760
      %v1568 = vsub.f32 %v265, %v1567
      %1569 = vmatpush1.msra.mxu0 %v1568
      %v1570 = vand.u32 %v274, 4294901760
      %v1571 = vsub.f32 %v274, %v1570
      %1572 = vmatprep.subr.mxu0 %v1571
      %v1573 = vand.u32 %v273, 4294901760
      %v1574 = vsub.f32 %v273, %v1573
      %1575 = vmatpush1.msra.mxu0 %v1574
      %v1576 = vand.u32 %v282, 4294901760
      %v1577 = vsub.f32 %v282, %v1576
      %1578 = vmatprep.subr.mxu0 %v1577
      %v1579 = vand.u32 %v281, 4294901760
      %v1580 = vsub.f32 %v281, %v1579
      %1581 = vmatpush1.msra.mxu0 %v1580
      %v1582 = vand.u32 %v290, 4294901760
      %v1583 = vsub.f32 %v290, %v1582
      %1584 = vmatprep.subr.mxu0 %v1583
      %v1585 = vand.u32 %v289, 4294901760
      %v1586 = vsub.f32 %v289, %v1585
      %1587 = vmatpush1.msra.mxu0 %v1586
      %v1588 = vand.u32 %v298, 4294901760
      %v1589 = vsub.f32 %v298, %v1588
      %1590 = vmatprep.subr.mxu0 %v1589
      %v1591 = vand.u32 %v297, 4294901760
      %v1592 = vsub.f32 %v297, %v1591
      %1593 = vmatpush1.msra.mxu0 %v1592
      %1594 = vmatprep.subr.mxu0 0.0
      %1595 = vmatpush1.msra.mxu0 0.0
      %1596 = vmatprep.subr.mxu0 0.0
      %1597 = vmatpush1.msra.mxu0 0.0
      %1598 = vmatprep.subr.mxu0 0.0
      %1599 = vmatpush1.msra.mxu0 0.0
      %1600 = vmatprep.subr.mxu0 0.0
      %1601 = vmatpush1.msra.mxu0 0.0
      %1602 = vmatprep.subr.mxu0 0.0
      %1603 = vmatpush1.msra.mxu0 0.0
      %1604 = vmatprep.subr.mxu0 0.0
      %1605 = vmatpush1.msra.mxu0 0.0
      %1606 = vmatprep.subr.mxu0 0.0
      %1607 = vmatpush1.msra.mxu0 0.0
      %1608 = vmatprep.subr.mxu0 0.0
      %1609 = vmatpush1.msra.mxu0 0.0
      %1610 = vmatprep.subr.mxu0 0.0
      %1611 = vmatpush1.msra.mxu0 0.0
      %1612 = vmatprep.subr.mxu0 0.0
      %1613 = vmatpush1.msra.mxu0 0.0
      %1614 = vmatprep.subr.mxu0 0.0
      %1615 = vmatpush1.msra.mxu0 0.0
      %1616 = vmatprep.subr.mxu0 0.0
      %1617 = vmatpush1.msra.mxu0 0.0
      %1618 = vmatprep.subr.mxu0 0.0
      %1619 = vmatpush1.msra.mxu0 0.0
      %1620 = vmatprep.subr.mxu0 0.0
      %1621 = vmatpush1.msra.mxu0 0.0
      %1622 = vmatprep.subr.mxu0 0.0
      %1623 = vmatpush1.msra.mxu0 0.0
      %1624 = vmatprep.subr.mxu0 0.0
      %1625 = vmatpush1.msra.mxu0 0.0
      %1626 = vmatprep.mubr.f32.mxu0 0.0
      %v1627 = vand.u32 %v174, 4294901760
      %v1628 = vsub.f32 %v174, %v1627
      %1629 = vmatmul.mubr.f32.gmra.mrb[0].mxu0 %v1628
      %v1630 = vpop.f32.mrb[0].mxu0
      %v1631 = vadd.f32 %v1494, %v1630
      %v1632 = vpop.f32.mrb[0].mxu0
      %v1633 = vadd.f32 %v1496, %v1632
      %1634 = vdwg.mxu0
      %v1635 = vand.u32 %v178, 4294901760
      %1636 = vmatprep.subr.mxu0 %v1635
      %v1637 = vand.u32 %v177, 4294901760
      %1638 = vmatpush1.msra.mxu0 %v1637
      %v1639 = vand.u32 %v186, 4294901760
      %1640 = vmatprep.subr.mxu0 %v1639
      %v1641 = vand.u32 %v185, 4294901760
      %1642 = vmatpush1.msra.mxu0 %v1641
      %v1643 = vand.u32 %v194, 4294901760
      %1644 = vmatprep.subr.mxu0 %v1643
      %v1645 = vand.u32 %v193, 4294901760
      %1646 = vmatpush1.msra.mxu0 %v1645
      %v1647 = vand.u32 %v202, 4294901760
      %1648 = vmatprep.subr.mxu0 %v1647
      %v1649 = vand.u32 %v201, 4294901760
      %1650 = vmatpush1.msra.mxu0 %v1649
      %v1651 = vand.u32 %v210, 4294901760
      %1652 = vmatprep.subr.mxu0 %v1651
      %v1653 = vand.u32 %v209, 4294901760
      %1654 = vmatpush1.msra.mxu0 %v1653
      %v1655 = vand.u32 %v218, 4294901760
      %1656 = vmatprep.subr.mxu0 %v1655
      %v1657 = vand.u32 %v217, 4294901760
      %1658 = vmatpush1.msra.mxu0 %v1657
      %v1659 = vand.u32 %v226, 4294901760
      %1660 = vmatprep.subr.mxu0 %v1659
      %v1661 = vand.u32 %v225, 4294901760
      %1662 = vmatpush1.msra.mxu0 %v1661
      %v1663 = vand.u32 %v234, 4294901760
      %1664 = vmatprep.subr.mxu0 %v1663
      %v1665 = vand.u32 %v233, 4294901760
      %1666 = vmatpush1.msra.mxu0 %v1665
      %v1667 = vand.u32 %v242, 4294901760
      %1668 = vmatprep.subr.mxu0 %v1667
      %v1669 = vand.u32 %v241, 4294901760
      %1670 = vmatpush1.msra.mxu0 %v1669
      %v1671 = vand.u32 %v250, 4294901760
      %1672 = vmatprep.subr.mxu0 %v1671
      %v1673 = vand.u32 %v249, 4294901760
      %1674 = vmatpush1.msra.mxu0 %v1673
      %v1675 = vand.u32 %v258, 4294901760
      %1676 = vmatprep.subr.mxu0 %v1675
      %v1677 = vand.u32 %v257, 4294901760
      %1678 = vmatpush1.msra.mxu0 %v1677
      %v1679 = vand.u32 %v266, 4294901760
      %1680 = vmatprep.subr.mxu0 %v1679
      %v1681 = vand.u32 %v265, 4294901760
      %1682 = vmatpush1.msra.mxu0 %v1681
      %v1683 = vand.u32 %v274, 4294901760
      %1684 = vmatprep.subr.mxu0 %v1683
      %v1685 = vand.u32 %v273, 4294901760
      %1686 = vmatpush1.msra.mxu0 %v1685
      %v1687 = vand.u32 %v282, 4294901760
      %1688 = vmatprep.subr.mxu0 %v1687
      %v1689 = vand.u32 %v281, 4294901760
      %1690 = vmatpush1.msra.mxu0 %v1689
      %v1691 = vand.u32 %v290, 4294901760
      %1692 = vmatprep.subr.mxu0 %v1691
      %v1693 = vand.u32 %v289, 4294901760
      %1694 = vmatpush1.msra.mxu0 %v1693
      %v1695 = vand.u32 %v298, 4294901760
      %1696 = vmatprep.subr.mxu0 %v1695
      %v1697 = vand.u32 %v297, 4294901760
      %1698 = vmatpush1.msra.mxu0 %v1697
      %1699 = vmatprep.subr.mxu0 0.0
      %1700 = vmatpush1.msra.mxu0 0.0
      %1701 = vmatprep.subr.mxu0 0.0
      %1702 = vmatpush1.msra.mxu0 0.0
      %1703 = vmatprep.subr.mxu0 0.0
      %1704 = vmatpush1.msra.mxu0 0.0
      %1705 = vmatprep.subr.mxu0 0.0
      %1706 = vmatpush1.msra.mxu0 0.0
      %1707 = vmatprep.subr.mxu0 0.0
      %1708 = vmatpush1.msra.mxu0 0.0
      %1709 = vmatprep.subr.mxu0 0.0
      %1710 = vmatpush1.msra.mxu0 0.0
      %1711 = vmatprep.subr.mxu0 0.0
      %1712 = vmatpush1.msra.mxu0 0.0
      %1713 = vmatprep.subr.mxu0 0.0
      %1714 = vmatpush1.msra.mxu0 0.0
      %1715 = vmatprep.subr.mxu0 0.0
      %1716 = vmatpush1.msra.mxu0 0.0
      %1717 = vmatprep.subr.mxu0 0.0
      %1718 = vmatpush1.msra.mxu0 0.0
      %1719 = vmatprep.subr.mxu0 0.0
      %1720 = vmatpush1.msra.mxu0 0.0
      %1721 = vmatprep.subr.mxu0 0.0
      %1722 = vmatpush1.msra.mxu0 0.0
      %1723 = vmatprep.subr.mxu0 0.0
      %1724 = vmatpush1.msra.mxu0 0.0
      %1725 = vmatprep.subr.mxu0 0.0
      %1726 = vmatpush1.msra.mxu0 0.0
      %1727 = vmatprep.subr.mxu0 0.0
      %1728 = vmatpush1.msra.mxu0 0.0
      %1729 = vmatprep.subr.mxu0 0.0
      %1730 = vmatpush1.msra.mxu0 0.0
      %1731 = vmatprep.mubr.f32.mxu0 0.0
      %v1732 = vand.u32 %v174, 4294901760
      %v1733 = vsub.f32 %v174, %v1732
      %v1734 = vand.u32 %v1733, 4294901760
      %1735 = vmatmul.mubr.f32.gmra.mrb[0].mxu0 %v1734
      %v1736 = vpop.f32.mrb[0].mxu0
      %v1737 = vadd.f32 %v1631, %v1736
      %v1738 = vpop.f32.mrb[0].mxu0
      %v1739 = vadd.f32 %v1633, %v1738
      %1740 = vdwg.mxu0
      %v1741 = vand.u32 %v178, 4294901760
      %v1742 = vsub.f32 %v178, %v1741
      %v1743 = vand.u32 %v1742, 4294901760
      %1744 = vmatprep.subr.mxu0 %v1743
      %v1745 = vand.u32 %v177, 4294901760
      %v1746 = vsub.f32 %v177, %v1745
      %v1747 = vand.u32 %v1746, 4294901760
      %1748 = vmatpush1.msra.mxu0 %v1747
      %v1749 = vand.u32 %v186, 4294901760
      %v1750 = vsub.f32 %v186, %v1749
      %v1751 = vand.u32 %v1750, 4294901760
      %1752 = vmatprep.subr.mxu0 %v1751
      %v1753 = vand.u32 %v185, 4294901760
      %v1754 = vsub.f32 %v185, %v1753
      %v1755 = vand.u32 %v1754, 4294901760
      %1756 = vmatpush1.msra.mxu0 %v1755
      %v1757 = vand.u32 %v194, 4294901760
      %v1758 = vsub.f32 %v194, %v1757
      %v1759 = vand.u32 %v1758, 4294901760
      %1760 = vmatprep.subr.mxu0 %v1759
      %v1761 = vand.u32 %v193, 4294901760
      %v1762 = vsub.f32 %v193, %v1761
      %v1763 = vand.u32 %v1762, 4294901760
      %1764 = vmatpush1.msra.mxu0 %v1763
      %v1765 = vand.u32 %v202, 4294901760
      %v1766 = vsub.f32 %v202, %v1765
      %v1767 = vand.u32 %v1766, 4294901760
      %1768 = vmatprep.subr.mxu0 %v1767
      %v1769 = vand.u32 %v201, 4294901760
      %v1770 = vsub.f32 %v201, %v1769
      %v1771 = vand.u32 %v1770, 4294901760
      %1772 = vmatpush1.msra.mxu0 %v1771
      %v1773 = vand.u32 %v210, 4294901760
      %v1774 = vsub.f32 %v210, %v1773
      %v1775 = vand.u32 %v1774, 4294901760
      %1776 = vmatprep.subr.mxu0 %v1775
      %v1777 = vand.u32 %v209, 4294901760
      %v1778 = vsub.f32 %v209, %v1777
      %v1779 = vand.u32 %v1778, 4294901760
      %1780 = vmatpush1.msra.mxu0 %v1779
      %v1781 = vand.u32 %v218, 4294901760
      %v1782 = vsub.f32 %v218, %v1781
      %v1783 = vand.u32 %v1782, 4294901760
      %1784 = vmatprep.subr.mxu0 %v1783
      %v1785 = vand.u32 %v217, 4294901760
      %v1786 = vsub.f32 %v217, %v1785
      %v1787 = vand.u32 %v1786, 4294901760
      %1788 = vmatpush1.msra.mxu0 %v1787
      %v1789 = vand.u32 %v226, 4294901760
      %v1790 = vsub.f32 %v226, %v1789
      %v1791 = vand.u32 %v1790, 4294901760
      %1792 = vmatprep.subr.mxu0 %v1791
      %v1793 = vand.u32 %v225, 4294901760
      %v1794 = vsub.f32 %v225, %v1793
      %v1795 = vand.u32 %v1794, 4294901760
      %1796 = vmatpush1.msra.mxu0 %v1795
      %v1797 = vand.u32 %v234, 4294901760
      %v1798 = vsub.f32 %v234, %v1797
      %v1799 = vand.u32 %v1798, 4294901760
      %1800 = vmatprep.subr.mxu0 %v1799
      %v1801 = vand.u32 %v233, 4294901760
      %v1802 = vsub.f32 %v233, %v1801
      %v1803 = vand.u32 %v1802, 4294901760
      %1804 = vmatpush1.msra.mxu0 %v1803
      %v1805 = vand.u32 %v242, 4294901760
      %v1806 = vsub.f32 %v242, %v1805
      %v1807 = vand.u32 %v1806, 4294901760
      %1808 = vmatprep.subr.mxu0 %v1807
      %v1809 = vand.u32 %v241, 4294901760
      %v1810 = vsub.f32 %v241, %v1809
      %v1811 = vand.u32 %v1810, 4294901760
      %1812 = vmatpush1.msra.mxu0 %v1811
      %v1813 = vand.u32 %v250, 4294901760
      %v1814 = vsub.f32 %v250, %v1813
      %v1815 = vand.u32 %v1814, 4294901760
      %1816 = vmatprep.subr.mxu0 %v1815
      %v1817 = vand.u32 %v249, 4294901760
      %v1818 = vsub.f32 %v249, %v1817
      %v1819 = vand.u32 %v1818, 4294901760
      %1820 = vmatpush1.msra.mxu0 %v1819
      %v1821 = vand.u32 %v258, 4294901760
      %v1822 = vsub.f32 %v258, %v1821
      %v1823 = vand.u32 %v1822, 4294901760
      %1824 = vmatprep.subr.mxu0 %v1823
      %v1825 = vand.u32 %v257, 4294901760
      %v1826 = vsub.f32 %v257, %v1825
      %v1827 = vand.u32 %v1826, 4294901760
      %1828 = vmatpush1.msra.mxu0 %v1827
      %v1829 = vand.u32 %v266, 4294901760
      %v1830 = vsub.f32 %v266, %v1829
      %v1831 = vand.u32 %v1830, 4294901760
      %1832 = vmatprep.subr.mxu0 %v1831
      %v1833 = vand.u32 %v265, 4294901760
      %v1834 = vsub.f32 %v265, %v1833
      %v1835 = vand.u32 %v1834, 4294901760
      %1836 = vmatpush1.msra.mxu0 %v1835
      %v1837 = vand.u32 %v274, 4294901760
      %v1838 = vsub.f32 %v274, %v1837
      %v1839 = vand.u32 %v1838, 4294901760
      %1840 = vmatprep.subr.mxu0 %v1839
      %v1841 = vand.u32 %v273, 4294901760
      %v1842 = vsub.f32 %v273, %v1841
      %v1843 = vand.u32 %v1842, 4294901760
      %1844 = vmatpush1.msra.mxu0 %v1843
      %v1845 = vand.u32 %v282, 4294901760
      %v1846 = vsub.f32 %v282, %v1845
      %v1847 = vand.u32 %v1846, 4294901760
      %1848 = vmatprep.subr.mxu0 %v1847
      %v1849 = vand.u32 %v281, 4294901760
      %v1850 = vsub.f32 %v281, %v1849
      %v1851 = vand.u32 %v1850, 4294901760
      %1852 = vmatpush1.msra.mxu0 %v1851
      %v1853 = vand.u32 %v290, 4294901760
      %v1854 = vsub.f32 %v290, %v1853
      %v1855 = vand.u32 %v1854, 4294901760
      %1856 = vmatprep.subr.mxu0 %v1855
      %v1857 = vand.u32 %v289, 4294901760
      %v1858 = vsub.f32 %v289, %v1857
      %v1859 = vand.u32 %v1858, 4294901760
      %1860 = vmatpush1.msra.mxu0 %v1859
      %v1861 = vand.u32 %v298, 4294901760
      %v1862 = vsub.f32 %v298, %v1861
      %v1863 = vand.u32 %v1862, 4294901760
      %1864 = vmatprep.subr.mxu0 %v1863
      %v1865 = vand.u32 %v297, 4294901760
      %v1866 = vsub.f32 %v297, %v1865
      %v1867 = vand.u32 %v1866, 4294901760
      %1868 = vmatpush1.msra.mxu0 %v1867
      %1869 = vmatprep.subr.mxu0 0.0
      %1870 = vmatpush1.msra.mxu0 0.0
      %1871 = vmatprep.subr.mxu0 0.0
      %1872 = vmatpush1.msra.mxu0 0.0
      %1873 = vmatprep.subr.mxu0 0.0
      %1874 = vmatpush1.msra.mxu0 0.0
      %1875 = vmatprep.subr.mxu0 0.0
      %1876 = vmatpush1.msra.mxu0 0.0
      %1877 = vmatprep.subr.mxu0 0.0
      %1878 = vmatpush1.msra.mxu0 0.0
      %1879 = vmatprep.subr.mxu0 0.0
      %1880 = vmatpush1.msra.mxu0 0.0
      %1881 = vmatprep.subr.mxu0 0.0
      %1882 = vmatpush1.msra.mxu0 0.0
      %1883 = vmatprep.subr.mxu0 0.0
      %1884 = vmatpush1.msra.mxu0 0.0
      %1885 = vmatprep.subr.mxu0 0.0
      %1886 = vmatpush1.msra.mxu0 0.0
      %1887 = vmatprep.subr.mxu0 0.0
      %1888 = vmatpush1.msra.mxu0 0.0
      %1889 = vmatprep.subr.mxu0 0.0
      %1890 = vmatpush1.msra.mxu0 0.0
      %1891 = vmatprep.subr.mxu0 0.0
      %1892 = vmatpush1.msra.mxu0 0.0
      %1893 = vmatprep.subr.mxu0 0.0
      %1894 = vmatpush1.msra.mxu0 0.0
      %1895 = vmatprep.subr.mxu0 0.0
      %1896 = vmatpush1.msra.mxu0 0.0
      %1897 = vmatprep.subr.mxu0 0.0
      %1898 = vmatpush1.msra.mxu0 0.0
      %1899 = vmatprep.subr.mxu0 0.0
      %1900 = vmatpush1.msra.mxu0 0.0
      %1901 = vmatprep.mubr.f32.mxu0 0.0
      %v1902 = vand.u32 %v174, 4294901760
      %1903 = vmatmul.mubr.f32.gmra.mrb[0].mxu0 %v1902
      %v1904 = vpop.f32.mrb[0].mxu0
      %v1905 = vadd.f32 %v1737, %v1904
      %v1906 = vpop.f32.mrb[0].mxu0
      %v1907 = vadd.f32 %v1739, %v1906
      %1908 = vdwg.mxu0
      %v1909 = vand.u32 %v178, 4294901760
      %1910 = vmatprep.subr.mxu0 %v1909
      %v1911 = vand.u32 %v177, 4294901760
      %1912 = vmatpush1.msra.mxu0 %v1911
      %v1913 = vand.u32 %v186, 4294901760
      %1914 = vmatprep.subr.mxu0 %v1913
      %v1915 = vand.u32 %v185, 4294901760
      %1916 = vmatpush1.msra.mxu0 %v1915
      %v1917 = vand.u32 %v194, 4294901760
      %1918 = vmatprep.subr.mxu0 %v1917
      %v1919 = vand.u32 %v193, 4294901760
      %1920 = vmatpush1.msra.mxu0 %v1919
      %v1921 = vand.u32 %v202, 4294901760
      %1922 = vmatprep.subr.mxu0 %v1921
      %v1923 = vand.u32 %v201, 4294901760
      %1924 = vmatpush1.msra.mxu0 %v1923
      %v1925 = vand.u32 %v210, 4294901760
      %1926 = vmatprep.subr.mxu0 %v1925
      %v1927 = vand.u32 %v209, 4294901760
      %1928 = vmatpush1.msra.mxu0 %v1927
      %v1929 = vand.u32 %v218, 4294901760
      %1930 = vmatprep.subr.mxu0 %v1929
      %v1931 = vand.u32 %v217, 4294901760
      %1932 = vmatpush1.msra.mxu0 %v1931
      %v1933 = vand.u32 %v226, 4294901760
      %1934 = vmatprep.subr.mxu0 %v1933
      %v1935 = vand.u32 %v225, 4294901760
      %1936 = vmatpush1.msra.mxu0 %v1935
      %v1937 = vand.u32 %v234, 4294901760
      %1938 = vmatprep.subr.mxu0 %v1937
      %v1939 = vand.u32 %v233, 4294901760
      %1940 = vmatpush1.msra.mxu0 %v1939
      %v1941 = vand.u32 %v242, 4294901760
      %1942 = vmatprep.subr.mxu0 %v1941
      %v1943 = vand.u32 %v241, 4294901760
      %1944 = vmatpush1.msra.mxu0 %v1943
      %v1945 = vand.u32 %v250, 4294901760
      %1946 = vmatprep.subr.mxu0 %v1945
      %v1947 = vand.u32 %v249, 4294901760
      %1948 = vmatpush1.msra.mxu0 %v1947
      %v1949 = vand.u32 %v258, 4294901760
      %1950 = vmatprep.subr.mxu0 %v1949
      %v1951 = vand.u32 %v257, 4294901760
      %1952 = vmatpush1.msra.mxu0 %v1951
      %v1953 = vand.u32 %v266, 4294901760
      %1954 = vmatprep.subr.mxu0 %v1953
      %v1955 = vand.u32 %v265, 4294901760
      %1956 = vmatpush1.msra.mxu0 %v1955
      %v1957 = vand.u32 %v274, 4294901760
      %1958 = vmatprep.subr.mxu0 %v1957
      %v1959 = vand.u32 %v273, 4294901760
      %1960 = vmatpush1.msra.mxu0 %v1959
      %v1961 = vand.u32 %v282, 4294901760
      %1962 = vmatprep.subr.mxu0 %v1961
      %v1963 = vand.u32 %v281, 4294901760
      %1964 = vmatpush1.msra.mxu0 %v1963
      %v1965 = vand.u32 %v290, 4294901760
      %1966 = vmatprep.subr.mxu0 %v1965
      %v1967 = vand.u32 %v289, 4294901760
      %1968 = vmatpush1.msra.mxu0 %v1967
      %v1969 = vand.u32 %v298, 4294901760
      %1970 = vmatprep.subr.mxu0 %v1969
      %v1971 = vand.u32 %v297, 4294901760
      %1972 = vmatpush1.msra.mxu0 %v1971
      %1973 = vmatprep.subr.mxu0 0.0
      %1974 = vmatpush1.msra.mxu0 0.0
      %1975 = vmatprep.subr.mxu0 0.0
      %1976 = vmatpush1.msra.mxu0 0.0
      %1977 = vmatprep.subr.mxu0 0.0
      %1978 = vmatpush1.msra.mxu0 0.0
      %1979 = vmatprep.subr.mxu0 0.0
      %1980 = vmatpush1.msra.mxu0 0.0
      %1981 = vmatprep.subr.mxu0 0.0
      %1982 = vmatpush1.msra.mxu0 0.0
      %1983 = vmatprep.subr.mxu0 0.0
      %1984 = vmatpush1.msra.mxu0 0.0
      %1985 = vmatprep.subr.mxu0 0.0
      %1986 = vmatpush1.msra.mxu0 0.0
      %1987 = vmatprep.subr.mxu0 0.0
      %1988 = vmatpush1.msra.mxu0 0.0
      %1989 = vmatprep.subr.mxu0 0.0
      %1990 = vmatpush1.msra.mxu0 0.0
      %1991 = vmatprep.subr.mxu0 0.0
      %1992 = vmatpush1.msra.mxu0 0.0
      %1993 = vmatprep.subr.mxu0 0.0
      %1994 = vmatpush1.msra.mxu0 0.0
      %1995 = vmatprep.subr.mxu0 0.0
      %1996 = vmatpush1.msra.mxu0 0.0
      %1997 = vmatprep.subr.mxu0 0.0
      %1998 = vmatpush1.msra.mxu0 0.0
      %1999 = vmatprep.subr.mxu0 0.0
      %2000 = vmatpush1.msra.mxu0 0.0
      %2001 = vmatprep.subr.mxu0 0.0
      %2002 = vmatpush1.msra.mxu0 0.0
      %2003 = vmatprep.subr.mxu0 0.0
      %2004 = vmatpush1.msra.mxu0 0.0
      %2005 = vmatprep.mubr.f32.mxu0 0.0
      %v2006 = vand.u32 %v174, 4294901760
      %2007 = vmatmul.mubr.f32.gmra.mrb[0].mxu0 %v2006
      %v2008 = vpop.f32.mrb[0].mxu0
      %v2009 = vadd.f32 %v1905, %v2008
      %v2010 = vpop.f32.mrb[0].mxu0
      %v2011 = vadd.f32 %v1907, %v2010
      %2012 = vdwg.mxu0
      %v2013 = vand.u32 %v180, 4294901760
      %2014 = vmatprep.subr.mxu0 %v2013
      %v2015 = vand.u32 %v179, 4294901760
      %2016 = vmatpush1.msra.mxu0 %v2015
      %v2017 = vand.u32 %v188, 4294901760
      %2018 = vmatprep.subr.mxu0 %v2017
      %v2019 = vand.u32 %v187, 4294901760
      %2020 = vmatpush1.msra.mxu0 %v2019
      %v2021 = vand.u32 %v196, 4294901760
      %2022 = vmatprep.subr.mxu0 %v2021
      %v2023 = vand.u32 %v195, 4294901760
      %2024 = vmatpush1.msra.mxu0 %v2023
      %v2025 = vand.u32 %v204, 4294901760
      %2026 = vmatprep.subr.mxu0 %v2025
      %v2027 = vand.u32 %v203, 4294901760
      %2028 = vmatpush1.msra.mxu0 %v2027
      %v2029 = vand.u32 %v212, 4294901760
      %2030 = vmatprep.subr.mxu0 %v2029
      %v2031 = vand.u32 %v211, 4294901760
      %2032 = vmatpush1.msra.mxu0 %v2031
      %v2033 = vand.u32 %v220, 4294901760
      %2034 = vmatprep.subr.mxu0 %v2033
      %v2035 = vand.u32 %v219, 4294901760
      %2036 = vmatpush1.msra.mxu0 %v2035
      %v2037 = vand.u32 %v228, 4294901760
      %2038 = vmatprep.subr.mxu0 %v2037
      %v2039 = vand.u32 %v227, 4294901760
      %2040 = vmatpush1.msra.mxu0 %v2039
      %v2041 = vand.u32 %v236, 4294901760
      %2042 = vmatprep.subr.mxu0 %v2041
      %v2043 = vand.u32 %v235, 4294901760
      %2044 = vmatpush1.msra.mxu0 %v2043
      %v2045 = vand.u32 %v244, 4294901760
      %2046 = vmatprep.subr.mxu0 %v2045
      %v2047 = vand.u32 %v243, 4294901760
      %2048 = vmatpush1.msra.mxu0 %v2047
      %v2049 = vand.u32 %v252, 4294901760
      %2050 = vmatprep.subr.mxu0 %v2049
      %v2051 = vand.u32 %v251, 4294901760
      %2052 = vmatpush1.msra.mxu0 %v2051
      %v2053 = vand.u32 %v260, 4294901760
      %2054 = vmatprep.subr.mxu0 %v2053
      %v2055 = vand.u32 %v259, 4294901760
      %2056 = vmatpush1.msra.mxu0 %v2055
      %v2057 = vand.u32 %v268, 4294901760
      %2058 = vmatprep.subr.mxu0 %v2057
      %v2059 = vand.u32 %v267, 4294901760
      %2060 = vmatpush1.msra.mxu0 %v2059
      %v2061 = vand.u32 %v276, 4294901760
      %2062 = vmatprep.subr.mxu0 %v2061
      %v2063 = vand.u32 %v275, 4294901760
      %2064 = vmatpush1.msra.mxu0 %v2063
      %v2065 = vand.u32 %v284, 4294901760
      %2066 = vmatprep.subr.mxu0 %v2065
      %v2067 = vand.u32 %v283, 4294901760
      %2068 = vmatpush1.msra.mxu0 %v2067
      %v2069 = vand.u32 %v292, 4294901760
      %2070 = vmatprep.subr.mxu0 %v2069
      %v2071 = vand.u32 %v291, 4294901760
      %2072 = vmatpush1.msra.mxu0 %v2071
      %v2073 = vand.u32 %v300, 4294901760
      %2074 = vmatprep.subr.mxu0 %v2073
      %v2075 = vand.u32 %v299, 4294901760
      %2076 = vmatpush1.msra.mxu0 %v2075
      %2077 = vmatprep.subr.mxu0 0.0
      %2078 = vmatpush1.msra.mxu0 0.0
      %2079 = vmatprep.subr.mxu0 0.0
      %2080 = vmatpush1.msra.mxu0 0.0
      %2081 = vmatprep.subr.mxu0 0.0
      %2082 = vmatpush1.msra.mxu0 0.0
      %2083 = vmatprep.subr.mxu0 0.0
      %2084 = vmatpush1.msra.mxu0 0.0
      %2085 = vmatprep.subr.mxu0 0.0
      %2086 = vmatpush1.msra.mxu0 0.0
      %2087 = vmatprep.subr.mxu0 0.0
      %2088 = vmatpush1.msra.mxu0 0.0
      %2089 = vmatprep.subr.mxu0 0.0
      %2090 = vmatpush1.msra.mxu0 0.0
      %2091 = vmatprep.subr.mxu0 0.0
      %2092 = vmatpush1.msra.mxu0 0.0
      %2093 = vmatprep.subr.mxu0 0.0
      %2094 = vmatpush1.msra.mxu0 0.0
      %2095 = vmatprep.subr.mxu0 0.0
      %2096 = vmatpush1.msra.mxu0 0.0
      %2097 = vmatprep.subr.mxu0 0.0
      %2098 = vmatpush1.msra.mxu0 0.0
      %2099 = vmatprep.subr.mxu0 0.0
      %2100 = vmatpush1.msra.mxu0 0.0
      %2101 = vmatprep.subr.mxu0 0.0
      %2102 = vmatpush1.msra.mxu0 0.0
      %2103 = vmatprep.subr.mxu0 0.0
      %2104 = vmatpush1.msra.mxu0 0.0
      %2105 = vmatprep.subr.mxu0 0.0
      %2106 = vmatpush1.msra.mxu0 0.0
      %2107 = vmatprep.subr.mxu0 0.0
      %2108 = vmatpush1.msra.mxu0 0.0
      %2109 = vmatprep.mubr.f32.mxu0 0.0
      %v2110 = vand.u32 %v174, 4294901760
      %v2111 = vsub.f32 %v174, %v2110
      %v2112 = vand.u32 %v2111, 4294901760
      %v2113 = vsub.f32 %v2111, %v2112
      %v2114 = vand.u32 %v2113, 4294901760
      %2115 = vmatmul.mubr.f32.gmra.mrb[0].mxu0 %v2114
      %v2116 = vpop.f32.mrb[0].mxu0
      %v2117 = vadd.f32 0.0, %v2116
      %v2118 = vpop.f32.mrb[0].mxu0
      %v2119 = vadd.f32 0.0, %v2118
      %2120 = vdwg.mxu0
      %v2121 = vand.u32 %v180, 4294901760
      %v2122 = vsub.f32 %v180, %v2121
      %v2123 = vand.u32 %v2122, 4294901760
      %v2124 = vsub.f32 %v2122, %v2123
      %v2125 = vand.u32 %v2124, 4294901760
      %2126 = vmatprep.subr.mxu0 %v2125
      %v2127 = vand.u32 %v179, 4294901760
      %v2128 = vsub.f32 %v179, %v2127
      %v2129 = vand.u32 %v2128, 4294901760
      %v2130 = vsub.f32 %v2128, %v2129
      %v2131 = vand.u32 %v2130, 4294901760
      %2132 = vmatpush1.msra.mxu0 %v2131
      %v2133 = vand.u32 %v188, 4294901760
      %v2134 = vsub.f32 %v188, %v2133
      %v2135 = vand.u32 %v2134, 4294901760
      %v2136 = vsub.f32 %v2134, %v2135
      %v2137 = vand.u32 %v2136, 4294901760
      %2138 = vmatprep.subr.mxu0 %v2137
      %v2139 = vand.u32 %v187, 4294901760
      %v2140 = vsub.f32 %v187, %v2139
      %v2141 = vand.u32 %v2140, 4294901760
      %v2142 = vsub.f32 %v2140, %v2141
      %v2143 = vand.u32 %v2142, 4294901760
      %2144 = vmatpush1.msra.mxu0 %v2143
      %v2145 = vand.u32 %v196, 4294901760
      %v2146 = vsub.f32 %v196, %v2145
      %v2147 = vand.u32 %v2146, 4294901760
      %v2148 = vsub.f32 %v2146, %v2147
      %v2149 = vand.u32 %v2148, 4294901760
      %2150 = vmatprep.subr.mxu0 %v2149
      %v2151 = vand.u32 %v195, 4294901760
      %v2152 = vsub.f32 %v195, %v2151
      %v2153 = vand.u32 %v2152, 4294901760
      %v2154 = vsub.f32 %v2152, %v2153
      %v2155 = vand.u32 %v2154, 4294901760
      %2156 = vmatpush1.msra.mxu0 %v2155
      %v2157 = vand.u32 %v204, 4294901760
      %v2158 = vsub.f32 %v204, %v2157
      %v2159 = vand.u32 %v2158, 4294901760
      %v2160 = vsub.f32 %v2158, %v2159
      %v2161 = vand.u32 %v2160, 4294901760
      %2162 = vmatprep.subr.mxu0 %v2161
      %v2163 = vand.u32 %v203, 4294901760
      %v2164 = vsub.f32 %v203, %v2163
      %v2165 = vand.u32 %v2164, 4294901760
      %v2166 = vsub.f32 %v2164, %v2165
      %v2167 = vand.u32 %v2166, 4294901760
      %2168 = vmatpush1.msra.mxu0 %v2167
      %v2169 = vand.u32 %v212, 4294901760
      %v2170 = vsub.f32 %v212, %v2169
      %v2171 = vand.u32 %v2170, 4294901760
      %v2172 = vsub.f32 %v2170, %v2171
      %v2173 = vand.u32 %v2172, 4294901760
      %2174 = vmatprep.subr.mxu0 %v2173
      %v2175 = vand.u32 %v211, 4294901760
      %v2176 = vsub.f32 %v211, %v2175
      %v2177 = vand.u32 %v2176, 4294901760
      %v2178 = vsub.f32 %v2176, %v2177
      %v2179 = vand.u32 %v2178, 4294901760
      %2180 = vmatpush1.msra.mxu0 %v2179
      %v2181 = vand.u32 %v220, 4294901760
      %v2182 = vsub.f32 %v220, %v2181
      %v2183 = vand.u32 %v2182, 4294901760
      %v2184 = vsub.f32 %v2182, %v2183
      %v2185 = vand.u32 %v2184, 4294901760
      %2186 = vmatprep.subr.mxu0 %v2185
      %v2187 = vand.u32 %v219, 4294901760
      %v2188 = vsub.f32 %v219, %v2187
      %v2189 = vand.u32 %v2188, 4294901760
      %v2190 = vsub.f32 %v2188, %v2189
      %v2191 = vand.u32 %v2190, 4294901760
      %2192 = vmatpush1.msra.mxu0 %v2191
      %v2193 = vand.u32 %v228, 4294901760
      %v2194 = vsub.f32 %v228, %v2193
      %v2195 = vand.u32 %v2194, 4294901760
      %v2196 = vsub.f32 %v2194, %v2195
      %v2197 = vand.u32 %v2196, 4294901760
      %2198 = vmatprep.subr.mxu0 %v2197
      %v2199 = vand.u32 %v227, 4294901760
      %v2200 = vsub.f32 %v227, %v2199
      %v2201 = vand.u32 %v2200, 4294901760
      %v2202 = vsub.f32 %v2200, %v2201
      %v2203 = vand.u32 %v2202, 4294901760
      %2204 = vmatpush1.msra.mxu0 %v2203
      %v2205 = vand.u32 %v236, 4294901760
      %v2206 = vsub.f32 %v236, %v2205
      %v2207 = vand.u32 %v2206, 4294901760
      %v2208 = vsub.f32 %v2206, %v2207
      %v2209 = vand.u32 %v2208, 4294901760
      %2210 = vmatprep.subr.mxu0 %v2209
      %v2211 = vand.u32 %v235, 4294901760
      %v2212 = vsub.f32 %v235, %v2211
      %v2213 = vand.u32 %v2212, 4294901760
      %v2214 = vsub.f32 %v2212, %v2213
      %v2215 = vand.u32 %v2214, 4294901760
      %2216 = vmatpush1.msra.mxu0 %v2215
      %v2217 = vand.u32 %v244, 4294901760
      %v2218 = vsub.f32 %v244, %v2217
      %v2219 = vand.u32 %v2218, 4294901760
      %v2220 = vsub.f32 %v2218, %v2219
      %v2221 = vand.u32 %v2220, 4294901760
      %2222 = vmatprep.subr.mxu0 %v2221
      %v2223 = vand.u32 %v243, 4294901760
      %v2224 = vsub.f32 %v243, %v2223
      %v2225 = vand.u32 %v2224, 4294901760
      %v2226 = vsub.f32 %v2224, %v2225
      %v2227 = vand.u32 %v2226, 4294901760
      %2228 = vmatpush1.msra.mxu0 %v2227
      %v2229 = vand.u32 %v252, 4294901760
      %v2230 = vsub.f32 %v252, %v2229
      %v2231 = vand.u32 %v2230, 4294901760
      %v2232 = vsub.f32 %v2230, %v2231
      %v2233 = vand.u32 %v2232, 4294901760
      %2234 = vmatprep.subr.mxu0 %v2233
      %v2235 = vand.u32 %v251, 4294901760
      %v2236 = vsub.f32 %v251, %v2235
      %v2237 = vand.u32 %v2236, 4294901760
      %v2238 = vsub.f32 %v2236, %v2237
      %v2239 = vand.u32 %v2238, 4294901760
      %2240 = vmatpush1.msra.mxu0 %v2239
      %v2241 = vand.u32 %v260, 4294901760
      %v2242 = vsub.f32 %v260, %v2241
      %v2243 = vand.u32 %v2242, 4294901760
      %v2244 = vsub.f32 %v2242, %v2243
      %v2245 = vand.u32 %v2244, 4294901760
      %2246 = vmatprep.subr.mxu0 %v2245
      %v2247 = vand.u32 %v259, 4294901760
      %v2248 = vsub.f32 %v259, %v2247
      %v2249 = vand.u32 %v2248, 4294901760
      %v2250 = vsub.f32 %v2248, %v2249
      %v2251 = vand.u32 %v2250, 4294901760
      %2252 = vmatpush1.msra.mxu0 %v2251
      %v2253 = vand.u32 %v268, 4294901760
      %v2254 = vsub.f32 %v268, %v2253
      %v2255 = vand.u32 %v2254, 4294901760
      %v2256 = vsub.f32 %v2254, %v2255
      %v2257 = vand.u32 %v2256, 4294901760
      %2258 = vmatprep.subr.mxu0 %v2257
      %v2259 = vand.u32 %v267, 4294901760
      %v2260 = vsub.f32 %v267, %v2259
      %v2261 = vand.u32 %v2260, 4294901760
      %v2262 = vsub.f32 %v2260, %v2261
      %v2263 = vand.u32 %v2262, 4294901760
      %2264 = vmatpush1.msra.mxu0 %v2263
      %v2265 = vand.u32 %v276, 4294901760
      %v2266 = vsub.f32 %v276, %v2265
      %v2267 = vand.u32 %v2266, 4294901760
      %v2268 = vsub.f32 %v2266, %v2267
      %v2269 = vand.u32 %v2268, 4294901760
      %2270 = vmatprep.subr.mxu0 %v2269
      %v2271 = vand.u32 %v275, 4294901760
      %v2272 = vsub.f32 %v275, %v2271
      %v2273 = vand.u32 %v2272, 4294901760
      %v2274 = vsub.f32 %v2272, %v2273
      %v2275 = vand.u32 %v2274, 4294901760
      %2276 = vmatpush1.msra.mxu0 %v2275
      %v2277 = vand.u32 %v284, 4294901760
      %v2278 = vsub.f32 %v284, %v2277
      %v2279 = vand.u32 %v2278, 4294901760
      %v2280 = vsub.f32 %v2278, %v2279
      %v2281 = vand.u32 %v2280, 4294901760
      %2282 = vmatprep.subr.mxu0 %v2281
      %v2283 = vand.u32 %v283, 4294901760
      %v2284 = vsub.f32 %v283, %v2283
      %v2285 = vand.u32 %v2284, 4294901760
      %v2286 = vsub.f32 %v2284, %v2285
      %v2287 = vand.u32 %v2286, 4294901760
      %2288 = vmatpush1.msra.mxu0 %v2287
      %v2289 = vand.u32 %v292, 4294901760
      %v2290 = vsub.f32 %v292, %v2289
      %v2291 = vand.u32 %v2290, 4294901760
      %v2292 = vsub.f32 %v2290, %v2291
      %v2293 = vand.u32 %v2292, 4294901760
      %2294 = vmatprep.subr.mxu0 %v2293
      %v2295 = vand.u32 %v291, 4294901760
      %v2296 = vsub.f32 %v291, %v2295
      %v2297 = vand.u32 %v2296, 4294901760
      %v2298 = vsub.f32 %v2296, %v2297
      %v2299 = vand.u32 %v2298, 4294901760
      %2300 = vmatpush1.msra.mxu0 %v2299
      %v2301 = vand.u32 %v300, 4294901760
      %v2302 = vsub.f32 %v300, %v2301
      %v2303 = vand.u32 %v2302, 4294901760
      %v2304 = vsub.f32 %v2302, %v2303
      %v2305 = vand.u32 %v2304, 4294901760
      %2306 = vmatprep.subr.mxu0 %v2305
      %v2307 = vand.u32 %v299, 4294901760
      %v2308 = vsub.f32 %v299, %v2307
      %v2309 = vand.u32 %v2308, 4294901760
      %v2310 = vsub.f32 %v2308, %v2309
      %v2311 = vand.u32 %v2310, 4294901760
      %2312 = vmatpush1.msra.mxu0 %v2311
      %2313 = vmatprep.subr.mxu0 0.0
      %2314 = vmatpush1.msra.mxu0 0.0
      %2315 = vmatprep.subr.mxu0 0.0
      %2316 = vmatpush1.msra.mxu0 0.0
      %2317 = vmatprep.subr.mxu0 0.0
      %2318 = vmatpush1.msra.mxu0 0.0
      %2319 = vmatprep.subr.mxu0 0.0
      %2320 = vmatpush1.msra.mxu0 0.0
      %2321 = vmatprep.subr.mxu0 0.0
      %2322 = vmatpush1.msra.mxu0 0.0
      %2323 = vmatprep.subr.mxu0 0.0
      %2324 = vmatpush1.msra.mxu0 0.0
      %2325 = vmatprep.subr.mxu0 0.0
      %2326 = vmatpush1.msra.mxu0 0.0
      %2327 = vmatprep.subr.mxu0 0.0
      %2328 = vmatpush1.msra.mxu0 0.0
      %2329 = vmatprep.subr.mxu0 0.0
      %2330 = vmatpush1.msra.mxu0 0.0
      %2331 = vmatprep.subr.mxu0 0.0
      %2332 = vmatpush1.msra.mxu0 0.0
      %2333 = vmatprep.subr.mxu0 0.0
      %2334 = vmatpush1.msra.mxu0 0.0
      %2335 = vmatprep.subr.mxu0 0.0
      %2336 = vmatpush1.msra.mxu0 0.0
      %2337 = vmatprep.subr.mxu0 0.0
      %2338 = vmatpush1.msra.mxu0 0.0
      %2339 = vmatprep.subr.mxu0 0.0
      %2340 = vmatpush1.msra.mxu0 0.0
      %2341 = vmatprep.subr.mxu0 0.0
      %2342 = vmatpush1.msra.mxu0 0.0
      %2343 = vmatprep.subr.mxu0 0.0
      %2344 = vmatpush1.msra.mxu0 0.0
      %2345 = vmatprep.mubr.f32.mxu0 0.0
      %v2346 = vand.u32 %v174, 4294901760
      %2347 = vmatmul.mubr.f32.gmra.mrb[0].mxu0 %v2346
      %v2348 = vpop.f32.mrb[0].mxu0
      %v2349 = vadd.f32 %v2117, %v2348
      %v2350 = vpop.f32.mrb[0].mxu0
      %v2351 = vadd.f32 %v2119, %v2350
      %2352 = vdwg.mxu0
      %v2353 = vand.u32 %v180, 4294901760
      %v2354 = vsub.f32 %v180, %v2353
      %2355 = vmatprep.subr.mxu0 %v2354
      %v2356 = vand.u32 %v179, 4294901760
      %v2357 = vsub.f32 %v179, %v2356
      %2358 = vmatpush1.msra.mxu0 %v2357
      %v2359 = vand.u32 %v188, 4294901760
      %v2360 = vsub.f32 %v188, %v2359
      %2361 = vmatprep.subr.mxu0 %v2360
      %v2362 = vand.u32 %v187, 4294901760
      %v2363 = vsub.f32 %v187, %v2362
      %2364 = vmatpush1.msra.mxu0 %v2363
      %v2365 = vand.u32 %v196, 4294901760
      %v2366 = vsub.f32 %v196, %v2365
      %2367 = vmatprep.subr.mxu0 %v2366
      %v2368 = vand.u32 %v195, 4294901760
      %v2369 = vsub.f32 %v195, %v2368
      %2370 = vmatpush1.msra.mxu0 %v2369
      %v2371 = vand.u32 %v204, 4294901760
      %v2372 = vsub.f32 %v204, %v2371
      %2373 = vmatprep.subr.mxu0 %v2372
      %v2374 = vand.u32 %v203, 4294901760
      %v2375 = vsub.f32 %v203, %v2374
      %2376 = vmatpush1.msra.mxu0 %v2375
      %v2377 = vand.u32 %v212, 4294901760
      %v2378 = vsub.f32 %v212, %v2377
      %2379 = vmatprep.subr.mxu0 %v2378
      %v2380 = vand.u32 %v211, 4294901760
      %v2381 = vsub.f32 %v211, %v2380
      %2382 = vmatpush1.msra.mxu0 %v2381
      %v2383 = vand.u32 %v220, 4294901760
      %v2384 = vsub.f32 %v220, %v2383
      %2385 = vmatprep.subr.mxu0 %v2384
      %v2386 = vand.u32 %v219, 4294901760
      %v2387 = vsub.f32 %v219, %v2386
      %2388 = vmatpush1.msra.mxu0 %v2387
      %v2389 = vand.u32 %v228, 4294901760
      %v2390 = vsub.f32 %v228, %v2389
      %2391 = vmatprep.subr.mxu0 %v2390
      %v2392 = vand.u32 %v227, 4294901760
      %v2393 = vsub.f32 %v227, %v2392
      %2394 = vmatpush1.msra.mxu0 %v2393
      %v2395 = vand.u32 %v236, 4294901760
      %v2396 = vsub.f32 %v236, %v2395
      %2397 = vmatprep.subr.mxu0 %v2396
      %v2398 = vand.u32 %v235, 4294901760
      %v2399 = vsub.f32 %v235, %v2398
      %2400 = vmatpush1.msra.mxu0 %v2399
      %v2401 = vand.u32 %v244, 4294901760
      %v2402 = vsub.f32 %v244, %v2401
      %2403 = vmatprep.subr.mxu0 %v2402
      %v2404 = vand.u32 %v243, 4294901760
      %v2405 = vsub.f32 %v243, %v2404
      %2406 = vmatpush1.msra.mxu0 %v2405
      %v2407 = vand.u32 %v252, 4294901760
      %v2408 = vsub.f32 %v252, %v2407
      %2409 = vmatprep.subr.mxu0 %v2408
      %v2410 = vand.u32 %v251, 4294901760
      %v2411 = vsub.f32 %v251, %v2410
      %2412 = vmatpush1.msra.mxu0 %v2411
      %v2413 = vand.u32 %v260, 4294901760
      %v2414 = vsub.f32 %v260, %v2413
      %2415 = vmatprep.subr.mxu0 %v2414
      %v2416 = vand.u32 %v259, 4294901760
      %v2417 = vsub.f32 %v259, %v2416
      %2418 = vmatpush1.msra.mxu0 %v2417
      %v2419 = vand.u32 %v268, 4294901760
      %v2420 = vsub.f32 %v268, %v2419
      %2421 = vmatprep.subr.mxu0 %v2420
      %v2422 = vand.u32 %v267, 4294901760
      %v2423 = vsub.f32 %v267, %v2422
      %2424 = vmatpush1.msra.mxu0 %v2423
      %v2425 = vand.u32 %v276, 4294901760
      %v2426 = vsub.f32 %v276, %v2425
      %2427 = vmatprep.subr.mxu0 %v2426
      %v2428 = vand.u32 %v275, 4294901760
      %v2429 = vsub.f32 %v275, %v2428
      %2430 = vmatpush1.msra.mxu0 %v2429
      %v2431 = vand.u32 %v284, 4294901760
      %v2432 = vsub.f32 %v284, %v2431
      %2433 = vmatprep.subr.mxu0 %v2432
      %v2434 = vand.u32 %v283, 4294901760
      %v2435 = vsub.f32 %v283, %v2434
      %2436 = vmatpush1.msra.mxu0 %v2435
      %v2437 = vand.u32 %v292, 4294901760
      %v2438 = vsub.f32 %v292, %v2437
      %2439 = vmatprep.subr.mxu0 %v2438
      %v2440 = vand.u32 %v291, 4294901760
      %v2441 = vsub.f32 %v291, %v2440
      %2442 = vmatpush1.msra.mxu0 %v2441
      %v2443 = vand.u32 %v300, 4294901760
      %v2444 = vsub.f32 %v300, %v2443
      %2445 = vmatprep.subr.mxu0 %v2444
      %v2446 = vand.u32 %v299, 4294901760
      %v2447 = vsub.f32 %v299, %v2446
      %2448 = vmatpush1.msra.mxu0 %v2447
      %2449 = vmatprep.subr.mxu0 0.0
      %2450 = vmatpush1.msra.mxu0 0.0
      %2451 = vmatprep.subr.mxu0 0.0
      %2452 = vmatpush1.msra.mxu0 0.0
      %2453 = vmatprep.subr.mxu0 0.0
      %2454 = vmatpush1.msra.mxu0 0.0
      %2455 = vmatprep.subr.mxu0 0.0
      %2456 = vmatpush1.msra.mxu0 0.0
      %2457 = vmatprep.subr.mxu0 0.0
      %2458 = vmatpush1.msra.mxu0 0.0
      %2459 = vmatprep.subr.mxu0 0.0
      %2460 = vmatpush1.msra.mxu0 0.0
      %2461 = vmatprep.subr.mxu0 0.0
      %2462 = vmatpush1.msra.mxu0 0.0
      %2463 = vmatprep.subr.mxu0 0.0
      %2464 = vmatpush1.msra.mxu0 0.0
      %2465 = vmatprep.subr.mxu0 0.0
      %2466 = vmatpush1.msra.mxu0 0.0
      %2467 = vmatprep.subr.mxu0 0.0
      %2468 = vmatpush1.msra.mxu0 0.0
      %2469 = vmatprep.subr.mxu0 0.0
      %2470 = vmatpush1.msra.mxu0 0.0
      %2471 = vmatprep.subr.mxu0 0.0
      %2472 = vmatpush1.msra.mxu0 0.0
      %2473 = vmatprep.subr.mxu0 0.0
      %2474 = vmatpush1.msra.mxu0 0.0
      %2475 = vmatprep.subr.mxu0 0.0
      %2476 = vmatpush1.msra.mxu0 0.0
      %2477 = vmatprep.subr.mxu0 0.0
      %2478 = vmatpush1.msra.mxu0 0.0
      %2479 = vmatprep.subr.mxu0 0.0
      %2480 = vmatpush1.msra.mxu0 0.0
      %2481 = vmatprep.mubr.f32.mxu0 0.0
      %v2482 = vand.u32 %v174, 4294901760
      %v2483 = vsub.f32 %v174, %v2482
      %2484 = vmatmul.mubr.f32.gmra.mrb[0].mxu0 %v2483
      %v2485 = vpop.f32.mrb[0].mxu0
      %v2486 = vadd.f32 %v2349, %v2485
      %v2487 = vpop.f32.mrb[0].mxu0
      %v2488 = vadd.f32 %v2351, %v2487
      %2489 = vdwg.mxu0
      %v2490 = vand.u32 %v180, 4294901760
      %2491 = vmatprep.subr.mxu0 %v2490
      %v2492 = vand.u32 %v179, 4294901760
      %2493 = vmatpush1.msra.mxu0 %v2492
      %v2494 = vand.u32 %v188, 4294901760
      %2495 = vmatprep.subr.mxu0 %v2494
      %v2496 = vand.u32 %v187, 4294901760
      %2497 = vmatpush1.msra.mxu0 %v2496
      %v2498 = vand.u32 %v196, 4294901760
      %2499 = vmatprep.subr.mxu0 %v2498
      %v2500 = vand.u32 %v195, 4294901760
      %2501 = vmatpush1.msra.mxu0 %v2500
      %v2502 = vand.u32 %v204, 4294901760
      %2503 = vmatprep.subr.mxu0 %v2502
      %v2504 = vand.u32 %v203, 4294901760
      %2505 = vmatpush1.msra.mxu0 %v2504
      %v2506 = vand.u32 %v212, 4294901760
      %2507 = vmatprep.subr.mxu0 %v2506
      %v2508 = vand.u32 %v211, 4294901760
      %2509 = vmatpush1.msra.mxu0 %v2508
      %v2510 = vand.u32 %v220, 4294901760
      %2511 = vmatprep.subr.mxu0 %v2510
      %v2512 = vand.u32 %v219, 4294901760
      %2513 = vmatpush1.msra.mxu0 %v2512
      %v2514 = vand.u32 %v228, 4294901760
      %2515 = vmatprep.subr.mxu0 %v2514
      %v2516 = vand.u32 %v227, 4294901760
      %2517 = vmatpush1.msra.mxu0 %v2516
      %v2518 = vand.u32 %v236, 4294901760
      %2519 = vmatprep.subr.mxu0 %v2518
      %v2520 = vand.u32 %v235, 4294901760
      %2521 = vmatpush1.msra.mxu0 %v2520
      %v2522 = vand.u32 %v244, 4294901760
      %2523 = vmatprep.subr.mxu0 %v2522
      %v2524 = vand.u32 %v243, 4294901760
      %2525 = vmatpush1.msra.mxu0 %v2524
      %v2526 = vand.u32 %v252, 4294901760
      %2527 = vmatprep.subr.mxu0 %v2526
      %v2528 = vand.u32 %v251, 4294901760
      %2529 = vmatpush1.msra.mxu0 %v2528
      %v2530 = vand.u32 %v260, 4294901760
      %2531 = vmatprep.subr.mxu0 %v2530
      %v2532 = vand.u32 %v259, 4294901760
      %2533 = vmatpush1.msra.mxu0 %v2532
      %v2534 = vand.u32 %v268, 4294901760
      %2535 = vmatprep.subr.mxu0 %v2534
      %v2536 = vand.u32 %v267, 4294901760
      %2537 = vmatpush1.msra.mxu0 %v2536
      %v2538 = vand.u32 %v276, 4294901760
      %2539 = vmatprep.subr.mxu0 %v2538
      %v2540 = vand.u32 %v275, 4294901760
      %2541 = vmatpush1.msra.mxu0 %v2540
      %v2542 = vand.u32 %v284, 4294901760
      %2543 = vmatprep.subr.mxu0 %v2542
      %v2544 = vand.u32 %v283, 4294901760
      %2545 = vmatpush1.msra.mxu0 %v2544
      %v2546 = vand.u32 %v292, 4294901760
      %2547 = vmatprep.subr.mxu0 %v2546
      %v2548 = vand.u32 %v291, 4294901760
      %2549 = vmatpush1.msra.mxu0 %v2548
      %v2550 = vand.u32 %v300, 4294901760
      %2551 = vmatprep.subr.mxu0 %v2550
      %v2552 = vand.u32 %v299, 4294901760
      %2553 = vmatpush1.msra.mxu0 %v2552
      %2554 = vmatprep.subr.mxu0 0.0
      %2555 = vmatpush1.msra.mxu0 0.0
      %2556 = vmatprep.subr.mxu0 0.0
      %2557 = vmatpush1.msra.mxu0 0.0
      %2558 = vmatprep.subr.mxu0 0.0
      %2559 = vmatpush1.msra.mxu0 0.0
      %2560 = vmatprep.subr.mxu0 0.0
      %2561 = vmatpush1.msra.mxu0 0.0
      %2562 = vmatprep.subr.mxu0 0.0
      %2563 = vmatpush1.msra.mxu0 0.0
      %2564 = vmatprep.subr.mxu0 0.0
      %2565 = vmatpush1.msra.mxu0 0.0
      %2566 = vmatprep.subr.mxu0 0.0
      %2567 = vmatpush1.msra.mxu0 0.0
      %2568 = vmatprep.subr.mxu0 0.0
      %2569 = vmatpush1.msra.mxu0 0.0
      %2570 = vmatprep.subr.mxu0 0.0
      %2571 = vmatpush1.msra.mxu0 0.0
      %2572 = vmatprep.subr.mxu0 0.0
      %2573 = vmatpush1.msra.mxu0 0.0
      %2574 = vmatprep.subr.mxu0 0.0
      %2575 = vmatpush1.msra.mxu0 0.0
      %2576 = vmatprep.subr.mxu0 0.0
      %2577 = vmatpush1.msra.mxu0 0.0
      %2578 = vmatprep.subr.mxu0 0.0
      %2579 = vmatpush1.msra.mxu0 0.0
      %2580 = vmatprep.subr.mxu0 0.0
      %2581 = vmatpush1.msra.mxu0 0.0
      %2582 = vmatprep.subr.mxu0 0.0
      %2583 = vmatpush1.msra.mxu0 0.0
      %2584 = vmatprep.subr.mxu0 0.0
      %2585 = vmatpush1.msra.mxu0 0.0
      %2586 = vmatprep.mubr.f32.mxu0 0.0
      %v2587 = vand.u32 %v174, 4294901760
      %v2588 = vsub.f32 %v174, %v2587
      %v2589 = vand.u32 %v2588, 4294901760
      %2590 = vmatmul.mubr.f32.gmra.mrb[0].mxu0 %v2589
      %v2591 = vpop.f32.mrb[0].mxu0
      %v2592 = vadd.f32 %v2486, %v2591
      %v2593 = vpop.f32.mrb[0].mxu0
      %v2594 = vadd.f32 %v2488, %v2593
      %2595 = vdwg.mxu0
      %v2596 = vand.u32 %v180, 4294901760
      %v2597 = vsub.f32 %v180, %v2596
      %v2598 = vand.u32 %v2597, 4294901760
      %2599 = vmatprep.subr.mxu0 %v2598
      %v2600 = vand.u32 %v179, 4294901760
      %v2601 = vsub.f32 %v179, %v2600
      %v2602 = vand.u32 %v2601, 4294901760
      %2603 = vmatpush1.msra.mxu0 %v2602
      %v2604 = vand.u32 %v188, 4294901760
      %v2605 = vsub.f32 %v188, %v2604
      %v2606 = vand.u32 %v2605, 4294901760
      %2607 = vmatprep.subr.mxu0 %v2606
      %v2608 = vand.u32 %v187, 4294901760
      %v2609 = vsub.f32 %v187, %v2608
      %v2610 = vand.u32 %v2609, 4294901760
      %2611 = vmatpush1.msra.mxu0 %v2610
      %v2612 = vand.u32 %v196, 4294901760
      %v2613 = vsub.f32 %v196, %v2612
      %v2614 = vand.u32 %v2613, 4294901760
      %2615 = vmatprep.subr.mxu0 %v2614
      %v2616 = vand.u32 %v195, 4294901760
      %v2617 = vsub.f32 %v195, %v2616
      %v2618 = vand.u32 %v2617, 4294901760
      %2619 = vmatpush1.msra.mxu0 %v2618
      %v2620 = vand.u32 %v204, 4294901760
      %v2621 = vsub.f32 %v204, %v2620
      %v2622 = vand.u32 %v2621, 4294901760
      %2623 = vmatprep.subr.mxu0 %v2622
      %v2624 = vand.u32 %v203, 4294901760
      %v2625 = vsub.f32 %v203, %v2624
      %v2626 = vand.u32 %v2625, 4294901760
      %2627 = vmatpush1.msra.mxu0 %v2626
      %v2628 = vand.u32 %v212, 4294901760
      %v2629 = vsub.f32 %v212, %v2628
      %v2630 = vand.u32 %v2629, 4294901760
      %2631 = vmatprep.subr.mxu0 %v2630
      %v2632 = vand.u32 %v211, 4294901760
      %v2633 = vsub.f32 %v211, %v2632
      %v2634 = vand.u32 %v2633, 4294901760
      %2635 = vmatpush1.msra.mxu0 %v2634
      %v2636 = vand.u32 %v220, 4294901760
      %v2637 = vsub.f32 %v220, %v2636
      %v2638 = vand.u32 %v2637, 4294901760
      %2639 = vmatprep.subr.mxu0 %v2638
      %v2640 = vand.u32 %v219, 4294901760
      %v2641 = vsub.f32 %v219, %v2640
      %v2642 = vand.u32 %v2641, 4294901760
      %2643 = vmatpush1.msra.mxu0 %v2642
      %v2644 = vand.u32 %v228, 4294901760
      %v2645 = vsub.f32 %v228, %v2644
      %v2646 = vand.u32 %v2645, 4294901760
      %2647 = vmatprep.subr.mxu0 %v2646
      %v2648 = vand.u32 %v227, 4294901760
      %v2649 = vsub.f32 %v227, %v2648
      %v2650 = vand.u32 %v2649, 4294901760
      %2651 = vmatpush1.msra.mxu0 %v2650
      %v2652 = vand.u32 %v236, 4294901760
      %v2653 = vsub.f32 %v236, %v2652
      %v2654 = vand.u32 %v2653, 4294901760
      %2655 = vmatprep.subr.mxu0 %v2654
      %v2656 = vand.u32 %v235, 4294901760
      %v2657 = vsub.f32 %v235, %v2656
      %v2658 = vand.u32 %v2657, 4294901760
      %2659 = vmatpush1.msra.mxu0 %v2658
      %v2660 = vand.u32 %v244, 4294901760
      %v2661 = vsub.f32 %v244, %v2660
      %v2662 = vand.u32 %v2661, 4294901760
      %2663 = vmatprep.subr.mxu0 %v2662
      %v2664 = vand.u32 %v243, 4294901760
      %v2665 = vsub.f32 %v243, %v2664
      %v2666 = vand.u32 %v2665, 4294901760
      %2667 = vmatpush1.msra.mxu0 %v2666
      %v2668 = vand.u32 %v252, 4294901760
      %v2669 = vsub.f32 %v252, %v2668
      %v2670 = vand.u32 %v2669, 4294901760
      %2671 = vmatprep.subr.mxu0 %v2670
      %v2672 = vand.u32 %v251, 4294901760
      %v2673 = vsub.f32 %v251, %v2672
      %v2674 = vand.u32 %v2673, 4294901760
      %2675 = vmatpush1.msra.mxu0 %v2674
      %v2676 = vand.u32 %v260, 4294901760
      %v2677 = vsub.f32 %v260, %v2676
      %v2678 = vand.u32 %v2677, 4294901760
      %2679 = vmatprep.subr.mxu0 %v2678
      %v2680 = vand.u32 %v259, 4294901760
      %v2681 = vsub.f32 %v259, %v2680
      %v2682 = vand.u32 %v2681, 4294901760
      %2683 = vmatpush1.msra.mxu0 %v2682
      %v2684 = vand.u32 %v268, 4294901760
      %v2685 = vsub.f32 %v268, %v2684
      %v2686 = vand.u32 %v2685, 4294901760
      %2687 = vmatprep.subr.mxu0 %v2686
      %v2688 = vand.u32 %v267, 4294901760
      %v2689 = vsub.f32 %v267, %v2688
      %v2690 = vand.u32 %v2689, 4294901760
      %2691 = vmatpush1.msra.mxu0 %v2690
      %v2692 = vand.u32 %v276, 4294901760
      %v2693 = vsub.f32 %v276, %v2692
      %v2694 = vand.u32 %v2693, 4294901760
      %2695 = vmatprep.subr.mxu0 %v2694
      %v2696 = vand.u32 %v275, 4294901760
      %v2697 = vsub.f32 %v275, %v2696
      %v2698 = vand.u32 %v2697, 4294901760
      %2699 = vmatpush1.msra.mxu0 %v2698
      %v2700 = vand.u32 %v284, 4294901760
      %v2701 = vsub.f32 %v284, %v2700
      %v2702 = vand.u32 %v2701, 4294901760
      %2703 = vmatprep.subr.mxu0 %v2702
      %v2704 = vand.u32 %v283, 4294901760
      %v2705 = vsub.f32 %v283, %v2704
      %v2706 = vand.u32 %v2705, 4294901760
      %2707 = vmatpush1.msra.mxu0 %v2706
      %v2708 = vand.u32 %v292, 4294901760
      %v2709 = vsub.f32 %v292, %v2708
      %v2710 = vand.u32 %v2709, 4294901760
      %2711 = vmatprep.subr.mxu0 %v2710
      %v2712 = vand.u32 %v291, 4294901760
      %v2713 = vsub.f32 %v291, %v2712
      %v2714 = vand.u32 %v2713, 4294901760
      %2715 = vmatpush1.msra.mxu0 %v2714
      %v2716 = vand.u32 %v300, 4294901760
      %v2717 = vsub.f32 %v300, %v2716
      %v2718 = vand.u32 %v2717, 4294901760
      %2719 = vmatprep.subr.mxu0 %v2718
      %v2720 = vand.u32 %v299, 4294901760
      %v2721 = vsub.f32 %v299, %v2720
      %v2722 = vand.u32 %v2721, 4294901760
      %2723 = vmatpush1.msra.mxu0 %v2722
      %2724 = vmatprep.subr.mxu0 0.0
      %2725 = vmatpush1.msra.mxu0 0.0
      %2726 = vmatprep.subr.mxu0 0.0
      %2727 = vmatpush1.msra.mxu0 0.0
      %2728 = vmatprep.subr.mxu0 0.0
      %2729 = vmatpush1.msra.mxu0 0.0
      %2730 = vmatprep.subr.mxu0 0.0
      %2731 = vmatpush1.msra.mxu0 0.0
      %2732 = vmatprep.subr.mxu0 0.0
      %2733 = vmatpush1.msra.mxu0 0.0
      %2734 = vmatprep.subr.mxu0 0.0
      %2735 = vmatpush1.msra.mxu0 0.0
      %2736 = vmatprep.subr.mxu0 0.0
      %2737 = vmatpush1.msra.mxu0 0.0
      %2738 = vmatprep.subr.mxu0 0.0
      %2739 = vmatpush1.msra.mxu0 0.0
      %2740 = vmatprep.subr.mxu0 0.0
      %2741 = vmatpush1.msra.mxu0 0.0
      %2742 = vmatprep.subr.mxu0 0.0
      %2743 = vmatpush1.msra.mxu0 0.0
      %2744 = vmatprep.subr.mxu0 0.0
      %2745 = vmatpush1.msra.mxu0 0.0
      %2746 = vmatprep.subr.mxu0 0.0
      %2747 = vmatpush1.msra.mxu0 0.0
      %2748 = vmatprep.subr.mxu0 0.0
      %2749 = vmatpush1.msra.mxu0 0.0
      %2750 = vmatprep.subr.mxu0 0.0
      %2751 = vmatpush1.msra.mxu0 0.0
      %2752 = vmatprep.subr.mxu0 0.0
      %2753 = vmatpush1.msra.mxu0 0.0
      %2754 = vmatprep.subr.mxu0 0.0
      %2755 = vmatpush1.msra.mxu0 0.0
      %2756 = vmatprep.mubr.f32.mxu0 0.0
      %v2757 = vand.u32 %v174, 4294901760
      %2758 = vmatmul.mubr.f32.gmra.mrb[0].mxu0 %v2757
      %v2759 = vpop.f32.mrb[0].mxu0
      %v2760 = vadd.f32 %v2592, %v2759
      %v2761 = vpop.f32.mrb[0].mxu0
      %v2762 = vadd.f32 %v2594, %v2761
      %2763 = vdwg.mxu0
      %v2764 = vand.u32 %v180, 4294901760
      %2765 = vmatprep.subr.mxu0 %v2764
      %v2766 = vand.u32 %v179, 4294901760
      %2767 = vmatpush1.msra.mxu0 %v2766
      %v2768 = vand.u32 %v188, 4294901760
      %2769 = vmatprep.subr.mxu0 %v2768
      %v2770 = vand.u32 %v187, 4294901760
      %2771 = vmatpush1.msra.mxu0 %v2770
      %v2772 = vand.u32 %v196, 4294901760
      %2773 = vmatprep.subr.mxu0 %v2772
      %v2774 = vand.u32 %v195, 4294901760
      %2775 = vmatpush1.msra.mxu0 %v2774
      %v2776 = vand.u32 %v204, 4294901760
      %2777 = vmatprep.subr.mxu0 %v2776
      %v2778 = vand.u32 %v203, 4294901760
      %2779 = vmatpush1.msra.mxu0 %v2778
      %v2780 = vand.u32 %v212, 4294901760
      %2781 = vmatprep.subr.mxu0 %v2780
      %v2782 = vand.u32 %v211, 4294901760
      %2783 = vmatpush1.msra.mxu0 %v2782
      %v2784 = vand.u32 %v220, 4294901760
      %2785 = vmatprep.subr.mxu0 %v2784
      %v2786 = vand.u32 %v219, 4294901760
      %2787 = vmatpush1.msra.mxu0 %v2786
      %v2788 = vand.u32 %v228, 4294901760
      %2789 = vmatprep.subr.mxu0 %v2788
      %v2790 = vand.u32 %v227, 4294901760
      %2791 = vmatpush1.msra.mxu0 %v2790
      %v2792 = vand.u32 %v236, 4294901760
      %2793 = vmatprep.subr.mxu0 %v2792
      %v2794 = vand.u32 %v235, 4294901760
      %2795 = vmatpush1.msra.mxu0 %v2794
      %v2796 = vand.u32 %v244, 4294901760
      %2797 = vmatprep.subr.mxu0 %v2796
      %v2798 = vand.u32 %v243, 4294901760
      %2799 = vmatpush1.msra.mxu0 %v2798
      %v2800 = vand.u32 %v252, 4294901760
      %2801 = vmatprep.subr.mxu0 %v2800
      %v2802 = vand.u32 %v251, 4294901760
      %2803 = vmatpush1.msra.mxu0 %v2802
      %v2804 = vand.u32 %v260, 4294901760
      %2805 = vmatprep.subr.mxu0 %v2804
      %v2806 = vand.u32 %v259, 4294901760
      %2807 = vmatpush1.msra.mxu0 %v2806
      %v2808 = vand.u32 %v268, 4294901760
      %2809 = vmatprep.subr.mxu0 %v2808
      %v2810 = vand.u32 %v267, 4294901760
      %2811 = vmatpush1.msra.mxu0 %v2810
      %v2812 = vand.u32 %v276, 4294901760
      %2813 = vmatprep.subr.mxu0 %v2812
      %v2814 = vand.u32 %v275, 4294901760
      %2815 = vmatpush1.msra.mxu0 %v2814
      %v2816 = vand.u32 %v284, 4294901760
      %2817 = vmatprep.subr.mxu0 %v2816
      %v2818 = vand.u32 %v283, 4294901760
      %2819 = vmatpush1.msra.mxu0 %v2818
      %v2820 = vand.u32 %v292, 4294901760
      %2821 = vmatprep.subr.mxu0 %v2820
      %v2822 = vand.u32 %v291, 4294901760
      %2823 = vmatpush1.msra.mxu0 %v2822
      %v2824 = vand.u32 %v300, 4294901760
      %2825 = vmatprep.subr.mxu0 %v2824
      %v2826 = vand.u32 %v299, 4294901760
      %2827 = vmatpush1.msra.mxu0 %v2826
      %2828 = vmatprep.subr.mxu0 0.0
      %2829 = vmatpush1.msra.mxu0 0.0
      %2830 = vmatprep.subr.mxu0 0.0
      %2831 = vmatpush1.msra.mxu0 0.0
      %2832 = vmatprep.subr.mxu0 0.0
      %2833 = vmatpush1.msra.mxu0 0.0
      %2834 = vmatprep.subr.mxu0 0.0
      %2835 = vmatpush1.msra.mxu0 0.0
      %2836 = vmatprep.subr.mxu0 0.0
      %2837 = vmatpush1.msra.mxu0 0.0
      %2838 = vmatprep.subr.mxu0 0.0
      %2839 = vmatpush1.msra.mxu0 0.0
      %2840 = vmatprep.subr.mxu0 0.0
      %2841 = vmatpush1.msra.mxu0 0.0
      %2842 = vmatprep.subr.mxu0 0.0
      %2843 = vmatpush1.msra.mxu0 0.0
      %2844 = vmatprep.subr.mxu0 0.0
      %2845 = vmatpush1.msra.mxu0 0.0
      %2846 = vmatprep.subr.mxu0 0.0
      %2847 = vmatpush1.msra.mxu0 0.0
      %2848 = vmatprep.subr.mxu0 0.0
      %2849 = vmatpush1.msra.mxu0 0.0
      %2850 = vmatprep.subr.mxu0 0.0
      %2851 = vmatpush1.msra.mxu0 0.0
      %2852 = vmatprep.subr.mxu0 0.0
      %2853 = vmatpush1.msra.mxu0 0.0
      %2854 = vmatprep.subr.mxu0 0.0
      %2855 = vmatpush1.msra.mxu0 0.0
      %2856 = vmatprep.subr.mxu0 0.0
      %2857 = vmatpush1.msra.mxu0 0.0
      %2858 = vmatprep.subr.mxu0 0.0
      %2859 = vmatpush1.msra.mxu0 0.0
      %2860 = vmatprep.mubr.f32.mxu0 0.0
      %v2861 = vand.u32 %v174, 4294901760
      %2862 = vmatmul.mubr.f32.gmra.mrb[0].mxu0 %v2861
      %v2863 = vpop.f32.mrb[0].mxu0
      %v2864 = vadd.f32 %v2760, %v2863
      %v2865 = vpop.f32.mrb[0].mxu0
      %v2866 = vadd.f32 %v2762, %v2865
      %2867 = vdwg.mxu0
      %v2868 = vand.u32 %v182, 4294901760
      %2869 = vmatprep.subr.mxu0 %v2868
      %v2870 = vand.u32 %v181, 4294901760
      %2871 = vmatpush1.msra.mxu0 %v2870
      %v2872 = vand.u32 %v190, 4294901760
      %2873 = vmatprep.subr.mxu0 %v2872
      %v2874 = vand.u32 %v189, 4294901760
      %2875 = vmatpush1.msra.mxu0 %v2874
      %v2876 = vand.u32 %v198, 4294901760
      %2877 = vmatprep.subr.mxu0 %v2876
      %v2878 = vand.u32 %v197, 4294901760
      %2879 = vmatpush1.msra.mxu0 %v2878
      %v2880 = vand.u32 %v206, 4294901760
      %2881 = vmatprep.subr.mxu0 %v2880
      %v2882 = vand.u32 %v205, 4294901760
      %2883 = vmatpush1.msra.mxu0 %v2882
      %v2884 = vand.u32 %v214, 4294901760
      %2885 = vmatprep.subr.mxu0 %v2884
      %v2886 = vand.u32 %v213, 4294901760
      %2887 = vmatpush1.msra.mxu0 %v2886
      %v2888 = vand.u32 %v222, 4294901760
      %2889 = vmatprep.subr.mxu0 %v2888
      %v2890 = vand.u32 %v221, 4294901760
      %2891 = vmatpush1.msra.mxu0 %v2890
      %v2892 = vand.u32 %v230, 4294901760
      %2893 = vmatprep.subr.mxu0 %v2892
      %v2894 = vand.u32 %v229, 4294901760
      %2895 = vmatpush1.msra.mxu0 %v2894
      %v2896 = vand.u32 %v238, 4294901760
      %2897 = vmatprep.subr.mxu0 %v2896
      %v2898 = vand.u32 %v237, 4294901760
      %2899 = vmatpush1.msra.mxu0 %v2898
      %v2900 = vand.u32 %v246, 4294901760
      %2901 = vmatprep.subr.mxu0 %v2900
      %v2902 = vand.u32 %v245, 4294901760
      %2903 = vmatpush1.msra.mxu0 %v2902
      %v2904 = vand.u32 %v254, 4294901760
      %2905 = vmatprep.subr.mxu0 %v2904
      %v2906 = vand.u32 %v253, 4294901760
      %2907 = vmatpush1.msra.mxu0 %v2906
      %v2908 = vand.u32 %v262, 4294901760
      %2909 = vmatprep.subr.mxu0 %v2908
      %v2910 = vand.u32 %v261, 4294901760
      %2911 = vmatpush1.msra.mxu0 %v2910
      %v2912 = vand.u32 %v270, 4294901760
      %2913 = vmatprep.subr.mxu0 %v2912
      %v2914 = vand.u32 %v269, 4294901760
      %2915 = vmatpush1.msra.mxu0 %v2914
      %v2916 = vand.u32 %v278, 4294901760
      %2917 = vmatprep.subr.mxu0 %v2916
      %v2918 = vand.u32 %v277, 4294901760
      %2919 = vmatpush1.msra.mxu0 %v2918
      %v2920 = vand.u32 %v286, 4294901760
      %2921 = vmatprep.subr.mxu0 %v2920
      %v2922 = vand.u32 %v285, 4294901760
      %2923 = vmatpush1.msra.mxu0 %v2922
      %v2924 = vand.u32 %v294, 4294901760
      %2925 = vmatprep.subr.mxu0 %v2924
      %v2926 = vand.u32 %v293, 4294901760
      %2927 = vmatpush1.msra.mxu0 %v2926
      %v2928 = vand.u32 %v302, 4294901760
      %2929 = vmatprep.subr.mxu0 %v2928
      %v2930 = vand.u32 %v301, 4294901760
      %2931 = vmatpush1.msra.mxu0 %v2930
      %2932 = vmatprep.subr.mxu0 0.0
      %2933 = vmatpush1.msra.mxu0 0.0
      %2934 = vmatprep.subr.mxu0 0.0
      %2935 = vmatpush1.msra.mxu0 0.0
      %2936 = vmatprep.subr.mxu0 0.0
      %2937 = vmatpush1.msra.mxu0 0.0
      %2938 = vmatprep.subr.mxu0 0.0
      %2939 = vmatpush1.msra.mxu0 0.0
      %2940 = vmatprep.subr.mxu0 0.0
      %2941 = vmatpush1.msra.mxu0 0.0
      %2942 = vmatprep.subr.mxu0 0.0
      %2943 = vmatpush1.msra.mxu0 0.0
      %2944 = vmatprep.subr.mxu0 0.0
      %2945 = vmatpush1.msra.mxu0 0.0
      %2946 = vmatprep.subr.mxu0 0.0
      %2947 = vmatpush1.msra.mxu0 0.0
      %2948 = vmatprep.subr.mxu0 0.0
      %2949 = vmatpush1.msra.mxu0 0.0
      %2950 = vmatprep.subr.mxu0 0.0
      %2951 = vmatpush1.msra.mxu0 0.0
      %2952 = vmatprep.subr.mxu0 0.0
      %2953 = vmatpush1.msra.mxu0 0.0
      %2954 = vmatprep.subr.mxu0 0.0
      %2955 = vmatpush1.msra.mxu0 0.0
      %2956 = vmatprep.subr.mxu0 0.0
      %2957 = vmatpush1.msra.mxu0 0.0
      %2958 = vmatprep.subr.mxu0 0.0
      %2959 = vmatpush1.msra.mxu0 0.0
      %2960 = vmatprep.subr.mxu0 0.0
      %2961 = vmatpush1.msra.mxu0 0.0
      %2962 = vmatprep.subr.mxu0 0.0
      %2963 = vmatpush1.msra.mxu0 0.0
      %2964 = vmatprep.mubr.f32.mxu0 0.0
      %v2965 = vand.u32 %v174, 4294901760
      %v2966 = vsub.f32 %v174, %v2965
      %v2967 = vand.u32 %v2966, 4294901760
      %v2968 = vsub.f32 %v2966, %v2967
      %v2969 = vand.u32 %v2968, 4294901760
      %2970 = vmatmul.mubr.f32.gmra.mrb[0].mxu0 %v2969
      %v2971 = vpop.f32.mrb[0].mxu0
      %v2972 = vadd.f32 0.0, %v2971
      %v2973 = vpop.f32.mrb[0].mxu0
      %v2974 = vadd.f32 0.0, %v2973
      %2975 = vdwg.mxu0
      %v2976 = vand.u32 %v182, 4294901760
      %v2977 = vsub.f32 %v182, %v2976
      %v2978 = vand.u32 %v2977, 4294901760
      %v2979 = vsub.f32 %v2977, %v2978
      %v2980 = vand.u32 %v2979, 4294901760
      %2981 = vmatprep.subr.mxu0 %v2980
      %v2982 = vand.u32 %v181, 4294901760
      %v2983 = vsub.f32 %v181, %v2982
      %v2984 = vand.u32 %v2983, 4294901760
      %v2985 = vsub.f32 %v2983, %v2984
      %v2986 = vand.u32 %v2985, 4294901760
      %2987 = vmatpush1.msra.mxu0 %v2986
      %v2988 = vand.u32 %v190, 4294901760
      %v2989 = vsub.f32 %v190, %v2988
      %v2990 = vand.u32 %v2989, 4294901760
      %v2991 = vsub.f32 %v2989, %v2990
      %v2992 = vand.u32 %v2991, 4294901760
      %2993 = vmatprep.subr.mxu0 %v2992
      %v2994 = vand.u32 %v189, 4294901760
      %v2995 = vsub.f32 %v189, %v2994
      %v2996 = vand.u32 %v2995, 4294901760
      %v2997 = vsub.f32 %v2995, %v2996
      %v2998 = vand.u32 %v2997, 4294901760
      %2999 = vmatpush1.msra.mxu0 %v2998
      %v3000 = vand.u32 %v198, 4294901760
      %v3001 = vsub.f32 %v198, %v3000
      %v3002 = vand.u32 %v3001, 4294901760
      %v3003 = vsub.f32 %v3001, %v3002
      %v3004 = vand.u32 %v3003, 4294901760
      %3005 = vmatprep.subr.mxu0 %v3004
      %v3006 = vand.u32 %v197, 4294901760
      %v3007 = vsub.f32 %v197, %v3006
      %v3008 = vand.u32 %v3007, 4294901760
      %v3009 = vsub.f32 %v3007, %v3008
      %v3010 = vand.u32 %v3009, 4294901760
      %3011 = vmatpush1.msra.mxu0 %v3010
      %v3012 = vand.u32 %v206, 4294901760
      %v3013 = vsub.f32 %v206, %v3012
      %v3014 = vand.u32 %v3013, 4294901760
      %v3015 = vsub.f32 %v3013, %v3014
      %v3016 = vand.u32 %v3015, 4294901760
      %3017 = vmatprep.subr.mxu0 %v3016
      %v3018 = vand.u32 %v205, 4294901760
      %v3019 = vsub.f32 %v205, %v3018
      %v3020 = vand.u32 %v3019, 4294901760
      %v3021 = vsub.f32 %v3019, %v3020
      %v3022 = vand.u32 %v3021, 4294901760
      %3023 = vmatpush1.msra.mxu0 %v3022
      %v3024 = vand.u32 %v214, 4294901760
      %v3025 = vsub.f32 %v214, %v3024
      %v3026 = vand.u32 %v3025, 4294901760
      %v3027 = vsub.f32 %v3025, %v3026
      %v3028 = vand.u32 %v3027, 4294901760
      %3029 = vmatprep.subr.mxu0 %v3028
      %v3030 = vand.u32 %v213, 4294901760
      %v3031 = vsub.f32 %v213, %v3030
      %v3032 = vand.u32 %v3031, 4294901760
      %v3033 = vsub.f32 %v3031, %v3032
      %v3034 = vand.u32 %v3033, 4294901760
      %3035 = vmatpush1.msra.mxu0 %v3034
      %v3036 = vand.u32 %v222, 4294901760
      %v3037 = vsub.f32 %v222, %v3036
      %v3038 = vand.u32 %v3037, 4294901760
      %v3039 = vsub.f32 %v3037, %v3038
      %v3040 = vand.u32 %v3039, 4294901760
      %3041 = vmatprep.subr.mxu0 %v3040
      %v3042 = vand.u32 %v221, 4294901760
      %v3043 = vsub.f32 %v221, %v3042
      %v3044 = vand.u32 %v3043, 4294901760
      %v3045 = vsub.f32 %v3043, %v3044
      %v3046 = vand.u32 %v3045, 4294901760
      %3047 = vmatpush1.msra.mxu0 %v3046
      %v3048 = vand.u32 %v230, 4294901760
      %v3049 = vsub.f32 %v230, %v3048
      %v3050 = vand.u32 %v3049, 4294901760
      %v3051 = vsub.f32 %v3049, %v3050
      %v3052 = vand.u32 %v3051, 4294901760
      %3053 = vmatprep.subr.mxu0 %v3052
      %v3054 = vand.u32 %v229, 4294901760
      %v3055 = vsub.f32 %v229, %v3054
      %v3056 = vand.u32 %v3055, 4294901760
      %v3057 = vsub.f32 %v3055, %v3056
      %v3058 = vand.u32 %v3057, 4294901760
      %3059 = vmatpush1.msra.mxu0 %v3058
      %v3060 = vand.u32 %v238, 4294901760
      %v3061 = vsub.f32 %v238, %v3060
      %v3062 = vand.u32 %v3061, 4294901760
      %v3063 = vsub.f32 %v3061, %v3062
      %v3064 = vand.u32 %v3063, 4294901760
      %3065 = vmatprep.subr.mxu0 %v3064
      %v3066 = vand.u32 %v237, 4294901760
      %v3067 = vsub.f32 %v237, %v3066
      %v3068 = vand.u32 %v3067, 4294901760
      %v3069 = vsub.f32 %v3067, %v3068
      %v3070 = vand.u32 %v3069, 4294901760
      %3071 = vmatpush1.msra.mxu0 %v3070
      %v3072 = vand.u32 %v246, 4294901760
      %v3073 = vsub.f32 %v246, %v3072
      %v3074 = vand.u32 %v3073, 4294901760
      %v3075 = vsub.f32 %v3073, %v3074
      %v3076 = vand.u32 %v3075, 4294901760
      %3077 = vmatprep.subr.mxu0 %v3076
      %v3078 = vand.u32 %v245, 4294901760
      %v3079 = vsub.f32 %v245, %v3078
      %v3080 = vand.u32 %v3079, 4294901760
      %v3081 = vsub.f32 %v3079, %v3080
      %v3082 = vand.u32 %v3081, 4294901760
      %3083 = vmatpush1.msra.mxu0 %v3082
      %v3084 = vand.u32 %v254, 4294901760
      %v3085 = vsub.f32 %v254, %v3084
      %v3086 = vand.u32 %v3085, 4294901760
      %v3087 = vsub.f32 %v3085, %v3086
      %v3088 = vand.u32 %v3087, 4294901760
      %3089 = vmatprep.subr.mxu0 %v3088
      %v3090 = vand.u32 %v253, 4294901760
      %v3091 = vsub.f32 %v253, %v3090
      %v3092 = vand.u32 %v3091, 4294901760
      %v3093 = vsub.f32 %v3091, %v3092
      %v3094 = vand.u32 %v3093, 4294901760
      %3095 = vmatpush1.msra.mxu0 %v3094
      %v3096 = vand.u32 %v262, 4294901760
      %v3097 = vsub.f32 %v262, %v3096
      %v3098 = vand.u32 %v3097, 4294901760
      %v3099 = vsub.f32 %v3097, %v3098
      %v3100 = vand.u32 %v3099, 4294901760
      %3101 = vmatprep.subr.mxu0 %v3100
      %v3102 = vand.u32 %v261, 4294901760
      %v3103 = vsub.f32 %v261, %v3102
      %v3104 = vand.u32 %v3103, 4294901760
      %v3105 = vsub.f32 %v3103, %v3104
      %v3106 = vand.u32 %v3105, 4294901760
      %3107 = vmatpush1.msra.mxu0 %v3106
      %v3108 = vand.u32 %v270, 4294901760
      %v3109 = vsub.f32 %v270, %v3108
      %v3110 = vand.u32 %v3109, 4294901760
      %v3111 = vsub.f32 %v3109, %v3110
      %v3112 = vand.u32 %v3111, 4294901760
      %3113 = vmatprep.subr.mxu0 %v3112
      %v3114 = vand.u32 %v269, 4294901760
      %v3115 = vsub.f32 %v269, %v3114
      %v3116 = vand.u32 %v3115, 4294901760
      %v3117 = vsub.f32 %v3115, %v3116
      %v3118 = vand.u32 %v3117, 4294901760
      %3119 = vmatpush1.msra.mxu0 %v3118
      %v3120 = vand.u32 %v278, 4294901760
      %v3121 = vsub.f32 %v278, %v3120
      %v3122 = vand.u32 %v3121, 4294901760
      %v3123 = vsub.f32 %v3121, %v3122
      %v3124 = vand.u32 %v3123, 4294901760
      %3125 = vmatprep.subr.mxu0 %v3124
      %v3126 = vand.u32 %v277, 4294901760
      %v3127 = vsub.f32 %v277, %v3126
      %v3128 = vand.u32 %v3127, 4294901760
      %v3129 = vsub.f32 %v3127, %v3128
      %v3130 = vand.u32 %v3129, 4294901760
      %3131 = vmatpush1.msra.mxu0 %v3130
      %v3132 = vand.u32 %v286, 4294901760
      %v3133 = vsub.f32 %v286, %v3132
      %v3134 = vand.u32 %v3133, 4294901760
      %v3135 = vsub.f32 %v3133, %v3134
      %v3136 = vand.u32 %v3135, 4294901760
      %3137 = vmatprep.subr.mxu0 %v3136
      %v3138 = vand.u32 %v285, 4294901760
      %v3139 = vsub.f32 %v285, %v3138
      %v3140 = vand.u32 %v3139, 4294901760
      %v3141 = vsub.f32 %v3139, %v3140
      %v3142 = vand.u32 %v3141, 4294901760
      %3143 = vmatpush1.msra.mxu0 %v3142
      %v3144 = vand.u32 %v294, 4294901760
      %v3145 = vsub.f32 %v294, %v3144
      %v3146 = vand.u32 %v3145, 4294901760
      %v3147 = vsub.f32 %v3145, %v3146
      %v3148 = vand.u32 %v3147, 4294901760
      %3149 = vmatprep.subr.mxu0 %v3148
      %v3150 = vand.u32 %v293, 4294901760
      %v3151 = vsub.f32 %v293, %v3150
      %v3152 = vand.u32 %v3151, 4294901760
      %v3153 = vsub.f32 %v3151, %v3152
      %v3154 = vand.u32 %v3153, 4294901760
      %3155 = vmatpush1.msra.mxu0 %v3154
      %v3156 = vand.u32 %v302, 4294901760
      %v3157 = vsub.f32 %v302, %v3156
      %v3158 = vand.u32 %v3157, 4294901760
      %v3159 = vsub.f32 %v3157, %v3158
      %v3160 = vand.u32 %v3159, 4294901760
      %3161 = vmatprep.subr.mxu0 %v3160
      %v3162 = vand.u32 %v301, 4294901760
      %v3163 = vsub.f32 %v301, %v3162
      %v3164 = vand.u32 %v3163, 4294901760
      %v3165 = vsub.f32 %v3163, %v3164
      %v3166 = vand.u32 %v3165, 4294901760
      %3167 = vmatpush1.msra.mxu0 %v3166
      %3168 = vmatprep.subr.mxu0 0.0
      %3169 = vmatpush1.msra.mxu0 0.0
      %3170 = vmatprep.subr.mxu0 0.0
      %3171 = vmatpush1.msra.mxu0 0.0
      %3172 = vmatprep.subr.mxu0 0.0
      %3173 = vmatpush1.msra.mxu0 0.0
      %3174 = vmatprep.subr.mxu0 0.0
      %3175 = vmatpush1.msra.mxu0 0.0
      %3176 = vmatprep.subr.mxu0 0.0
      %3177 = vmatpush1.msra.mxu0 0.0
      %3178 = vmatprep.subr.mxu0 0.0
      %3179 = vmatpush1.msra.mxu0 0.0
      %3180 = vmatprep.subr.mxu0 0.0
      %3181 = vmatpush1.msra.mxu0 0.0
      %3182 = vmatprep.subr.mxu0 0.0
      %3183 = vmatpush1.msra.mxu0 0.0
      %3184 = vmatprep.subr.mxu0 0.0
      %3185 = vmatpush1.msra.mxu0 0.0
      %3186 = vmatprep.subr.mxu0 0.0
      %3187 = vmatpush1.msra.mxu0 0.0
      %3188 = vmatprep.subr.mxu0 0.0
      %3189 = vmatpush1.msra.mxu0 0.0
      %3190 = vmatprep.subr.mxu0 0.0
      %3191 = vmatpush1.msra.mxu0 0.0
      %3192 = vmatprep.subr.mxu0 0.0
      %3193 = vmatpush1.msra.mxu0 0.0
      %3194 = vmatprep.subr.mxu0 0.0
      %3195 = vmatpush1.msra.mxu0 0.0
      %3196 = vmatprep.subr.mxu0 0.0
      %3197 = vmatpush1.msra.mxu0 0.0
      %3198 = vmatprep.subr.mxu0 0.0
      %3199 = vmatpush1.msra.mxu0 0.0
      %3200 = vmatprep.mubr.f32.mxu0 0.0
      %v3201 = vand.u32 %v174, 4294901760
      %3202 = vmatmul.mubr.f32.gmra.mrb[0].mxu0 %v3201
      %v3203 = vpop.f32.mrb[0].mxu0
      %v3204 = vadd.f32 %v2972, %v3203
      %v3205 = vpop.f32.mrb[0].mxu0
      %v3206 = vadd.f32 %v2974, %v3205
      %3207 = vdwg.mxu0
      %v3208 = vand.u32 %v182, 4294901760
      %v3209 = vsub.f32 %v182, %v3208
      %3210 = vmatprep.subr.mxu0 %v3209
      %v3211 = vand.u32 %v181, 4294901760
      %v3212 = vsub.f32 %v181, %v3211
      %3213 = vmatpush1.msra.mxu0 %v3212
      %v3214 = vand.u32 %v190, 4294901760
      %v3215 = vsub.f32 %v190, %v3214
      %3216 = vmatprep.subr.mxu0 %v3215
      %v3217 = vand.u32 %v189, 4294901760
      %v3218 = vsub.f32 %v189, %v3217
      %3219 = vmatpush1.msra.mxu0 %v3218
      %v3220 = vand.u32 %v198, 4294901760
      %v3221 = vsub.f32 %v198, %v3220
      %3222 = vmatprep.subr.mxu0 %v3221
      %v3223 = vand.u32 %v197, 4294901760
      %v3224 = vsub.f32 %v197, %v3223
      %3225 = vmatpush1.msra.mxu0 %v3224
      %v3226 = vand.u32 %v206, 4294901760
      %v3227 = vsub.f32 %v206, %v3226
      %3228 = vmatprep.subr.mxu0 %v3227
      %v3229 = vand.u32 %v205, 4294901760
      %v3230 = vsub.f32 %v205, %v3229
      %3231 = vmatpush1.msra.mxu0 %v3230
      %v3232 = vand.u32 %v214, 4294901760
      %v3233 = vsub.f32 %v214, %v3232
      %3234 = vmatprep.subr.mxu0 %v3233
      %v3235 = vand.u32 %v213, 4294901760
      %v3236 = vsub.f32 %v213, %v3235
      %3237 = vmatpush1.msra.mxu0 %v3236
      %v3238 = vand.u32 %v222, 4294901760
      %v3239 = vsub.f32 %v222, %v3238
      %3240 = vmatprep.subr.mxu0 %v3239
      %v3241 = vand.u32 %v221, 4294901760
      %v3242 = vsub.f32 %v221, %v3241
      %3243 = vmatpush1.msra.mxu0 %v3242
      %v3244 = vand.u32 %v230, 4294901760
      %v3245 = vsub.f32 %v230, %v3244
      %3246 = vmatprep.subr.mxu0 %v3245
      %v3247 = vand.u32 %v229, 4294901760
      %v3248 = vsub.f32 %v229, %v3247
      %3249 = vmatpush1.msra.mxu0 %v3248
      %v3250 = vand.u32 %v238, 4294901760
      %v3251 = vsub.f32 %v238, %v3250
      %3252 = vmatprep.subr.mxu0 %v3251
      %v3253 = vand.u32 %v237, 4294901760
      %v3254 = vsub.f32 %v237, %v3253
      %3255 = vmatpush1.msra.mxu0 %v3254
      %v3256 = vand.u32 %v246, 4294901760
      %v3257 = vsub.f32 %v246, %v3256
      %3258 = vmatprep.subr.mxu0 %v3257
      %v3259 = vand.u32 %v245, 4294901760
      %v3260 = vsub.f32 %v245, %v3259
      %3261 = vmatpush1.msra.mxu0 %v3260
      %v3262 = vand.u32 %v254, 4294901760
      %v3263 = vsub.f32 %v254, %v3262
      %3264 = vmatprep.subr.mxu0 %v3263
      %v3265 = vand.u32 %v253, 4294901760
      %v3266 = vsub.f32 %v253, %v3265
      %3267 = vmatpush1.msra.mxu0 %v3266
      %v3268 = vand.u32 %v262, 4294901760
      %v3269 = vsub.f32 %v262, %v3268
      %3270 = vmatprep.subr.mxu0 %v3269
      %v3271 = vand.u32 %v261, 4294901760
      %v3272 = vsub.f32 %v261, %v3271
      %3273 = vmatpush1.msra.mxu0 %v3272
      %v3274 = vand.u32 %v270, 4294901760
      %v3275 = vsub.f32 %v270, %v3274
      %3276 = vmatprep.subr.mxu0 %v3275
      %v3277 = vand.u32 %v269, 4294901760
      %v3278 = vsub.f32 %v269, %v3277
      %3279 = vmatpush1.msra.mxu0 %v3278
      %v3280 = vand.u32 %v278, 4294901760
      %v3281 = vsub.f32 %v278, %v3280
      %3282 = vmatprep.subr.mxu0 %v3281
      %v3283 = vand.u32 %v277, 4294901760
      %v3284 = vsub.f32 %v277, %v3283
      %3285 = vmatpush1.msra.mxu0 %v3284
      %v3286 = vand.u32 %v286, 4294901760
      %v3287 = vsub.f32 %v286, %v3286
      %3288 = vmatprep.subr.mxu0 %v3287
      %v3289 = vand.u32 %v285, 4294901760
      %v3290 = vsub.f32 %v285, %v3289
      %3291 = vmatpush1.msra.mxu0 %v3290
      %v3292 = vand.u32 %v294, 4294901760
      %v3293 = vsub.f32 %v294, %v3292
      %3294 = vmatprep.subr.mxu0 %v3293
      %v3295 = vand.u32 %v293, 4294901760
      %v3296 = vsub.f32 %v293, %v3295
      %3297 = vmatpush1.msra.mxu0 %v3296
      %v3298 = vand.u32 %v302, 4294901760
      %v3299 = vsub.f32 %v302, %v3298
      %3300 = vmatprep.subr.mxu0 %v3299
      %v3301 = vand.u32 %v301, 4294901760
      %v3302 = vsub.f32 %v301, %v3301
      %3303 = vmatpush1.msra.mxu0 %v3302
      %3304 = vmatprep.subr.mxu0 0.0
      %3305 = vmatpush1.msra.mxu0 0.0
      %3306 = vmatprep.subr.mxu0 0.0
      %3307 = vmatpush1.msra.mxu0 0.0
      %3308 = vmatprep.subr.mxu0 0.0
      %3309 = vmatpush1.msra.mxu0 0.0
      %3310 = vmatprep.subr.mxu0 0.0
      %3311 = vmatpush1.msra.mxu0 0.0
      %3312 = vmatprep.subr.mxu0 0.0
      %3313 = vmatpush1.msra.mxu0 0.0
      %3314 = vmatprep.subr.mxu0 0.0
      %3315 = vmatpush1.msra.mxu0 0.0
      %3316 = vmatprep.subr.mxu0 0.0
      %3317 = vmatpush1.msra.mxu0 0.0
      %3318 = vmatprep.subr.mxu0 0.0
      %3319 = vmatpush1.msra.mxu0 0.0
      %3320 = vmatprep.subr.mxu0 0.0
      %3321 = vmatpush1.msra.mxu0 0.0
      %3322 = vmatprep.subr.mxu0 0.0
      %3323 = vmatpush1.msra.mxu0 0.0
      %3324 = vmatprep.subr.mxu0 0.0
      %3325 = vmatpush1.msra.mxu0 0.0
      %3326 = vmatprep.subr.mxu0 0.0
      %3327 = vmatpush1.msra.mxu0 0.0
      %3328 = vmatprep.subr.mxu0 0.0
      %3329 = vmatpush1.msra.mxu0 0.0
      %3330 = vmatprep.subr.mxu0 0.0
      %3331 = vmatpush1.msra.mxu0 0.0
      %3332 = vmatprep.subr.mxu0 0.0
      %3333 = vmatpush1.msra.mxu0 0.0
      %3334 = vmatprep.subr.mxu0 0.0
      %3335 = vmatpush1.msra.mxu0 0.0
      %3336 = vmatprep.mubr.f32.mxu0 0.0
      %v3337 = vand.u32 %v174, 4294901760
      %v3338 = vsub.f32 %v174, %v3337
      %3339 = vmatmul.mubr.f32.gmra.mrb[0].mxu0 %v3338
      %v3340 = vpop.f32.mrb[0].mxu0
      %v3341 = vadd.f32 %v3204, %v3340
      %v3342 = vpop.f32.mrb[0].mxu0
      %v3343 = vadd.f32 %v3206, %v3342
      %3344 = vdwg.mxu0
      %v3345 = vand.u32 %v182, 4294901760
      %3346 = vmatprep.subr.mxu0 %v3345
      %v3347 = vand.u32 %v181, 4294901760
      %3348 = vmatpush1.msra.mxu0 %v3347
      %v3349 = vand.u32 %v190, 4294901760
      %3350 = vmatprep.subr.mxu0 %v3349
      %v3351 = vand.u32 %v189, 4294901760
      %3352 = vmatpush1.msra.mxu0 %v3351
      %v3353 = vand.u32 %v198, 4294901760
      %3354 = vmatprep.subr.mxu0 %v3353
      %v3355 = vand.u32 %v197, 4294901760
      %3356 = vmatpush1.msra.mxu0 %v3355
      %v3357 = vand.u32 %v206, 4294901760
      %3358 = vmatprep.subr.mxu0 %v3357
      %v3359 = vand.u32 %v205, 4294901760
      %3360 = vmatpush1.msra.mxu0 %v3359
      %v3361 = vand.u32 %v214, 4294901760
      %3362 = vmatprep.subr.mxu0 %v3361
      %v3363 = vand.u32 %v213, 4294901760
      %3364 = vmatpush1.msra.mxu0 %v3363
      %v3365 = vand.u32 %v222, 4294901760
      %3366 = vmatprep.subr.mxu0 %v3365
      %v3367 = vand.u32 %v221, 4294901760
      %3368 = vmatpush1.msra.mxu0 %v3367
      %v3369 = vand.u32 %v230, 4294901760
      %3370 = vmatprep.subr.mxu0 %v3369
      %v3371 = vand.u32 %v229, 4294901760
      %3372 = vmatpush1.msra.mxu0 %v3371
      %v3373 = vand.u32 %v238, 4294901760
      %3374 = vmatprep.subr.mxu0 %v3373
      %v3375 = vand.u32 %v237, 4294901760
      %3376 = vmatpush1.msra.mxu0 %v3375
      %v3377 = vand.u32 %v246, 4294901760
      %3378 = vmatprep.subr.mxu0 %v3377
      %v3379 = vand.u32 %v245, 4294901760
      %3380 = vmatpush1.msra.mxu0 %v3379
      %v3381 = vand.u32 %v254, 4294901760
      %3382 = vmatprep.subr.mxu0 %v3381
      %v3383 = vand.u32 %v253, 4294901760
      %3384 = vmatpush1.msra.mxu0 %v3383
      %v3385 = vand.u32 %v262, 4294901760
      %3386 = vmatprep.subr.mxu0 %v3385
      %v3387 = vand.u32 %v261, 4294901760
      %3388 = vmatpush1.msra.mxu0 %v3387
      %v3389 = vand.u32 %v270, 4294901760
      %3390 = vmatprep.subr.mxu0 %v3389
      %v3391 = vand.u32 %v269, 4294901760
      %3392 = vmatpush1.msra.mxu0 %v3391
      %v3393 = vand.u32 %v278, 4294901760
      %3394 = vmatprep.subr.mxu0 %v3393
      %v3395 = vand.u32 %v277, 4294901760
      %3396 = vmatpush1.msra.mxu0 %v3395
      %v3397 = vand.u32 %v286, 4294901760
      %3398 = vmatprep.subr.mxu0 %v3397
      %v3399 = vand.u32 %v285, 4294901760
      %3400 = vmatpush1.msra.mxu0 %v3399
      %v3401 = vand.u32 %v294, 4294901760
      %3402 = vmatprep.subr.mxu0 %v3401
      %v3403 = vand.u32 %v293, 4294901760
      %3404 = vmatpush1.msra.mxu0 %v3403
      %v3405 = vand.u32 %v302, 4294901760
      %3406 = vmatprep.subr.mxu0 %v3405
      %v3407 = vand.u32 %v301, 4294901760
      %3408 = vmatpush1.msra.mxu0 %v3407
      %3409 = vmatprep.subr.mxu0 0.0
      %3410 = vmatpush1.msra.mxu0 0.0
      %3411 = vmatprep.subr.mxu0 0.0
      %3412 = vmatpush1.msra.mxu0 0.0
      %3413 = vmatprep.subr.mxu0 0.0
      %3414 = vmatpush1.msra.mxu0 0.0
      %3415 = vmatprep.subr.mxu0 0.0
      %3416 = vmatpush1.msra.mxu0 0.0
      %3417 = vmatprep.subr.mxu0 0.0
      %3418 = vmatpush1.msra.mxu0 0.0
      %3419 = vmatprep.subr.mxu0 0.0
      %3420 = vmatpush1.msra.mxu0 0.0
      %3421 = vmatprep.subr.mxu0 0.0
      %3422 = vmatpush1.msra.mxu0 0.0
      %3423 = vmatprep.subr.mxu0 0.0
      %3424 = vmatpush1.msra.mxu0 0.0
      %3425 = vmatprep.subr.mxu0 0.0
      %3426 = vmatpush1.msra.mxu0 0.0
      %3427 = vmatprep.subr.mxu0 0.0
      %3428 = vmatpush1.msra.mxu0 0.0
      %3429 = vmatprep.subr.mxu0 0.0
      %3430 = vmatpush1.msra.mxu0 0.0
      %3431 = vmatprep.subr.mxu0 0.0
      %3432 = vmatpush1.msra.mxu0 0.0
      %3433 = vmatprep.subr.mxu0 0.0
      %3434 = vmatpush1.msra.mxu0 0.0
      %3435 = vmatprep.subr.mxu0 0.0
      %3436 = vmatpush1.msra.mxu0 0.0
      %3437 = vmatprep.subr.mxu0 0.0
      %3438 = vmatpush1.msra.mxu0 0.0
      %3439 = vmatprep.subr.mxu0 0.0
      %3440 = vmatpush1.msra.mxu0 0.0
      %3441 = vmatprep.mubr.f32.mxu0 0.0
      %v3442 = vand.u32 %v174, 4294901760
      %v3443 = vsub.f32 %v174, %v3442
      %v3444 = vand.u32 %v3443, 4294901760
      %3445 = vmatmul.mubr.f32.gmra.mrb[0].mxu0 %v3444
      %v3446 = vpop.f32.mrb[0].mxu0
      %v3447 = vadd.f32 %v3341, %v3446
      %v3448 = vpop.f32.mrb[0].mxu0
      %v3449 = vadd.f32 %v3343, %v3448
      %3450 = vdwg.mxu0
      %v3451 = vand.u32 %v182, 4294901760
      %v3452 = vsub.f32 %v182, %v3451
      %v3453 = vand.u32 %v3452, 4294901760
      %3454 = vmatprep.subr.mxu0 %v3453
      %v3455 = vand.u32 %v181, 4294901760
      %v3456 = vsub.f32 %v181, %v3455
      %v3457 = vand.u32 %v3456, 4294901760
      %3458 = vmatpush1.msra.mxu0 %v3457
      %v3459 = vand.u32 %v190, 4294901760
      %v3460 = vsub.f32 %v190, %v3459
      %v3461 = vand.u32 %v3460, 4294901760
      %3462 = vmatprep.subr.mxu0 %v3461
      %v3463 = vand.u32 %v189, 4294901760
      %v3464 = vsub.f32 %v189, %v3463
      %v3465 = vand.u32 %v3464, 4294901760
      %3466 = vmatpush1.msra.mxu0 %v3465
      %v3467 = vand.u32 %v198, 4294901760
      %v3468 = vsub.f32 %v198, %v3467
      %v3469 = vand.u32 %v3468, 4294901760
      %3470 = vmatprep.subr.mxu0 %v3469
      %v3471 = vand.u32 %v197, 4294901760
      %v3472 = vsub.f32 %v197, %v3471
      %v3473 = vand.u32 %v3472, 4294901760
      %3474 = vmatpush1.msra.mxu0 %v3473
      %v3475 = vand.u32 %v206, 4294901760
      %v3476 = vsub.f32 %v206, %v3475
      %v3477 = vand.u32 %v3476, 4294901760
      %3478 = vmatprep.subr.mxu0 %v3477
      %v3479 = vand.u32 %v205, 4294901760
      %v3480 = vsub.f32 %v205, %v3479
      %v3481 = vand.u32 %v3480, 4294901760
      %3482 = vmatpush1.msra.mxu0 %v3481
      %v3483 = vand.u32 %v214, 4294901760
      %v3484 = vsub.f32 %v214, %v3483
      %v3485 = vand.u32 %v3484, 4294901760
      %3486 = vmatprep.subr.mxu0 %v3485
      %v3487 = vand.u32 %v213, 4294901760
      %v3488 = vsub.f32 %v213, %v3487
      %v3489 = vand.u32 %v3488, 4294901760
      %3490 = vmatpush1.msra.mxu0 %v3489
      %v3491 = vand.u32 %v222, 4294901760
      %v3492 = vsub.f32 %v222, %v3491
      %v3493 = vand.u32 %v3492, 4294901760
      %3494 = vmatprep.subr.mxu0 %v3493
      %v3495 = vand.u32 %v221, 4294901760
      %v3496 = vsub.f32 %v221, %v3495
      %v3497 = vand.u32 %v3496, 4294901760
      %3498 = vmatpush1.msra.mxu0 %v3497
      %v3499 = vand.u32 %v230, 4294901760
      %v3500 = vsub.f32 %v230, %v3499
      %v3501 = vand.u32 %v3500, 4294901760
      %3502 = vmatprep.subr.mxu0 %v3501
      %v3503 = vand.u32 %v229, 4294901760
      %v3504 = vsub.f32 %v229, %v3503
      %v3505 = vand.u32 %v3504, 4294901760
      %3506 = vmatpush1.msra.mxu0 %v3505
      %v3507 = vand.u32 %v238, 4294901760
      %v3508 = vsub.f32 %v238, %v3507
      %v3509 = vand.u32 %v3508, 4294901760
      %3510 = vmatprep.subr.mxu0 %v3509
      %v3511 = vand.u32 %v237, 4294901760
      %v3512 = vsub.f32 %v237, %v3511
      %v3513 = vand.u32 %v3512, 4294901760
      %3514 = vmatpush1.msra.mxu0 %v3513
      %v3515 = vand.u32 %v246, 4294901760
      %v3516 = vsub.f32 %v246, %v3515
      %v3517 = vand.u32 %v3516, 4294901760
      %3518 = vmatprep.subr.mxu0 %v3517
      %v3519 = vand.u32 %v245, 4294901760
      %v3520 = vsub.f32 %v245, %v3519
      %v3521 = vand.u32 %v3520, 4294901760
      %3522 = vmatpush1.msra.mxu0 %v3521
      %v3523 = vand.u32 %v254, 4294901760
      %v3524 = vsub.f32 %v254, %v3523
      %v3525 = vand.u32 %v3524, 4294901760
      %3526 = vmatprep.subr.mxu0 %v3525
      %v3527 = vand.u32 %v253, 4294901760
      %v3528 = vsub.f32 %v253, %v3527
      %v3529 = vand.u32 %v3528, 4294901760
      %3530 = vmatpush1.msra.mxu0 %v3529
      %v3531 = vand.u32 %v262, 4294901760
      %v3532 = vsub.f32 %v262, %v3531
      %v3533 = vand.u32 %v3532, 4294901760
      %3534 = vmatprep.subr.mxu0 %v3533
      %v3535 = vand.u32 %v261, 4294901760
      %v3536 = vsub.f32 %v261, %v3535
      %v3537 = vand.u32 %v3536, 4294901760
      %3538 = vmatpush1.msra.mxu0 %v3537
      %v3539 = vand.u32 %v270, 4294901760
      %v3540 = vsub.f32 %v270, %v3539
      %v3541 = vand.u32 %v3540, 4294901760
      %3542 = vmatprep.subr.mxu0 %v3541
      %v3543 = vand.u32 %v269, 4294901760
      %v3544 = vsub.f32 %v269, %v3543
      %v3545 = vand.u32 %v3544, 4294901760
      %3546 = vmatpush1.msra.mxu0 %v3545
      %v3547 = vand.u32 %v278, 4294901760
      %v3548 = vsub.f32 %v278, %v3547
      %v3549 = vand.u32 %v3548, 4294901760
      %3550 = vmatprep.subr.mxu0 %v3549
      %v3551 = vand.u32 %v277, 4294901760
      %v3552 = vsub.f32 %v277, %v3551
      %v3553 = vand.u32 %v3552, 4294901760
      %3554 = vmatpush1.msra.mxu0 %v3553
      %v3555 = vand.u32 %v286, 4294901760
      %v3556 = vsub.f32 %v286, %v3555
      %v3557 = vand.u32 %v3556, 4294901760
      %3558 = vmatprep.subr.mxu0 %v3557
      %v3559 = vand.u32 %v285, 4294901760
      %v3560 = vsub.f32 %v285, %v3559
      %v3561 = vand.u32 %v3560, 4294901760
      %3562 = vmatpush1.msra.mxu0 %v3561
      %v3563 = vand.u32 %v294, 4294901760
      %v3564 = vsub.f32 %v294, %v3563
      %v3565 = vand.u32 %v3564, 4294901760
      %3566 = vmatprep.subr.mxu0 %v3565
      %v3567 = vand.u32 %v293, 4294901760
      %v3568 = vsub.f32 %v293, %v3567
      %v3569 = vand.u32 %v3568, 4294901760
      %3570 = vmatpush1.msra.mxu0 %v3569
      %v3571 = vand.u32 %v302, 4294901760
      %v3572 = vsub.f32 %v302, %v3571
      %v3573 = vand.u32 %v3572, 4294901760
      %3574 = vmatprep.subr.mxu0 %v3573
      %v3575 = vand.u32 %v301, 4294901760
      %v3576 = vsub.f32 %v301, %v3575
      %v3577 = vand.u32 %v3576, 4294901760
      %3578 = vmatpush1.msra.mxu0 %v3577
      %3579 = vmatprep.subr.mxu0 0.0
      %3580 = vmatpush1.msra.mxu0 0.0
      %3581 = vmatprep.subr.mxu0 0.0
      %3582 = vmatpush1.msra.mxu0 0.0
      %3583 = vmatprep.subr.mxu0 0.0
      %3584 = vmatpush1.msra.mxu0 0.0
      %3585 = vmatprep.subr.mxu0 0.0
      %3586 = vmatpush1.msra.mxu0 0.0
      %3587 = vmatprep.subr.mxu0 0.0
      %3588 = vmatpush1.msra.mxu0 0.0
      %3589 = vmatprep.subr.mxu0 0.0
      %3590 = vmatpush1.msra.mxu0 0.0
      %3591 = vmatprep.subr.mxu0 0.0
      %3592 = vmatpush1.msra.mxu0 0.0
      %3593 = vmatprep.subr.mxu0 0.0
      %3594 = vmatpush1.msra.mxu0 0.0
      %3595 = vmatprep.subr.mxu0 0.0
      %3596 = vmatpush1.msra.mxu0 0.0
      %3597 = vmatprep.subr.mxu0 0.0
      %3598 = vmatpush1.msra.mxu0 0.0
      %3599 = vmatprep.subr.mxu0 0.0
      %3600 = vmatpush1.msra.mxu0 0.0
      %3601 = vmatprep.subr.mxu0 0.0
      %3602 = vmatpush1.msra.mxu0 0.0
      %3603 = vmatprep.subr.mxu0 0.0
      %3604 = vmatpush1.msra.mxu0 0.0
      %3605 = vmatprep.subr.mxu0 0.0
      %3606 = vmatpush1.msra.mxu0 0.0
      %3607 = vmatprep.subr.mxu0 0.0
      %3608 = vmatpush1.msra.mxu0 0.0
      %3609 = vmatprep.subr.mxu0 0.0
      %3610 = vmatpush1.msra.mxu0 0.0
      %3611 = vmatprep.mubr.f32.mxu0 0.0
      %v3612 = vand.u32 %v174, 4294901760
      %3613 = vmatmul.mubr.f32.gmra.mrb[0].mxu0 %v3612
      %v3614 = vpop.f32.mrb[0].mxu0
      %v3615 = vadd.f32 %v3447, %v3614
      %v3616 = vpop.f32.mrb[0].mxu0
      %v3617 = vadd.f32 %v3449, %v3616
      %3618 = vdwg.mxu0
      %v3619 = vand.u32 %v182, 4294901760
      %3620 = vmatprep.subr.mxu0 %v3619
      %v3621 = vand.u32 %v181, 4294901760
      %3622 = vmatpush1.msra.mxu0 %v3621
      %v3623 = vand.u32 %v190, 4294901760
      %3624 = vmatprep.subr.mxu0 %v3623
      %v3625 = vand.u32 %v189, 4294901760
      %3626 = vmatpush1.msra.mxu0 %v3625
      %v3627 = vand.u32 %v198, 4294901760
      %3628 = vmatprep.subr.mxu0 %v3627
      %v3629 = vand.u32 %v197, 4294901760
      %3630 = vmatpush1.msra.mxu0 %v3629
      %v3631 = vand.u32 %v206, 4294901760
      %3632 = vmatprep.subr.mxu0 %v3631
      %v3633 = vand.u32 %v205, 4294901760
      %3634 = vmatpush1.msra.mxu0 %v3633
      %v3635 = vand.u32 %v214, 4294901760
      %3636 = vmatprep.subr.mxu0 %v3635
      %v3637 = vand.u32 %v213, 4294901760
      %3638 = vmatpush1.msra.mxu0 %v3637
      %v3639 = vand.u32 %v222, 4294901760
      %3640 = vmatprep.subr.mxu0 %v3639
      %v3641 = vand.u32 %v221, 4294901760
      %3642 = vmatpush1.msra.mxu0 %v3641
      %v3643 = vand.u32 %v230, 4294901760
      %3644 = vmatprep.subr.mxu0 %v3643
      %v3645 = vand.u32 %v229, 4294901760
      %3646 = vmatpush1.msra.mxu0 %v3645
      %v3647 = vand.u32 %v238, 4294901760
      %3648 = vmatprep.subr.mxu0 %v3647
      %v3649 = vand.u32 %v237, 4294901760
      %3650 = vmatpush1.msra.mxu0 %v3649
      %v3651 = vand.u32 %v246, 4294901760
      %3652 = vmatprep.subr.mxu0 %v3651
      %v3653 = vand.u32 %v245, 4294901760
      %3654 = vmatpush1.msra.mxu0 %v3653
      %v3655 = vand.u32 %v254, 4294901760
      %3656 = vmatprep.subr.mxu0 %v3655
      %v3657 = vand.u32 %v253, 4294901760
      %3658 = vmatpush1.msra.mxu0 %v3657
      %v3659 = vand.u32 %v262, 4294901760
      %3660 = vmatprep.subr.mxu0 %v3659
      %v3661 = vand.u32 %v261, 4294901760
      %3662 = vmatpush1.msra.mxu0 %v3661
      %v3663 = vand.u32 %v270, 4294901760
      %3664 = vmatprep.subr.mxu0 %v3663
      %v3665 = vand.u32 %v269, 4294901760
      %3666 = vmatpush1.msra.mxu0 %v3665
      %v3667 = vand.u32 %v278, 4294901760
      %3668 = vmatprep.subr.mxu0 %v3667
      %v3669 = vand.u32 %v277, 4294901760
      %3670 = vmatpush1.msra.mxu0 %v3669
      %v3671 = vand.u32 %v286, 4294901760
      %3672 = vmatprep.subr.mxu0 %v3671
      %v3673 = vand.u32 %v285, 4294901760
      %3674 = vmatpush1.msra.mxu0 %v3673
      %v3675 = vand.u32 %v294, 4294901760
      %3676 = vmatprep.subr.mxu0 %v3675
      %v3677 = vand.u32 %v293, 4294901760
      %3678 = vmatpush1.msra.mxu0 %v3677
      %v3679 = vand.u32 %v302, 4294901760
      %3680 = vmatprep.subr.mxu0 %v3679
      %v3681 = vand.u32 %v301, 4294901760
      %3682 = vmatpush1.msra.mxu0 %v3681
      %3683 = vmatprep.subr.mxu0 0.0
      %3684 = vmatpush1.msra.mxu0 0.0
      %3685 = vmatprep.subr.mxu0 0.0
      %3686 = vmatpush1.msra.mxu0 0.0
      %3687 = vmatprep.subr.mxu0 0.0
      %3688 = vmatpush1.msra.mxu0 0.0
      %3689 = vmatprep.subr.mxu0 0.0
      %3690 = vmatpush1.msra.mxu0 0.0
      %3691 = vmatprep.subr.mxu0 0.0
      %3692 = vmatpush1.msra.mxu0 0.0
      %3693 = vmatprep.subr.mxu0 0.0
      %3694 = vmatpush1.msra.mxu0 0.0
      %3695 = vmatprep.subr.mxu0 0.0
      %3696 = vmatpush1.msra.mxu0 0.0
      %3697 = vmatprep.subr.mxu0 0.0
      %3698 = vmatpush1.msra.mxu0 0.0
      %3699 = vmatprep.subr.mxu0 0.0
      %3700 = vmatpush1.msra.mxu0 0.0
      %3701 = vmatprep.subr.mxu0 0.0
      %3702 = vmatpush1.msra.mxu0 0.0
      %3703 = vmatprep.subr.mxu0 0.0
      %3704 = vmatpush1.msra.mxu0 0.0
      %3705 = vmatprep.subr.mxu0 0.0
      %3706 = vmatpush1.msra.mxu0 0.0
      %3707 = vmatprep.subr.mxu0 0.0
      %3708 = vmatpush1.msra.mxu0 0.0
      %3709 = vmatprep.subr.mxu0 0.0
      %3710 = vmatpush1.msra.mxu0 0.0
      %3711 = vmatprep.subr.mxu0 0.0
      %3712 = vmatpush1.msra.mxu0 0.0
      %3713 = vmatprep.subr.mxu0 0.0
      %3714 = vmatpush1.msra.mxu0 0.0
      %3715 = vmatprep.mubr.f32.mxu0 0.0
      %v3716 = vand.u32 %v174, 4294901760
      %3717 = vmatmul.mubr.f32.gmra.mrb[0].mxu0 %v3716
      %v3718 = vpop.f32.mrb[0].mxu0
      %v3719 = vadd.f32 %v3615, %v3718
      %v3720 = vpop.f32.mrb[0].mxu0
      %v3721 = vadd.f32 %v3617, %v3720
      %3722 = vdwg.mxu0
      %v3731 = vcombine.low %v1154, %v1156
      %v3732 = vcombine.low %v2009, %v2011
      %v3733 = vcombine.low %v2864, %v2866
      %v3734 = vcombine.low %v3719, %v3721
      %3739 = vst [vmem:[%s173] sm:$0xff] %v3731
      %3740 = vst [vmem:[%s173 + $0x8] sm:$0xff] %v3732
      %3741 = vst [vmem:[%s173 + $0x10] sm:$0xff] %v3733
      %3742 = vst [vmem:[%s173 + $0x18] sm:$0xff] %v3734
      %p3743 = scmp.lt.s32.totalorder %s17, 1
      %s3744 = scalar_select %p3743, %s17, 1
      %p3745 = scmp.lt.s32.totalorder %s18, 0
      %s3746 = scalar_select %p3745, %s18, 0
      %s3747 = smul.addr %s3746, 8
      %s3748 = smul.addr %s3744, 8
      %s3749 = sadd.s32 %s3747, %s3748
      %s3750 = smul.addr %s3749, 4
      %s3751 = scalar_lea.vmem %s2, %s3750
      // Predicated region
      $region29: #{pool3d.1} parent=27 // pred_check
        %p3752 = pneg %p94
      $region30: #{pool3d.1} parent=27 // pred_check_branch
        %3754 = sbr.rel (%p3752) target = $region32
      $region31: #{pool3d.1} parent=27 // pred_region
        _
      $region32: #{pool3d.1} parent=27 // pred_fallthru
        _
    $region28: #{pool3d.1} parent=5 // pred_fallthru
      _
    %p3755 = scmp.le.s32.totalorder 2, %s8
    // Predicated region
    $region33: #{pool3d.1} parent=5 // pred_check
      %p3756 = pneg %p3755
    $region34: #{pool3d.1} parent=5 // pred_check_branch
      %3758 = sbr.rel (%p3756) target = $region36
    $region35: #{pool3d.1} parent=5 // pred_region
      %s3759 = ssub.s32 %s8, 2
      // Predicated region
      $region37: #{pool3d.1} parent=35 // pred_check
        %p3760 = pneg %p100
      $region38: #{pool3d.1} parent=35 // pred_check_branch
        %3762 = sbr.rel (%p3760) target = $region40
      $region39: #{pool3d.1} parent=35 // pred_region
        %p3763 = scmp.lt.s32.totalorder %s19, 1
        %s3764 = scalar_select %p3763, %s19, 1
        %p3765 = scmp.lt.s32.totalorder %s20, 0
        %s3766 = scalar_select %p3765, %s20, 0
        %s3767 = smul.addr %s3766, 8
        %s3768 = smul.addr %s3764, 8
        %s3769 = sadd.s32 %s3767, %s3768
        %s3770 = smul.addr %s3769, 4
        %s3771 = scalar_lea.vmem %s2, %s3770
      $region40: #{pool3d.1} parent=35 // pred_fallthru
        _
    $region36: #{pool3d.1} parent=5 // pred_fallthru
      _
  $region6: #{pool3d.1} parent=0 // loop_footer
    %s12 = sadd.s32 1, %s8
  $region7: #{pool3d.1} parent=0 // loop_footer_branch
    %7 = sbr.rel target = $region3
  $region8: #{pool3d.1} parent=0 // loop_exit
    _

</llo_original>
